<compile_context>
chip_gen: v5e
topology: v5e:2x2
jax: 0.10.0
libtpu: 0.0.40
codegen_flags: <defaults>
</compile_context>

<pallas_src>
import jax
import jax.numpy as jnp
import numpy as np
from jax import lax
from jax.experimental import pallas as pl
from jax.experimental.pallas import tpu as pltpu

HX = 32   # hidden (feature) size
C1 = 32   # conv1 output channels
C2 = 64   # conv2 output channels
K = 3     # conv kernel size (3x3, stride 1, pad 1)


def _vdn_kernel(obs_ref, w1_ref, b1_ref, w2_ref, b2_ref,
                wfc_ref, bfc_ref, wq_ref, bq_ref, q_ref):
    x = obs_ref[...]                                  # (TB, H, W, cin) f32
    TB, H, W, cin = x.shape
    H1, W1 = H // 2, W // 2
    H2, W2 = H1 // 2, W1 // 2

    def pad_hw(t):
        # zero 1-pixel halo on H and W, built in registers (no scratch bounce)
        tb, h, w, c = t.shape
        zr = jnp.zeros((tb, 1, w, c), t.dtype)
        t = jnp.concatenate([zr, t, zr], axis=1)       # (tb, h+2, w, c)
        zc = jnp.zeros((tb, h + 2, 1, c), t.dtype)
        return jnp.concatenate([zc, t, zc], axis=2)    # (tb, h+2, w+2, c)

    def conv3x3(t, w_ref, b_ref, cout):
        # im2col: assemble (M, 9*c) patch matrix, single MXU matmul per conv.
        tb, h, w, c = t.shape
        tp = pad_hw(t)
        taps = [tp[:, ky:ky + h, kx:kx + w, :]
                for ky in range(K) for kx in range(K)]
        patches = jnp.concatenate(taps, axis=-1)       # (tb, h, w, 9c), (ky,kx,c) order
        patches = patches.reshape(tb * h * w, K * K * c)
        acc = jnp.dot(patches.astype(jnp.bfloat16), w_ref[...],
                      preferred_element_type=jnp.float32)
        # NOTE: no activation after the convs (matches the nn.Sequential spec).
        return (acc + b_ref[...]).reshape(tb, h, w, cout)

    def maxpool2(t):
        tb, h, w, c = t.shape
        t = jnp.max(t.reshape(tb, h, w // 2, 2, c), axis=3)      # pool along W
        return jnp.max(t.reshape(tb, h // 2, 2, w // 2, c), axis=2)  # pool along H

    # ---- Conv2d(cin, 32, k=3, s=1, p=1) -> MaxPool2d(2,2) ----
    y1 = conv3x3(x, w1_ref, b1_ref, C1)               # (TB, H, W, 32)
    p1 = maxpool2(y1)                                 # (TB, H1, W1, 32)

    # ---- Conv2d(32, 64, k=3, s=1, p=1) -> MaxPool2d(2,2) ----
    y2 = conv3x3(p1, w2_ref, b2_ref, C2)              # (TB, H1, W1, 64)
    p2 = maxpool2(y2)                                 # (TB, H2, W2, 64)

    # ---- Flatten + Linear(flattened, 32) + ReLU : one matmul over all positions ----
    # Row order (h, w, c) matches the wrapper's wfc layout.
    feat = jnp.concatenate(
        [p2[:, ph, pw, :] for ph in range(H2) for pw in range(W2)], axis=-1)
    h = jnp.dot(feat.astype(jnp.bfloat16), wfc_ref[...],
                preferred_element_type=jnp.float32) + bfc_ref[...]
    h = jnp.maximum(h, 0.0)

    # ---- q_val: Linear(32, n_act) ----
    q = jnp.dot(h.astype(jnp.bfloat16), wq_ref[...],
                preferred_element_type=jnp.float32) + bq_ref[...]
    q_ref[...] = q                                     # (TB, n_act) block store


def make_params(key, cin, H, W, n_act):
    H2, W2 = (H // 2) // 2, (W // 2) // 2
    ks = jax.random.split(key, 8)
    return {
        "w1": jax.random.normal(ks[0], (K, K, cin, C1), jnp.float32) * 0.1,
        "b1": jax.random.normal(ks[1], (C1,), jnp.float32) * 0.1,
        "w2": jax.random.normal(ks[2], (K, K, C1, C2), jnp.float32) * 0.05,
        "b2": jax.random.normal(ks[3], (C2,), jnp.float32) * 0.05,
        # fc weight indexed by (h, w, c, out): equivalent to PyTorch's CHW-flatten
        # Linear up to a fixed permutation of its (synthetic) input weights.
        "wfc": jax.random.normal(ks[4], (H2, W2, C2, HX), jnp.float32) * 0.05,
        "bfc": jax.random.normal(ks[5], (HX,), jnp.float32) * 0.05,
        "wq": jax.random.normal(ks[6], (HX, n_act), jnp.float32) * 0.1,
        "bq": jax.random.normal(ks[7], (n_act,), jnp.float32) * 0.1,
    }


def vdn_qnet_forward(obs, hidden, params, *, tb_max=128):
    """obs: [B, A, H, W, C] f32; hidden: [B, A, HX] f32 (unused: recurrent=False).
    Returns (q_values [B, A, n_act], next_hidden [B, A, HX])."""
    B, A, H, W, cin = obs.shape
    assert H % 4 == 0 and W % 4 == 0, "two 2x2 pools require H, W divisible by 4"
    n_act = params["wq"].shape[1]
    H1, W1 = H // 2, W // 2
    H2, W2 = H1 // 2, W1 // 2
    N = B * A

    x = obs.reshape(N, H, W, cin).astype(jnp.float32)

    # TB samples per grid step.  Per-sample VMEM working set is ~20 KB at 8x8x4,
    # so TB=128 keeps the kernel well under the 32 MiB scoped VMEM default on
    # v5e/v6e/v7x (v7x total VMEM is 64 MiB) while giving MXU-sized matmuls.
    TB = min(tb_max, N)
    Npad = pl.cdiv(N, TB) * TB
    if Npad != N:
        x = jnp.pad(x, ((0, Npad - N), (0, 0), (0, 0), (0, 0)))

    # Weights as bf16 matmul operands (f32 accumulation inside the kernel);
    # biases stay f32.
    w1 = params["w1"].reshape(K * K * cin, C1).astype(jnp.bfloat16)
    b1 = params["b1"].reshape(1, C1).astype(jnp.float32)
    w2 = params["w2"].reshape(K * K * C1, C2).astype(jnp.bfloat16)
    b2 = params["b2"].reshape(1, C2).astype(jnp.float32)
    wfc = params["wfc"].reshape(H2 * W2 * C2, HX).astype(jnp.bfloat16)
    bfc = params["bfc"].reshape(1, HX).astype(jnp.float32)
    wq = params["wq"].astype(jnp.bfloat16)
    bq = params["bq"].reshape(1, n_act).astype(jnp.float32)

    def full(arr):
        nd = arr.ndim
        return pl.BlockSpec(arr.shape, lambda n, _nd=nd: (0,) * _nd)

    q = pl.pallas_call(
        _vdn_kernel,
        out_shape=jax.ShapeDtypeStruct((Npad, n_act), jnp.float32),
        grid=(Npad // TB,),
        in_specs=[
            pl.BlockSpec((TB, H, W, cin), lambda n: (n, 0, 0, 0)),
            full(w1), full(b1),
            full(w2), full(b2),
            full(wfc), full(bfc),
            full(wq), full(bq),
        ],
        out_specs=pl.BlockSpec((TB, n_act), lambda n: (n, 0)),
        compiler_params=pltpu.CompilerParams(
            dimension_semantics=("parallel",)),   # shards across v7x's 2 TCs
    )(x, w1, b1, w2, b2, wfc, bfc, wq, bq)

    q = q[:N].reshape(B, A, n_act)
    # recurrent=False: PyTorch returns torch.empty (uninitialized) next_hidden; we
    # return zeros deterministically.
    # TODO(synk): GRUCell path (recurrent=True) not implemented.
    next_hidden = jnp.zeros((B, A, HX), jnp.float32)
    return q, next_hidden


def reference_forward(obs, params):
    """Pure-JAX f32 reference of the same forward (for correctness check)."""
    B, A, H, W, cin = obs.shape
    x = obs.reshape(B * A, H, W, cin)
    dn = ("NHWC", "HWIO", "NHWC")
    y = lax.conv_general_dilated(x, params["w1"], (1, 1), "SAME", dimension_numbers=dn)
    y = y + params["b1"]
    y = lax.reduce_window(y, -jnp.inf, lax.max, (1, 2, 2, 1), (1, 2, 2, 1), "VALID")
    y = lax.conv_general_dilated(y, params["w2"], (1, 1), "SAME", dimension_numbers=dn)
    y = y + params["b2"]
    y = lax.reduce_window(y, -jnp.inf, lax.max, (1, 2, 2, 1), (1, 2, 2, 1), "VALID")
    feat = y.reshape(B * A, -1)                      # (h, w, c) flatten, matches wfc layout
    h = jax.nn.relu(feat @ params["wfc"].reshape(-1, HX) + params["bfc"])
    q = h @ params["wq"] + params["bq"]
    return q.reshape(B, A, -1)


if __name__ == "__main__":
    B, A, H, W, cin, n_act = 2, 3, 8, 8, 4, 5
    key = jax.random.PRNGKey(0)
    k_obs, k_par = jax.random.split(key)
    obs = jax.random.uniform(k_obs, (B, A, H, W, cin), jnp.float32)
    hidden = jnp.zeros((B, A, HX), jnp.float32)
    params = make_params(k_par, cin, H, W, n_act)

    q, nh = vdn_qnet_forward(obs, hidden, params)
    q = jax.block_until_ready(q)
    nh = jax.block_until_ready(nh)

    q_ref = reference_forward(obs, params)
    np.testing.assert_allclose(np.asarray(q), np.asarray(q_ref), rtol=5e-2, atol=5e-2)
    assert q.shape == (B, A, n_act) and nh.shape == (B, A, HX)
    print("KERNEL_OK")
</pallas_src>

<mosaic_0001>
module attributes {stable_mosaic.version = 11 : i64} {
  func.func @_vdn_kernel(%arg0: i32, %arg1: memref<6x8x8x4xf32, #tpu.memory_space<vmem>>, %arg2: memref<36x32xbf16, #tpu.memory_space<vmem>>, %arg3: memref<1x32xf32, #tpu.memory_space<vmem>>, %arg4: memref<288x64xbf16, #tpu.memory_space<vmem>>, %arg5: memref<1x64xf32, #tpu.memory_space<vmem>>, %arg6: memref<256x32xbf16, #tpu.memory_space<vmem>>, %arg7: memref<1x32xf32, #tpu.memory_space<vmem>>, %arg8: memref<32x5xbf16, #tpu.memory_space<vmem>>, %arg9: memref<1x5xf32, #tpu.memory_space<vmem>>, %arg10: memref<6x5xf32, #tpu.memory_space<vmem>>) attributes {dimension_semantics = [#tpu.dimension_semantics<parallel>], iteration_bounds = array<i64: 1>, scalar_prefetch = 0 : i64, scratch_operands = 0 : i64, tpu.core_type = #tpu.core_type<tc>, window_params = [{transform_indices = @transform_0, window_bounds = array<i64: 6, 8, 8, 4>}, {pipeline_mode = #tpu.pipeline_mode<synchronous>, transform_indices = @transform_1, window_bounds = array<i64: 36, 32>}, {pipeline_mode = #tpu.pipeline_mode<synchronous>, transform_indices = @transform_2, window_bounds = array<i64: 1, 32>}, {pipeline_mode = #tpu.pipeline_mode<synchronous>, transform_indices = @transform_3, window_bounds = array<i64: 288, 64>}, {pipeline_mode = #tpu.pipeline_mode<synchronous>, transform_indices = @transform_4, window_bounds = array<i64: 1, 64>}, {pipeline_mode = #tpu.pipeline_mode<synchronous>, transform_indices = @transform_5, window_bounds = array<i64: 256, 32>}, {pipeline_mode = #tpu.pipeline_mode<synchronous>, transform_indices = @transform_6, window_bounds = array<i64: 1, 32>}, {pipeline_mode = #tpu.pipeline_mode<synchronous>, transform_indices = @transform_7, window_bounds = array<i64: 32, 5>}, {pipeline_mode = #tpu.pipeline_mode<synchronous>, transform_indices = @transform_8, window_bounds = array<i64: 1, 5>}, {transform_indices = @transform_9, window_bounds = array<i64: 6, 5>}]} {
    %c0 = arith.constant 0 : index
    %c0_0 = arith.constant 0 : index
    %c0_1 = arith.constant 0 : index
    %c0_2 = arith.constant 0 : index
    %0 = vector.load %arg1[%c0, %c0_0, %c0_1, %c0_2] : memref<6x8x8x4xf32, #tpu.memory_space<vmem>>, vector<6x8x8x4xf32>
    %cst = arith.constant 0.000000e+00 : f32
    %1 = vector.broadcast %cst : f32 to vector<6x1x8x4xf32>
    %2 = tpu.concatenate %1, %0, %1 in 1 : vector<6x1x8x4xf32>, vector<6x8x8x4xf32>, vector<6x1x8x4xf32> -> vector<6x10x8x4xf32>
    %cst_3 = arith.constant 0.000000e+00 : f32
    %3 = vector.broadcast %cst_3 : f32 to vector<6x10x1x4xf32>
    %4 = tpu.concatenate %3, %2, %3 in 2 : vector<6x10x1x4xf32>, vector<6x10x8x4xf32>, vector<6x10x1x4xf32> -> vector<6x10x10x4xf32>
    %5 = vector.extract_strided_slice %4 {offsets = [0, 0, 0, 0], sizes = [6, 8, 8, 4], strides = [1, 1, 1, 1]} : vector<6x10x10x4xf32> to vector<6x8x8x4xf32>
    %6 = vector.extract_strided_slice %4 {offsets = [0, 0, 1, 0], sizes = [6, 8, 8, 4], strides = [1, 1, 1, 1]} : vector<6x10x10x4xf32> to vector<6x8x8x4xf32>
    %7 = vector.extract_strided_slice %4 {offsets = [0, 0, 2, 0], sizes = [6, 8, 8, 4], strides = [1, 1, 1, 1]} : vector<6x10x10x4xf32> to vector<6x8x8x4xf32>
    %8 = vector.extract_strided_slice %4 {offsets = [0, 1, 0, 0], sizes = [6, 8, 8, 4], strides = [1, 1, 1, 1]} : vector<6x10x10x4xf32> to vector<6x8x8x4xf32>
    %9 = vector.extract_strided_slice %4 {offsets = [0, 1, 1, 0], sizes = [6, 8, 8, 4], strides = [1, 1, 1, 1]} : vector<6x10x10x4xf32> to vector<6x8x8x4xf32>
    %10 = vector.extract_strided_slice %4 {offsets = [0, 1, 2, 0], sizes = [6, 8, 8, 4], strides = [1, 1, 1, 1]} : vector<6x10x10x4xf32> to vector<6x8x8x4xf32>
    %11 = vector.extract_strided_slice %4 {offsets = [0, 2, 0, 0], sizes = [6, 8, 8, 4], strides = [1, 1, 1, 1]} : vector<6x10x10x4xf32> to vector<6x8x8x4xf32>
    %12 = vector.extract_strided_slice %4 {offsets = [0, 2, 1, 0], sizes = [6, 8, 8, 4], strides = [1, 1, 1, 1]} : vector<6x10x10x4xf32> to vector<6x8x8x4xf32>
    %13 = vector.extract_strided_slice %4 {offsets = [0, 2, 2, 0], sizes = [6, 8, 8, 4], strides = [1, 1, 1, 1]} : vector<6x10x10x4xf32> to vector<6x8x8x4xf32>
    %14 = tpu.concatenate %5, %6, %7, %8, %9, %10, %11, %12, %13 in 3 : vector<6x8x8x4xf32>, vector<6x8x8x4xf32>, vector<6x8x8x4xf32>, vector<6x8x8x4xf32>, vector<6x8x8x4xf32>, vector<6x8x8x4xf32>, vector<6x8x8x4xf32>, vector<6x8x8x4xf32>, vector<6x8x8x4xf32> -> vector<6x8x8x36xf32>
    %15 = vector.shape_cast %14 : vector<6x8x8x36xf32> to vector<384x36xf32>
    %16 = arith.truncf %15 : vector<384x36xf32> to vector<384x36xbf16>
    %c0_4 = arith.constant 0 : index
    %c0_5 = arith.constant 0 : index
    %17 = vector.load %arg2[%c0_4, %c0_5] : memref<36x32xbf16, #tpu.memory_space<vmem>>, vector<36x32xbf16>
    %cst_6 = arith.constant dense<0.000000e+00> : vector<384x32xf32>
    %18 = tpu.matmul %16, %17, %cst_6 {dimension_numbers = #tpu.dot_dimension_numbers<[1], [0], [0], [1], [0, 0, 1, 1], [], []>} : vector<384x36xbf16>, vector<36x32xbf16>, vector<384x32xf32> -> vector<384x32xf32>
    %c0_7 = arith.constant 0 : index
    %c0_8 = arith.constant 0 : index
    %19 = vector.load %arg3[%c0_7, %c0_8] : memref<1x32xf32, #tpu.memory_space<vmem>>, vector<1x32xf32>
    %20 = vector.broadcast %19 : vector<1x32xf32> to vector<384x32xf32>
    %21 = arith.addf %18, %20 : vector<384x32xf32>
    %22 = vector.shape_cast %21 : vector<384x32xf32> to vector<6x8x8x32xf32>
    %23 = vector.shape_cast %22 : vector<6x8x8x32xf32> to vector<6x8x4x2x32xf32>
    %cst_9 = arith.constant dense<0xFF800000> : vector<6x8x4x32xf32>
    %24 = vector.multi_reduction <maximumf>, %23, %cst_9 [3] : vector<6x8x4x2x32xf32> to vector<6x8x4x32xf32>
    %25 = vector.shape_cast %24 : vector<6x8x4x32xf32> to vector<6x4x2x4x32xf32>
    %cst_10 = arith.constant dense<0xFF800000> : vector<6x4x4x32xf32>
    %26 = vector.multi_reduction <maximumf>, %25, %cst_10 [2] : vector<6x4x2x4x32xf32> to vector<6x4x4x32xf32>
    %cst_11 = arith.constant 0.000000e+00 : f32
    %27 = vector.broadcast %cst_11 : f32 to vector<6x1x4x32xf32>
    %28 = tpu.concatenate %27, %26, %27 in 1 : vector<6x1x4x32xf32>, vector<6x4x4x32xf32>, vector<6x1x4x32xf32> -> vector<6x6x4x32xf32>
    %cst_12 = arith.constant 0.000000e+00 : f32
    %29 = vector.broadcast %cst_12 : f32 to vector<6x6x1x32xf32>
    %30 = tpu.concatenate %29, %28, %29 in 2 : vector<6x6x1x32xf32>, vector<6x6x4x32xf32>, vector<6x6x1x32xf32> -> vector<6x6x6x32xf32>
    %31 = vector.extract_strided_slice %30 {offsets = [0, 0, 0, 0], sizes = [6, 4, 4, 32], strides = [1, 1, 1, 1]} : vector<6x6x6x32xf32> to vector<6x4x4x32xf32>
    %32 = vector.extract_strided_slice %30 {offsets = [0, 0, 1, 0], sizes = [6, 4, 4, 32], strides = [1, 1, 1, 1]} : vector<6x6x6x32xf32> to vector<6x4x4x32xf32>
    %33 = vector.extract_strided_slice %30 {offsets = [0, 0, 2, 0], sizes = [6, 4, 4, 32], strides = [1, 1, 1, 1]} : vector<6x6x6x32xf32> to vector<6x4x4x32xf32>
    %34 = vector.extract_strided_slice %30 {offsets = [0, 1, 0, 0], sizes = [6, 4, 4, 32], strides = [1, 1, 1, 1]} : vector<6x6x6x32xf32> to vector<6x4x4x32xf32>
    %35 = vector.extract_strided_slice %30 {offsets = [0, 1, 1, 0], sizes = [6, 4, 4, 32], strides = [1, 1, 1, 1]} : vector<6x6x6x32xf32> to vector<6x4x4x32xf32>
    %36 = vector.extract_strided_slice %30 {offsets = [0, 1, 2, 0], sizes = [6, 4, 4, 32], strides = [1, 1, 1, 1]} : vector<6x6x6x32xf32> to vector<6x4x4x32xf32>
    %37 = vector.extract_strided_slice %30 {offsets = [0, 2, 0, 0], sizes = [6, 4, 4, 32], strides = [1, 1, 1, 1]} : vector<6x6x6x32xf32> to vector<6x4x4x32xf32>
    %38 = vector.extract_strided_slice %30 {offsets = [0, 2, 1, 0], sizes = [6, 4, 4, 32], strides = [1, 1, 1, 1]} : vector<6x6x6x32xf32> to vector<6x4x4x32xf32>
    %39 = vector.extract_strided_slice %30 {offsets = [0, 2, 2, 0], sizes = [6, 4, 4, 32], strides = [1, 1, 1, 1]} : vector<6x6x6x32xf32> to vector<6x4x4x32xf32>
    %40 = tpu.concatenate %31, %32, %33, %34, %35, %36, %37, %38, %39 in 3 : vector<6x4x4x32xf32>, vector<6x4x4x32xf32>, vector<6x4x4x32xf32>, vector<6x4x4x32xf32>, vector<6x4x4x32xf32>, vector<6x4x4x32xf32>, vector<6x4x4x32xf32>, vector<6x4x4x32xf32>, vector<6x4x4x32xf32> -> vector<6x4x4x288xf32>
    %41 = vector.shape_cast %40 : vector<6x4x4x288xf32> to vector<96x288xf32>
    %42 = arith.truncf %41 : vector<96x288xf32> to vector<96x288xbf16>
    %c0_13 = arith.constant 0 : index
    %c0_14 = arith.constant 0 : index
    %43 = vector.load %arg4[%c0_13, %c0_14] : memref<288x64xbf16, #tpu.memory_space<vmem>>, vector<288x64xbf16>
    %cst_15 = arith.constant dense<0.000000e+00> : vector<96x64xf32>
    %44 = tpu.matmul %42, %43, %cst_15 {dimension_numbers = #tpu.dot_dimension_numbers<[1], [0], [0], [1], [0, 0, 1, 1], [], []>} : vector<96x288xbf16>, vector<288x64xbf16>, vector<96x64xf32> -> vector<96x64xf32>
    %c0_16 = arith.constant 0 : index
    %c0_17 = arith.constant 0 : index
    %45 = vector.load %arg5[%c0_16, %c0_17] : memref<1x64xf32, #tpu.memory_space<vmem>>, vector<1x64xf32>
    %46 = vector.broadcast %45 : vector<1x64xf32> to vector<96x64xf32>
    %47 = arith.addf %44, %46 : vector<96x64xf32>
    %48 = vector.shape_cast %47 : vector<96x64xf32> to vector<6x4x4x64xf32>
    %49 = vector.shape_cast %48 : vector<6x4x4x64xf32> to vector<6x4x2x2x64xf32>
    %cst_18 = arith.constant dense<0xFF800000> : vector<6x4x2x64xf32>
    %50 = vector.multi_reduction <maximumf>, %49, %cst_18 [3] : vector<6x4x2x2x64xf32> to vector<6x4x2x64xf32>
    %51 = vector.shape_cast %50 : vector<6x4x2x64xf32> to vector<6x2x2x2x64xf32>
    %cst_19 = arith.constant dense<0xFF800000> : vector<6x2x2x64xf32>
    %52 = vector.multi_reduction <maximumf>, %51, %cst_19 [2] : vector<6x2x2x2x64xf32> to vector<6x2x2x64xf32>
    %53 = vector.extract_strided_slice %52 {offsets = [0, 0, 0, 0], sizes = [6, 1, 1, 64], strides = [1, 1, 1, 1]} : vector<6x2x2x64xf32> to vector<6x1x1x64xf32>
    %54 = vector.shape_cast %53 : vector<6x1x1x64xf32> to vector<6x64xf32>
    %55 = vector.extract_strided_slice %52 {offsets = [0, 0, 1, 0], sizes = [6, 1, 1, 64], strides = [1, 1, 1, 1]} : vector<6x2x2x64xf32> to vector<6x1x1x64xf32>
    %56 = vector.shape_cast %55 : vector<6x1x1x64xf32> to vector<6x64xf32>
    %57 = vector.extract_strided_slice %52 {offsets = [0, 1, 0, 0], sizes = [6, 1, 1, 64], strides = [1, 1, 1, 1]} : vector<6x2x2x64xf32> to vector<6x1x1x64xf32>
    %58 = vector.shape_cast %57 : vector<6x1x1x64xf32> to vector<6x64xf32>
    %59 = vector.extract_strided_slice %52 {offsets = [0, 1, 1, 0], sizes = [6, 1, 1, 64], strides = [1, 1, 1, 1]} : vector<6x2x2x64xf32> to vector<6x1x1x64xf32>
    %60 = vector.shape_cast %59 : vector<6x1x1x64xf32> to vector<6x64xf32>
    %61 = tpu.concatenate %54, %56, %58, %60 in 1 : vector<6x64xf32>, vector<6x64xf32>, vector<6x64xf32>, vector<6x64xf32> -> vector<6x256xf32>
    %62 = arith.truncf %61 : vector<6x256xf32> to vector<6x256xbf16>
    %c0_20 = arith.constant 0 : index
    %c0_21 = arith.constant 0 : index
    %63 = vector.load %arg6[%c0_20, %c0_21] : memref<256x32xbf16, #tpu.memory_space<vmem>>, vector<256x32xbf16>
    %cst_22 = arith.constant dense<0.000000e+00> : vector<6x32xf32>
    %64 = tpu.matmul %62, %63, %cst_22 {dimension_numbers = #tpu.dot_dimension_numbers<[1], [0], [0], [1], [0, 0, 1, 1], [], []>} : vector<6x256xbf16>, vector<256x32xbf16>, vector<6x32xf32> -> vector<6x32xf32>
    %c0_23 = arith.constant 0 : index
    %c0_24 = arith.constant 0 : index
    %65 = vector.load %arg7[%c0_23, %c0_24] : memref<1x32xf32, #tpu.memory_space<vmem>>, vector<1x32xf32>
    %66 = vector.broadcast %65 : vector<1x32xf32> to vector<6x32xf32>
    %67 = arith.addf %64, %66 : vector<6x32xf32>
    %cst_25 = arith.constant 0.000000e+00 : f32
    %68 = vector.broadcast %cst_25 : f32 to vector<6x32xf32>
    %69 = arith.maximumf %67, %68 : vector<6x32xf32>
    %70 = arith.truncf %69 : vector<6x32xf32> to vector<6x32xbf16>
    %c0_26 = arith.constant 0 : index
    %c0_27 = arith.constant 0 : index
    %71 = vector.load %arg8[%c0_26, %c0_27] : memref<32x5xbf16, #tpu.memory_space<vmem>>, vector<32x5xbf16>
    %cst_28 = arith.constant dense<0.000000e+00> : vector<6x5xf32>
    %72 = tpu.matmul %70, %71, %cst_28 {dimension_numbers = #tpu.dot_dimension_numbers<[1], [0], [0], [1], [0, 0, 1, 1], [], []>} : vector<6x32xbf16>, vector<32x5xbf16>, vector<6x5xf32> -> vector<6x5xf32>
    %c0_29 = arith.constant 0 : index
    %c0_30 = arith.constant 0 : index
    %73 = vector.load %arg9[%c0_29, %c0_30] : memref<1x5xf32, #tpu.memory_space<vmem>>, vector<1x5xf32>
    %74 = vector.broadcast %73 : vector<1x5xf32> to vector<6x5xf32>
    %75 = arith.addf %72, %74 : vector<6x5xf32>
    %c0_31 = arith.constant 0 : index
    %c0_32 = arith.constant 0 : index
    %76 = vector.load %arg10[%c0_31, %c0_32] : memref<6x5xf32, #tpu.memory_space<vmem>>, vector<6x5xf32>
    tpu.vector_store %arg10[%c0_31, %c0_32], %75 {strides = array<i32>} : memref<6x5xf32, #tpu.memory_space<vmem>>, vector<6x5xf32>,
    return
  }
  func.func @transform_0(%arg0: i32) -> (i32, i32, i32, i32) {
    %c0_i32 = arith.constant 0 : i32
    %c0_i32_0 = arith.constant 0 : i32
    %c0_i32_1 = arith.constant 0 : i32
    %c0_i32_2 = arith.constant 0 : i32
    return %arg0, %c0_i32, %c0_i32_0, %c0_i32_1 : i32, i32, i32, i32
  }
  func.func @transform_1(%arg0: i32) -> (i32, i32) {
    %c0_i32 = arith.constant 0 : i32
    %c0_i32_0 = arith.constant 0 : i32
    %c0_i32_1 = arith.constant 0 : i32
    return %c0_i32, %c0_i32_0 : i32, i32
  }
  func.func @transform_2(%arg0: i32) -> (i32, i32) {
    %c0_i32 = arith.constant 0 : i32
    %c0_i32_0 = arith.constant 0 : i32
    %c0_i32_1 = arith.constant 0 : i32
    return %c0_i32, %c0_i32_0 : i32, i32
  }
  func.func @transform_3(%arg0: i32) -> (i32, i32) {
    %c0_i32 = arith.constant 0 : i32
    %c0_i32_0 = arith.constant 0 : i32
    %c0_i32_1 = arith.constant 0 : i32
    return %c0_i32, %c0_i32_0 : i32, i32
  }
  func.func @transform_4(%arg0: i32) -> (i32, i32) {
    %c0_i32 = arith.constant 0 : i32
    %c0_i32_0 = arith.constant 0 : i32
    %c0_i32_1 = arith.constant 0 : i32
    return %c0_i32, %c0_i32_0 : i32, i32
  }
  func.func @transform_5(%arg0: i32) -> (i32, i32) {
    %c0_i32 = arith.constant 0 : i32
    %c0_i32_0 = arith.constant 0 : i32
    %c0_i32_1 = arith.constant 0 : i32
    return %c0_i32, %c0_i32_0 : i32, i32
  }
  func.func @transform_6(%arg0: i32) -> (i32, i32) {
    %c0_i32 = arith.constant 0 : i32
    %c0_i32_0 = arith.constant 0 : i32
    %c0_i32_1 = arith.constant 0 : i32
    return %c0_i32, %c0_i32_0 : i32, i32
  }
  func.func @transform_7(%arg0: i32) -> (i32, i32) {
    %c0_i32 = arith.constant 0 : i32
    %c0_i32_0 = arith.constant 0 : i32
    %c0_i32_1 = arith.constant 0 : i32
    return %c0_i32, %c0_i32_0 : i32, i32
  }
  func.func @transform_8(%arg0: i32) -> (i32, i32) {
    %c0_i32 = arith.constant 0 : i32
    %c0_i32_0 = arith.constant 0 : i32
    %c0_i32_1 = arith.constant 0 : i32
    return %c0_i32, %c0_i32_0 : i32, i32
  }
  func.func @transform_9(%arg0: i32) -> (i32, i32) {
    %c0_i32 = arith.constant 0 : i32
    %c0_i32_0 = arith.constant 0 : i32
    return %arg0, %c0_i32 : i32, i32
  }
}

</mosaic_0001>

<llo_original>
// kernel: tpu_custom_call.1
$region0: #{tpu_custom_call.1}
  #allocation0 [shape = 'u32[]', space=smem, size = 0x4, offset = 0x4, fixed_abs, tag = 'smem constant byte address 0x4 - core index']
  #allocation1 [shape = 'u32[72,128]{1,0:T(1,128)}', space=vmem, size = 0x9000, scoped, tag = 'internal scratch']
  %s0 = inlined_call_operand.vmem [shape: f32[6,8,8,4], index: 0, kind: input, shape index: {}]
  %s1 = inlined_call_operand.vmem [shape: bf16[36,32], index: 1, kind: input, shape index: {}]
  %s2 = inlined_call_operand.vmem [shape: f32[1,32], index: 2, kind: input, shape index: {}]
  %s3 = inlined_call_operand.vmem [shape: bf16[288,64], index: 3, kind: input, shape index: {}]
  %s4 = inlined_call_operand.vmem [shape: f32[1,64], index: 4, kind: input, shape index: {}]
  %s5 = inlined_call_operand.vmem [shape: bf16[256,32], index: 5, kind: input, shape index: {}]
  %s6 = inlined_call_operand.vmem [shape: f32[1,32], index: 6, kind: input, shape index: {}]
  %s7 = inlined_call_operand.vmem [shape: bf16[32,5], index: 7, kind: input, shape index: {}]
  %s8 = inlined_call_operand.vmem [shape: f32[1,5], index: 8, kind: input, shape index: {}]
  %s9 = inlined_call_operand.hbm [shape: f32[6,5], index: 9, kind: output, shape index: {}]
  %s10 = sld [smem:[#allocation0]]
  $region46: #{tpu_custom_call.1} parent=0
    _
  %s12 = ssub.s32 1, %s10
  %s13 = scalar_select 0, %s12, %s10
  $region1: #{tpu_custom_call.1} parent=0
    #allocation2 [shape = 'u8[4096]{0}', space=vmem, size = 0x1000, scoped, tag = 'output window, operand 0, single buffered']
    #allocation3 [shape = 's32[1]{0}', space=sflag, size = 0x4, scoped, tag = 'scoped memory for tpu_custom_call.1']
    %14 = vsyncpa [#allocation3], 0
    // Predicated region
    $region2: #{tpu_custom_call.1} parent=1 // pred_check
      _
    $region3: #{tpu_custom_call.1} parent=1 // pred_check_branch
      %16 = sbr.rel (0) target = $region5
    $region4: #{tpu_custom_call.1} parent=1 // pred_region
      _
    $region5: #{tpu_custom_call.1} parent=1 // pred_fallthru
      _
    // Predicated region
    $region6: #{tpu_custom_call.1} parent=1 // pred_check
      _
    $region7: #{tpu_custom_call.1} parent=1 // pred_check_branch
      %18 = sbr.rel (0) target = $region9
    $region8: #{tpu_custom_call.1} parent=1 // pred_region
      _
    $region9: #{tpu_custom_call.1} parent=1 // pred_fallthru
      _
    // Predicated region
    $region10: #{tpu_custom_call.1} parent=1 // pred_check
      _
    $region11: #{tpu_custom_call.1} parent=1 // pred_check_branch
      %20 = sbr.rel (0) target = $region13
    $region12: #{tpu_custom_call.1} parent=1 // pred_region
      _
    $region13: #{tpu_custom_call.1} parent=1 // pred_fallthru
      _
    // Predicated region
    $region14: #{tpu_custom_call.1} parent=1 // pred_check
      _
    $region15: #{tpu_custom_call.1} parent=1 // pred_check_branch
      %22 = sbr.rel (0) target = $region17
    $region16: #{tpu_custom_call.1} parent=1 // pred_region
      _
    $region17: #{tpu_custom_call.1} parent=1 // pred_fallthru
      _
    // Predicated region
    $region18: #{tpu_custom_call.1} parent=1 // pred_check
      _
    $region19: #{tpu_custom_call.1} parent=1 // pred_check_branch
      %24 = sbr.rel (0) target = $region21
    $region20: #{tpu_custom_call.1} parent=1 // pred_region
      _
    $region21: #{tpu_custom_call.1} parent=1 // pred_fallthru
      _
    // Predicated region
    $region22: #{tpu_custom_call.1} parent=1 // pred_check
      _
    $region23: #{tpu_custom_call.1} parent=1 // pred_check_branch
      %26 = sbr.rel (0) target = $region25
    $region24: #{tpu_custom_call.1} parent=1 // pred_region
      _
    $region25: #{tpu_custom_call.1} parent=1 // pred_fallthru
      _
    // Predicated region
    $region26: #{tpu_custom_call.1} parent=1 // pred_check
      _
    $region27: #{tpu_custom_call.1} parent=1 // pred_check_branch
      %28 = sbr.rel (0) target = $region29
    $region28: #{tpu_custom_call.1} parent=1 // pred_region
      _
    $region29: #{tpu_custom_call.1} parent=1 // pred_fallthru
      _
    // Predicated region
    $region30: #{tpu_custom_call.1} parent=1 // pred_check
      _
    $region31: #{tpu_custom_call.1} parent=1 // pred_check_branch
      %30 = sbr.rel (0) target = $region33
    $region32: #{tpu_custom_call.1} parent=1 // pred_region
      _
    $region33: #{tpu_custom_call.1} parent=1 // pred_fallthru
      _
    // Predicated region
    $region34: #{tpu_custom_call.1} parent=1 // pred_check
      _
    $region35: #{tpu_custom_call.1} parent=1 // pred_check_branch
      %32 = sbr.rel (0) target = $region37
    $region36: #{tpu_custom_call.1} parent=1 // pred_region
      _
    $region37: #{tpu_custom_call.1} parent=1 // pred_fallthru
      _
    %v34 = vld [vmem:[%s0] sm:$0xff]
    %v35 = vld [vmem:[%s0 + $0x8] sm:$0xff]
    %v36 = vld [vmem:[%s0 + $0x10] sm:$0xff]
    %v37 = vld [vmem:[%s0 + $0x18] sm:$0xff]
    %v38 = vld [vmem:[%s0 + $0x20] sm:$0xff]
    %v39 = vld [vmem:[%s0 + $0x28] sm:$0xff]
    %v40 = vld [vmem:[%s0 + $0x30] sm:$0xff]
    %v41 = vld [vmem:[%s0 + $0x38] sm:$0xff]
    %v42 = vld [vmem:[%s0 + $0x40] sm:$0xff]
    %v43 = vld [vmem:[%s0 + $0x48] sm:$0xff]
    %v44 = vld [vmem:[%s0 + $0x50] sm:$0xff]
    %v45 = vld [vmem:[%s0 + $0x58] sm:$0xff]
    %v46 = vld [vmem:[%s0 + $0x60] sm:$0xff]
    %v47 = vld [vmem:[%s0 + $0x68] sm:$0xff]
    %v48 = vld [vmem:[%s0 + $0x70] sm:$0xff]
    %v49 = vld [vmem:[%s0 + $0x78] sm:$0xff]
    %v50 = vld [vmem:[%s0 + $0x80] sm:$0xff]
    %v51 = vld [vmem:[%s0 + $0x88] sm:$0xff]
    %v52 = vld [vmem:[%s0 + $0x90] sm:$0xff]
    %v53 = vld [vmem:[%s0 + $0x98] sm:$0xff]
    %v54 = vld [vmem:[%s0 + $0xa0] sm:$0xff]
    %v55 = vld [vmem:[%s0 + $0xa8] sm:$0xff]
    %v56 = vld [vmem:[%s0 + $0xb0] sm:$0xff]
    %v57 = vld [vmem:[%s0 + $0xb8] sm:$0xff]
    %v58 = vld [vmem:[%s0 + $0xc0] sm:$0xff]
    %v59 = vld [vmem:[%s0 + $0xc8] sm:$0xff]
    %v60 = vld [vmem:[%s0 + $0xd0] sm:$0xff]
    %v61 = vld [vmem:[%s0 + $0xd8] sm:$0xff]
    %v62 = vld [vmem:[%s0 + $0xe0] sm:$0xff]
    %v63 = vld [vmem:[%s0 + $0xe8] sm:$0xff]
    %v64 = vld [vmem:[%s0 + $0xf0] sm:$0xff]
    %v65 = vld [vmem:[%s0 + $0xf8] sm:$0xff]
    %v66 = vld [vmem:[%s0 + $0x100] sm:$0xff]
    %v67 = vld [vmem:[%s0 + $0x108] sm:$0xff]
    %v68 = vld [vmem:[%s0 + $0x110] sm:$0xff]
    %v69 = vld [vmem:[%s0 + $0x118] sm:$0xff]
    %v70 = vld [vmem:[%s0 + $0x120] sm:$0xff]
    %v71 = vld [vmem:[%s0 + $0x128] sm:$0xff]
    %v72 = vld [vmem:[%s0 + $0x130] sm:$0xff]
    %v73 = vld [vmem:[%s0 + $0x138] sm:$0xff]
    %v74 = vld [vmem:[%s0 + $0x140] sm:$0xff]
    %v75 = vld [vmem:[%s0 + $0x148] sm:$0xff]
    %v76 = vld [vmem:[%s0 + $0x150] sm:$0xff]
    %v77 = vld [vmem:[%s0 + $0x158] sm:$0xff]
    %v78 = vld [vmem:[%s0 + $0x160] sm:$0xff]
    %v79 = vld [vmem:[%s0 + $0x168] sm:$0xff]
    %v80 = vld [vmem:[%s0 + $0x170] sm:$0xff]
    %v81 = vld [vmem:[%s0 + $0x178] sm:$0xff]
    %v131 = vrot.slane 0.0, 7
    %v132 = vrot.slane %v34, 7
    %v133 = vrot.slane %v35, 7
    %v134 = vrot.slane %v36, 7
    %v135 = vrot.slane %v37, 7
    %v136 = vrot.slane %v38, 7
    %v137 = vrot.slane %v39, 7
    %v138 = vrot.slane %v40, 7
    %v139 = vrot.slane %v41, 7
    %v140 = vrot.slane %v42, 7
    %v141 = vrot.slane %v43, 7
    %v142 = vrot.slane %v44, 7
    %v143 = vrot.slane %v45, 7
    %v144 = vrot.slane %v46, 7
    %v145 = vrot.slane %v47, 7
    %v146 = vrot.slane %v48, 7
    %v147 = vrot.slane %v49, 7
    %v148 = vrot.slane %v50, 7
    %v149 = vrot.slane %v51, 7
    %v150 = vrot.slane %v52, 7
    %v151 = vrot.slane %v53, 7
    %v152 = vrot.slane %v54, 7
    %v153 = vrot.slane %v55, 7
    %v154 = vrot.slane %v56, 7
    %v155 = vrot.slane %v57, 7
    %v156 = vrot.slane %v58, 7
    %v157 = vrot.slane %v59, 7
    %v158 = vrot.slane %v60, 7
    %v159 = vrot.slane %v61, 7
    %v160 = vrot.slane %v62, 7
    %v161 = vrot.slane %v63, 7
    %v162 = vrot.slane %v64, 7
    %v163 = vrot.slane %v65, 7
    %v164 = vrot.slane %v66, 7
    %v165 = vrot.slane %v67, 7
    %v166 = vrot.slane %v68, 7
    %v167 = vrot.slane %v69, 7
    %v168 = vrot.slane %v70, 7
    %v169 = vrot.slane %v71, 7
    %v170 = vrot.slane %v72, 7
    %v171 = vrot.slane %v73, 7
    %v172 = vrot.slane %v74, 7
    %v173 = vrot.slane %v75, 7
    %v174 = vrot.slane %v76, 7
    %v175 = vrot.slane %v77, 7
    %v176 = vrot.slane %v78, 7
    %v177 = vrot.slane %v79, 7
    %v178 = vrot.slane %v80, 7
    %v179 = vrot.slane %v81, 7
    %vm229 = vcmask 1040384
    %v230 = vsel %vm229, 0.0, %v131
    %v231 = vsel %vm229, 0.0, %v132
    %v232 = vsel %vm229, 0.0, %v133
    %v233 = vsel %vm229, 0.0, %v134
    %v234 = vsel %vm229, 0.0, %v135
    %v235 = vsel %vm229, 0.0, %v136
    %v236 = vsel %vm229, 0.0, %v137
    %v237 = vsel %vm229, 0.0, %v138
    %v238 = vsel %vm229, 0.0, %v139
    %v239 = vsel %vm229, 0.0, %v140
    %v240 = vsel %vm229, 0.0, %v141
    %v241 = vsel %vm229, 0.0, %v142
    %v242 = vsel %vm229, 0.0, %v143
    %v243 = vsel %vm229, 0.0, %v144
    %v244 = vsel %vm229, 0.0, %v145
    %v245 = vsel %vm229, 0.0, %v146
    %v246 = vsel %vm229, 0.0, %v147
    %v247 = vsel %vm229, 0.0, %v148
    %v248 = vsel %vm229, 0.0, %v149
    %v249 = vsel %vm229, 0.0, %v150
    %v250 = vsel %vm229, 0.0, %v151
    %v251 = vsel %vm229, 0.0, %v152
    %v252 = vsel %vm229, 0.0, %v153
    %v253 = vsel %vm229, 0.0, %v154
    %v254 = vsel %vm229, 0.0, %v155
    %v255 = vsel %vm229, 0.0, %v156
    %v256 = vsel %vm229, 0.0, %v157
    %v257 = vsel %vm229, 0.0, %v158
    %v258 = vsel %vm229, 0.0, %v159
    %v259 = vsel %vm229, 0.0, %v160
    %v260 = vsel %vm229, 0.0, %v161
    %v261 = vsel %vm229, 0.0, %v162
    %v262 = vsel %vm229, 0.0, %v163
    %v263 = vsel %vm229, 0.0, %v164
    %v264 = vsel %vm229, 0.0, %v165
    %v265 = vsel %vm229, 0.0, %v166
    %v266 = vsel %vm229, 0.0, %v167
    %v267 = vsel %vm229, 0.0, %v168
    %v268 = vsel %vm229, 0.0, %v169
    %v269 = vsel %vm229, 0.0, %v170
    %v270 = vsel %vm229, 0.0, %v171
    %v271 = vsel %vm229, 0.0, %v172
    %v272 = vsel %vm229, 0.0, %v173
    %v273 = vsel %vm229, 0.0, %v174
    %v274 = vsel %vm229, 0.0, %v175
    %v275 = vsel %vm229, 0.0, %v176
    %v276 = vsel %vm229, 0.0, %v177
    %v277 = vsel %vm229, 0.0, %v178
    %v278 = vsel %vm229, 0.0, %v179
    %v279 = vsel %vm229, %v131, 0.0
    %v280 = vsel %vm229, %v132, 0.0
    %v281 = vsel %vm229, %v133, 0.0
    %v282 = vsel %vm229, %v134, 0.0
    %v283 = vsel %vm229, %v135, 0.0
    %v284 = vsel %vm229, %v136, 0.0
    %v285 = vsel %vm229, %v137, 0.0
    %v286 = vsel %vm229, %v138, 0.0
    %v287 = vsel %vm229, %v139, 0.0
    %v288 = vsel %vm229, %v140, 0.0
    %v289 = vsel %vm229, %v141, 0.0
    %v290 = vsel %vm229, %v142, 0.0
    %v291 = vsel %vm229, %v143, 0.0
    %v292 = vsel %vm229, %v144, 0.0
    %v293 = vsel %vm229, %v145, 0.0
    %v294 = vsel %vm229, %v146, 0.0
    %v295 = vsel %vm229, %v147, 0.0
    %v296 = vsel %vm229, %v148, 0.0
    %v297 = vsel %vm229, %v149, 0.0
    %v298 = vsel %vm229, %v150, 0.0
    %v299 = vsel %vm229, %v151, 0.0
    %v300 = vsel %vm229, %v152, 0.0
    %v301 = vsel %vm229, %v153, 0.0
    %v302 = vsel %vm229, %v154, 0.0
    %v303 = vsel %vm229, %v155, 0.0
    %v304 = vsel %vm229, %v156, 0.0
    %v305 = vsel %vm229, %v157, 0.0
    %v306 = vsel %vm229, %v158, 0.0
    %v307 = vsel %vm229, %v159, 0.0
    %v308 = vsel %vm229, %v160, 0.0
    %v309 = vsel %vm229, %v161, 0.0
    %v310 = vsel %vm229, %v162, 0.0
    %v311 = vsel %vm229, %v163, 0.0
    %v312 = vsel %vm229, %v164, 0.0
    %v313 = vsel %vm229, %v165, 0.0
    %v314 = vsel %vm229, %v166, 0.0
    %v315 = vsel %vm229, %v167, 0.0
    %v316 = vsel %vm229, %v168, 0.0
    %v317 = vsel %vm229, %v169, 0.0
    %v318 = vsel %vm229, %v170, 0.0
    %v319 = vsel %vm229, %v171, 0.0
    %v320 = vsel %vm229, %v172, 0.0
    %v321 = vsel %vm229, %v173, 0.0
    %v322 = vsel %vm229, %v174, 0.0
    %v323 = vsel %vm229, %v175, 0.0
    %v324 = vsel %vm229, %v176, 0.0
    %v325 = vsel %vm229, %v177, 0.0
    %v326 = vsel %vm229, %v178, 0.0
    %v327 = vsel %vm229, %v179, 0.0
    %vm414 = vcmask 1046528
    %v415 = vrot.slane %v230, 1
    %v416 = vrot.slane %v279, 1
    %v417 = vsel %vm414, %v415, %v416
    %v418 = vrot.slane %v231, 1
    %v419 = vrot.slane %v280, 1
    %v420 = vsel %vm414, %v418, %v419
    %v421 = vrot.slane %v232, 1
    %v422 = vrot.slane %v281, 1
    %v423 = vsel %vm414, %v421, %v422
    %v424 = vrot.slane %v233, 1
    %v425 = vrot.slane %v282, 1
    %v426 = vsel %vm414, %v424, %v425
    %v427 = vrot.slane %v234, 1
    %v428 = vrot.slane %v283, 1
    %v429 = vsel %vm414, %v427, %v428
    %v430 = vrot.slane %v235, 1
    %v431 = vrot.slane %v284, 1
    %v432 = vsel %vm414, %v430, %v431
    %v433 = vrot.slane %v236, 1
    %v434 = vrot.slane %v285, 1
    %v435 = vsel %vm414, %v433, %v434
    %v436 = vrot.slane %v237, 1
    %v437 = vrot.slane %v286, 1
    %v438 = vsel %vm414, %v436, %v437
    %v439 = vrot.slane %v239, 1
    %v440 = vrot.slane %v288, 1
    %v441 = vsel %vm414, %v439, %v440
    %v442 = vrot.slane %v240, 1
    %v443 = vrot.slane %v289, 1
    %v444 = vsel %vm414, %v442, %v443
    %v445 = vrot.slane %v241, 1
    %v446 = vrot.slane %v290, 1
    %v447 = vsel %vm414, %v445, %v446
    %v448 = vrot.slane %v242, 1
    %v449 = vrot.slane %v291, 1
    %v450 = vsel %vm414, %v448, %v449
    %v451 = vrot.slane %v243, 1
    %v452 = vrot.slane %v292, 1
    %v453 = vsel %vm414, %v451, %v452
    %v454 = vrot.slane %v244, 1
    %v455 = vrot.slane %v293, 1
    %v456 = vsel %vm414, %v454, %v455
    %v457 = vrot.slane %v245, 1
    %v458 = vrot.slane %v294, 1
    %v459 = vsel %vm414, %v457, %v458
    %v460 = vrot.slane %v247, 1
    %v461 = vrot.slane %v296, 1
    %v462 = vsel %vm414, %v460, %v461
    %v463 = vrot.slane %v248, 1
    %v464 = vrot.slane %v297, 1
    %v465 = vsel %vm414, %v463, %v464
    %v466 = vrot.slane %v249, 1
    %v467 = vrot.slane %v298, 1
    %v468 = vsel %vm414, %v466, %v467
    %v469 = vrot.slane %v250, 1
    %v470 = vrot.slane %v299, 1
    %v471 = vsel %vm414, %v469, %v470
    %v472 = vrot.slane %v251, 1
    %v473 = vrot.slane %v300, 1
    %v474 = vsel %vm414, %v472, %v473
    %v475 = vrot.slane %v252, 1
    %v476 = vrot.slane %v301, 1
    %v477 = vsel %vm414, %v475, %v476
    %v478 = vrot.slane %v253, 1
    %v479 = vrot.slane %v302, 1
    %v480 = vsel %vm414, %v478, %v479
    %v481 = vrot.slane %v255, 1
    %v482 = vrot.slane %v304, 1
    %v483 = vsel %vm414, %v481, %v482
    %v484 = vrot.slane %v256, 1
    %v485 = vrot.slane %v305, 1
    %v486 = vsel %vm414, %v484, %v485
    %v487 = vrot.slane %v257, 1
    %v488 = vrot.slane %v306, 1
    %v489 = vsel %vm414, %v487, %v488
    %v490 = vrot.slane %v258, 1
    %v491 = vrot.slane %v307, 1
    %v492 = vsel %vm414, %v490, %v491
    %v493 = vrot.slane %v259, 1
    %v494 = vrot.slane %v308, 1
    %v495 = vsel %vm414, %v493, %v494
    %v496 = vrot.slane %v260, 1
    %v497 = vrot.slane %v309, 1
    %v498 = vsel %vm414, %v496, %v497
    %v499 = vrot.slane %v261, 1
    %v500 = vrot.slane %v310, 1
    %v501 = vsel %vm414, %v499, %v500
    %v502 = vrot.slane %v263, 1
    %v503 = vrot.slane %v312, 1
    %v504 = vsel %vm414, %v502, %v503
    %v505 = vrot.slane %v264, 1
    %v506 = vrot.slane %v313, 1
    %v507 = vsel %vm414, %v505, %v506
    %v508 = vrot.slane %v265, 1
    %v509 = vrot.slane %v314, 1
    %v510 = vsel %vm414, %v508, %v509
    %v511 = vrot.slane %v266, 1
    %v512 = vrot.slane %v315, 1
    %v513 = vsel %vm414, %v511, %v512
    %v514 = vrot.slane %v267, 1
    %v515 = vrot.slane %v316, 1
    %v516 = vsel %vm414, %v514, %v515
    %v517 = vrot.slane %v268, 1
    %v518 = vrot.slane %v317, 1
    %v519 = vsel %vm414, %v517, %v518
    %v520 = vrot.slane %v269, 1
    %v521 = vrot.slane %v318, 1
    %v522 = vsel %vm414, %v520, %v521
    %v523 = vrot.slane %v271, 1
    %v524 = vrot.slane %v320, 1
    %v525 = vsel %vm414, %v523, %v524
    %v526 = vrot.slane %v272, 1
    %v527 = vrot.slane %v321, 1
    %v528 = vsel %vm414, %v526, %v527
    %v529 = vrot.slane %v273, 1
    %v530 = vrot.slane %v322, 1
    %v531 = vsel %vm414, %v529, %v530
    %v532 = vrot.slane %v274, 1
    %v533 = vrot.slane %v323, 1
    %v534 = vsel %vm414, %v532, %v533
    %v535 = vrot.slane %v275, 1
    %v536 = vrot.slane %v324, 1
    %v537 = vsel %vm414, %v535, %v536
    %v538 = vrot.slane %v276, 1
    %v539 = vrot.slane %v325, 1
    %v540 = vsel %vm414, %v538, %v539
    %v541 = vrot.slane %v277, 1
    %v542 = vrot.slane %v326, 1
    %v543 = vsel %vm414, %v541, %v542
    %544 = vrot.lane.b32.xlu0 %v417, 4
    %v545 = vpop.permute.xlu0 %544
    %546 = vrot.lane.b32.xlu0 %v420, 4
    %v547 = vpop.permute.xlu0 %546
    %548 = vrot.lane.b32.xlu0 %v423, 4
    %v549 = vpop.permute.xlu0 %548
    %550 = vrot.lane.b32.xlu0 %v426, 4
    %v551 = vpop.permute.xlu0 %550
    %552 = vrot.lane.b32.xlu0 %v429, 4
    %v553 = vpop.permute.xlu0 %552
    %554 = vrot.lane.b32.xlu0 %v432, 4
    %v555 = vpop.permute.xlu0 %554
    %556 = vrot.lane.b32.xlu0 %v435, 4
    %v557 = vpop.permute.xlu0 %556
    %558 = vrot.lane.b32.xlu0 %v438, 4
    %v559 = vpop.permute.xlu0 %558
    %560 = vrot.lane.b32.xlu0 %v441, 4
    %v561 = vpop.permute.xlu0 %560
    %562 = vrot.lane.b32.xlu0 %v444, 4
    %v563 = vpop.permute.xlu0 %562
    %564 = vrot.lane.b32.xlu0 %v447, 4
    %v565 = vpop.permute.xlu0 %564
    %566 = vrot.lane.b32.xlu0 %v450, 4
    %v567 = vpop.permute.xlu0 %566
    %568 = vrot.lane.b32.xlu0 %v453, 4
    %v569 = vpop.permute.xlu0 %568
    %570 = vrot.lane.b32.xlu0 %v456, 4
    %v571 = vpop.permute.xlu0 %570
    %572 = vrot.lane.b32.xlu0 %v459, 4
    %v573 = vpop.permute.xlu0 %572
    %574 = vrot.lane.b32.xlu0 %v462, 4
    %v575 = vpop.permute.xlu0 %574
    %576 = vrot.lane.b32.xlu0 %v465, 4
    %v577 = vpop.permute.xlu0 %576
    %578 = vrot.lane.b32.xlu0 %v468, 4
    %v579 = vpop.permute.xlu0 %578
    %580 = vrot.lane.b32.xlu0 %v471, 4
    %v581 = vpop.permute.xlu0 %580
    %582 = vrot.lane.b32.xlu0 %v474, 4
    %v583 = vpop.permute.xlu0 %582
    %584 = vrot.lane.b32.xlu0 %v477, 4
    %v585 = vpop.permute.xlu0 %584
    %586 = vrot.lane.b32.xlu0 %v480, 4
    %v587 = vpop.permute.xlu0 %586
    %588 = vrot.lane.b32.xlu0 %v483, 4
    %v589 = vpop.permute.xlu0 %588
    %590 = vrot.lane.b32.xlu0 %v486, 4
    %v591 = vpop.permute.xlu0 %590
    %592 = vrot.lane.b32.xlu0 %v489, 4
    %v593 = vpop.permute.xlu0 %592
    %594 = vrot.lane.b32.xlu0 %v492, 4
    %v595 = vpop.permute.xlu0 %594
    %596 = vrot.lane.b32.xlu0 %v495, 4
    %v597 = vpop.permute.xlu0 %596
    %598 = vrot.lane.b32.xlu0 %v498, 4
    %v599 = vpop.permute.xlu0 %598
    %600 = vrot.lane.b32.xlu0 %v501, 4
    %v601 = vpop.permute.xlu0 %600
    %602 = vrot.lane.b32.xlu0 %v504, 4
    %v603 = vpop.permute.xlu0 %602
    %604 = vrot.lane.b32.xlu0 %v507, 4
    %v605 = vpop.permute.xlu0 %604
    %606 = vrot.lane.b32.xlu0 %v510, 4
    %v607 = vpop.permute.xlu0 %606
    %608 = vrot.lane.b32.xlu0 %v513, 4
    %v609 = vpop.permute.xlu0 %608
    %610 = vrot.lane.b32.xlu0 %v516, 4
    %v611 = vpop.permute.xlu0 %610
    %612 = vrot.lane.b32.xlu0 %v519, 4
    %v613 = vpop.permute.xlu0 %612
    %614 = vrot.lane.b32.xlu0 %v522, 4
    %v615 = vpop.permute.xlu0 %614
    %616 = vrot.lane.b32.xlu0 %v525, 4
    %v617 = vpop.permute.xlu0 %616
    %618 = vrot.lane.b32.xlu0 %v528, 4
    %v619 = vpop.permute.xlu0 %618
    %620 = vrot.lane.b32.xlu0 %v531, 4
    %v621 = vpop.permute.xlu0 %620
    %622 = vrot.lane.b32.xlu0 %v534, 4
    %v623 = vpop.permute.xlu0 %622
    %624 = vrot.lane.b32.xlu0 %v537, 4
    %v625 = vpop.permute.xlu0 %624
    %626 = vrot.lane.b32.xlu0 %v540, 4
    %v627 = vpop.permute.xlu0 %626
    %628 = vrot.lane.b32.xlu0 %v543, 4
    %v629 = vpop.permute.xlu0 %628
    %vm673 = vcmask 1045504
    %v674 = vrot.slane %v230, 2
    %v675 = vrot.slane %v279, 2
    %v676 = vsel %vm673, %v674, %v675
    %v677 = vrot.slane %v231, 2
    %v678 = vrot.slane %v280, 2
    %v679 = vsel %vm673, %v677, %v678
    %v680 = vrot.slane %v232, 2
    %v681 = vrot.slane %v281, 2
    %v682 = vsel %vm673, %v680, %v681
    %v683 = vrot.slane %v233, 2
    %v684 = vrot.slane %v282, 2
    %v685 = vsel %vm673, %v683, %v684
    %v686 = vrot.slane %v234, 2
    %v687 = vrot.slane %v283, 2
    %v688 = vsel %vm673, %v686, %v687
    %v689 = vrot.slane %v235, 2
    %v690 = vrot.slane %v284, 2
    %v691 = vsel %vm673, %v689, %v690
    %v692 = vrot.slane %v236, 2
    %v693 = vrot.slane %v285, 2
    %v694 = vsel %vm673, %v692, %v693
    %v695 = vrot.slane %v237, 2
    %v696 = vrot.slane %v286, 2
    %v697 = vsel %vm673, %v695, %v696
    %v698 = vrot.slane %v239, 2
    %v699 = vrot.slane %v288, 2
    %v700 = vsel %vm673, %v698, %v699
    %v701 = vrot.slane %v240, 2
    %v702 = vrot.slane %v289, 2
    %v703 = vsel %vm673, %v701, %v702
    %v704 = vrot.slane %v241, 2
    %v705 = vrot.slane %v290, 2
    %v706 = vsel %vm673, %v704, %v705
    %v707 = vrot.slane %v242, 2
    %v708 = vrot.slane %v291, 2
    %v709 = vsel %vm673, %v707, %v708
    %v710 = vrot.slane %v243, 2
    %v711 = vrot.slane %v292, 2
    %v712 = vsel %vm673, %v710, %v711
    %v713 = vrot.slane %v244, 2
    %v714 = vrot.slane %v293, 2
    %v715 = vsel %vm673, %v713, %v714
    %v716 = vrot.slane %v245, 2
    %v717 = vrot.slane %v294, 2
    %v718 = vsel %vm673, %v716, %v717
    %v719 = vrot.slane %v247, 2
    %v720 = vrot.slane %v296, 2
    %v721 = vsel %vm673, %v719, %v720
    %v722 = vrot.slane %v248, 2
    %v723 = vrot.slane %v297, 2
    %v724 = vsel %vm673, %v722, %v723
    %v725 = vrot.slane %v249, 2
    %v726 = vrot.slane %v298, 2
    %v727 = vsel %vm673, %v725, %v726
    %v728 = vrot.slane %v250, 2
    %v729 = vrot.slane %v299, 2
    %v730 = vsel %vm673, %v728, %v729
    %v731 = vrot.slane %v251, 2
    %v732 = vrot.slane %v300, 2
    %v733 = vsel %vm673, %v731, %v732
    %v734 = vrot.slane %v252, 2
    %v735 = vrot.slane %v301, 2
    %v736 = vsel %vm673, %v734, %v735
    %v737 = vrot.slane %v253, 2
    %v738 = vrot.slane %v302, 2
    %v739 = vsel %vm673, %v737, %v738
    %v740 = vrot.slane %v255, 2
    %v741 = vrot.slane %v304, 2
    %v742 = vsel %vm673, %v740, %v741
    %v743 = vrot.slane %v256, 2
    %v744 = vrot.slane %v305, 2
    %v745 = vsel %vm673, %v743, %v744
    %v746 = vrot.slane %v257, 2
    %v747 = vrot.slane %v306, 2
    %v748 = vsel %vm673, %v746, %v747
    %v749 = vrot.slane %v258, 2
    %v750 = vrot.slane %v307, 2
    %v751 = vsel %vm673, %v749, %v750
    %v752 = vrot.slane %v259, 2
    %v753 = vrot.slane %v308, 2
    %v754 = vsel %vm673, %v752, %v753
    %v755 = vrot.slane %v260, 2
    %v756 = vrot.slane %v309, 2
    %v757 = vsel %vm673, %v755, %v756
    %v758 = vrot.slane %v261, 2
    %v759 = vrot.slane %v310, 2
    %v760 = vsel %vm673, %v758, %v759
    %v761 = vrot.slane %v263, 2
    %v762 = vrot.slane %v312, 2
    %v763 = vsel %vm673, %v761, %v762
    %v764 = vrot.slane %v264, 2
    %v765 = vrot.slane %v313, 2
    %v766 = vsel %vm673, %v764, %v765
    %v767 = vrot.slane %v265, 2
    %v768 = vrot.slane %v314, 2
    %v769 = vsel %vm673, %v767, %v768
    %v770 = vrot.slane %v266, 2
    %v771 = vrot.slane %v315, 2
    %v772 = vsel %vm673, %v770, %v771
    %v773 = vrot.slane %v267, 2
    %v774 = vrot.slane %v316, 2
    %v775 = vsel %vm673, %v773, %v774
    %v776 = vrot.slane %v268, 2
    %v777 = vrot.slane %v317, 2
    %v778 = vsel %vm673, %v776, %v777
    %v779 = vrot.slane %v269, 2
    %v780 = vrot.slane %v318, 2
    %v781 = vsel %vm673, %v779, %v780
    %v782 = vrot.slane %v271, 2
    %v783 = vrot.slane %v320, 2
    %v784 = vsel %vm673, %v782, %v783
    %v785 = vrot.slane %v272, 2
    %v786 = vrot.slane %v321, 2
    %v787 = vsel %vm673, %v785, %v786
    %v788 = vrot.slane %v273, 2
    %v789 = vrot.slane %v322, 2
    %v790 = vsel %vm673, %v788, %v789
    %v791 = vrot.slane %v274, 2
    %v792 = vrot.slane %v323, 2
    %v793 = vsel %vm673, %v791, %v792
    %v794 = vrot.slane %v275, 2
    %v795 = vrot.slane %v324, 2
    %v796 = vsel %vm673, %v794, %v795
    %v797 = vrot.slane %v276, 2
    %v798 = vrot.slane %v325, 2
    %v799 = vsel %vm673, %v797, %v798
    %v800 = vrot.slane %v277, 2
    %v801 = vrot.slane %v326, 2
    %v802 = vsel %vm673, %v800, %v801
    %803 = vrot.lane.b32.xlu0 %v676, 8
    %v804 = vpop.permute.xlu0 %803
    %805 = vrot.lane.b32.xlu0 %v679, 8
    %v806 = vpop.permute.xlu0 %805
    %807 = vrot.lane.b32.xlu0 %v682, 8
    %v808 = vpop.permute.xlu0 %807
    %809 = vrot.lane.b32.xlu0 %v685, 8
    %v810 = vpop.permute.xlu0 %809
    %811 = vrot.lane.b32.xlu0 %v688, 8
    %v812 = vpop.permute.xlu0 %811
    %813 = vrot.lane.b32.xlu0 %v691, 8
    %v814 = vpop.permute.xlu0 %813
    %815 = vrot.lane.b32.xlu0 %v694, 8
    %v816 = vpop.permute.xlu0 %815
    %817 = vrot.lane.b32.xlu0 %v697, 8
    %v818 = vpop.permute.xlu0 %817
    %819 = vrot.lane.b32.xlu0 %v700, 8
    %v820 = vpop.permute.xlu0 %819
    %821 = vrot.lane.b32.xlu0 %v703, 8
    %v822 = vpop.permute.xlu0 %821
    %823 = vrot.lane.b32.xlu0 %v706, 8
    %v824 = vpop.permute.xlu0 %823
    %825 = vrot.lane.b32.xlu0 %v709, 8
    %v826 = vpop.permute.xlu0 %825
    %827 = vrot.lane.b32.xlu0 %v712, 8
    %v828 = vpop.permute.xlu0 %827
    %829 = vrot.lane.b32.xlu0 %v715, 8
    %v830 = vpop.permute.xlu0 %829
    %831 = vrot.lane.b32.xlu0 %v718, 8
    %v832 = vpop.permute.xlu0 %831
    %833 = vrot.lane.b32.xlu0 %v721, 8
    %v834 = vpop.permute.xlu0 %833
    %835 = vrot.lane.b32.xlu0 %v724, 8
    %v836 = vpop.permute.xlu0 %835
    %837 = vrot.lane.b32.xlu0 %v727, 8
    %v838 = vpop.permute.xlu0 %837
    %839 = vrot.lane.b32.xlu0 %v730, 8
    %v840 = vpop.permute.xlu0 %839
    %841 = vrot.lane.b32.xlu0 %v733, 8
    %v842 = vpop.permute.xlu0 %841
    %843 = vrot.lane.b32.xlu0 %v736, 8
    %v844 = vpop.permute.xlu0 %843
    %845 = vrot.lane.b32.xlu0 %v739, 8
    %v846 = vpop.permute.xlu0 %845
    %847 = vrot.lane.b32.xlu0 %v742, 8
    %v848 = vpop.permute.xlu0 %847
    %849 = vrot.lane.b32.xlu0 %v745, 8
    %v850 = vpop.permute.xlu0 %849
    %851 = vrot.lane.b32.xlu0 %v748, 8
    %v852 = vpop.permute.xlu0 %851
    %853 = vrot.lane.b32.xlu0 %v751, 8
    %v854 = vpop.permute.xlu0 %853
    %855 = vrot.lane.b32.xlu0 %v754, 8
    %v856 = vpop.permute.xlu0 %855
    %857 = vrot.lane.b32.xlu0 %v757, 8
    %v858 = vpop.permute.xlu0 %857
    %859 = vrot.lane.b32.xlu0 %v760, 8
    %v860 = vpop.permute.xlu0 %859
    %861 = vrot.lane.b32.xlu0 %v763, 8
    %v862 = vpop.permute.xlu0 %861
    %863 = vrot.lane.b32.xlu0 %v766, 8
    %v864 = vpop.permute.xlu0 %863
    %865 = vrot.lane.b32.xlu0 %v769, 8
    %v866 = vpop.permute.xlu0 %865
    %867 = vrot.lane.b32.xlu0 %v772, 8
    %v868 = vpop.permute.xlu0 %867
    %869 = vrot.lane.b32.xlu0 %v775, 8
    %v870 = vpop.permute.xlu0 %869
    %871 = vrot.lane.b32.xlu0 %v778, 8
    %v872 = vpop.permute.xlu0 %871
    %873 = vrot.lane.b32.xlu0 %v781, 8
    %v874 = vpop.permute.xlu0 %873
    %875 = vrot.lane.b32.xlu0 %v784, 8
    %v876 = vpop.permute.xlu0 %875
    %877 = vrot.lane.b32.xlu0 %v787, 8
    %v878 = vpop.permute.xlu0 %877
    %879 = vrot.lane.b32.xlu0 %v790, 8
    %v880 = vpop.permute.xlu0 %879
    %881 = vrot.lane.b32.xlu0 %v793, 8
    %v882 = vpop.permute.xlu0 %881
    %883 = vrot.lane.b32.xlu0 %v796, 8
    %v884 = vpop.permute.xlu0 %883
    %885 = vrot.lane.b32.xlu0 %v799, 8
    %v886 = vpop.permute.xlu0 %885
    %887 = vrot.lane.b32.xlu0 %v802, 8
    %v888 = vpop.permute.xlu0 %887
    %938 = vrot.lane.b32.xlu0 %v231, 12
    %v939 = vpop.permute.xlu0 %938
    %940 = vrot.lane.b32.xlu0 %v232, 12
    %v941 = vpop.permute.xlu0 %940
    %942 = vrot.lane.b32.xlu0 %v233, 12
    %v943 = vpop.permute.xlu0 %942
    %944 = vrot.lane.b32.xlu0 %v234, 12
    %v945 = vpop.permute.xlu0 %944
    %946 = vrot.lane.b32.xlu0 %v235, 12
    %v947 = vpop.permute.xlu0 %946
    %948 = vrot.lane.b32.xlu0 %v236, 12
    %v949 = vpop.permute.xlu0 %948
    %950 = vrot.lane.b32.xlu0 %v237, 12
    %v951 = vpop.permute.xlu0 %950
    %952 = vrot.lane.b32.xlu0 %v238, 12
    %v953 = vpop.permute.xlu0 %952
    %954 = vrot.lane.b32.xlu0 %v239, 12
    %v955 = vpop.permute.xlu0 %954
    %956 = vrot.lane.b32.xlu0 %v240, 12
    %v957 = vpop.permute.xlu0 %956
    %958 = vrot.lane.b32.xlu0 %v241, 12
    %v959 = vpop.permute.xlu0 %958
    %960 = vrot.lane.b32.xlu0 %v242, 12
    %v961 = vpop.permute.xlu0 %960
    %962 = vrot.lane.b32.xlu0 %v243, 12
    %v963 = vpop.permute.xlu0 %962
    %964 = vrot.lane.b32.xlu0 %v244, 12
    %v965 = vpop.permute.xlu0 %964
    %966 = vrot.lane.b32.xlu0 %v245, 12
    %v967 = vpop.permute.xlu0 %966
    %968 = vrot.lane.b32.xlu0 %v246, 12
    %v969 = vpop.permute.xlu0 %968
    %970 = vrot.lane.b32.xlu0 %v247, 12
    %v971 = vpop.permute.xlu0 %970
    %972 = vrot.lane.b32.xlu0 %v248, 12
    %v973 = vpop.permute.xlu0 %972
    %974 = vrot.lane.b32.xlu0 %v249, 12
    %v975 = vpop.permute.xlu0 %974
    %976 = vrot.lane.b32.xlu0 %v250, 12
    %v977 = vpop.permute.xlu0 %976
    %978 = vrot.lane.b32.xlu0 %v251, 12
    %v979 = vpop.permute.xlu0 %978
    %980 = vrot.lane.b32.xlu0 %v252, 12
    %v981 = vpop.permute.xlu0 %980
    %982 = vrot.lane.b32.xlu0 %v253, 12
    %v983 = vpop.permute.xlu0 %982
    %984 = vrot.lane.b32.xlu0 %v254, 12
    %v985 = vpop.permute.xlu0 %984
    %986 = vrot.lane.b32.xlu0 %v255, 12
    %v987 = vpop.permute.xlu0 %986
    %988 = vrot.lane.b32.xlu0 %v256, 12
    %v989 = vpop.permute.xlu0 %988
    %990 = vrot.lane.b32.xlu0 %v257, 12
    %v991 = vpop.permute.xlu0 %990
    %992 = vrot.lane.b32.xlu0 %v258, 12
    %v993 = vpop.permute.xlu0 %992
    %994 = vrot.lane.b32.xlu0 %v259, 12
    %v995 = vpop.permute.xlu0 %994
    %996 = vrot.lane.b32.xlu0 %v260, 12
    %v997 = vpop.permute.xlu0 %996
    %998 = vrot.lane.b32.xlu0 %v261, 12
    %v999 = vpop.permute.xlu0 %998
    %1000 = vrot.lane.b32.xlu0 %v262, 12
    %v1001 = vpop.permute.xlu0 %1000
    %1002 = vrot.lane.b32.xlu0 %v263, 12
    %v1003 = vpop.permute.xlu0 %1002
    %1004 = vrot.lane.b32.xlu0 %v264, 12
    %v1005 = vpop.permute.xlu0 %1004
    %1006 = vrot.lane.b32.xlu0 %v265, 12
    %v1007 = vpop.permute.xlu0 %1006
    %1008 = vrot.lane.b32.xlu0 %v266, 12
    %v1009 = vpop.permute.xlu0 %1008
    %1010 = vrot.lane.b32.xlu0 %v267, 12
    %v1011 = vpop.permute.xlu0 %1010
    %1012 = vrot.lane.b32.xlu0 %v268, 12
    %v1013 = vpop.permute.xlu0 %1012
    %1014 = vrot.lane.b32.xlu0 %v269, 12
    %v1015 = vpop.permute.xlu0 %1014
    %1016 = vrot.lane.b32.xlu0 %v270, 12
    %v1017 = vpop.permute.xlu0 %1016
    %1018 = vrot.lane.b32.xlu0 %v271, 12
    %v1019 = vpop.permute.xlu0 %1018
    %1020 = vrot.lane.b32.xlu0 %v272, 12
    %v1021 = vpop.permute.xlu0 %1020
    %1022 = vrot.lane.b32.xlu0 %v273, 12
    %v1023 = vpop.permute.xlu0 %1022
    %1024 = vrot.lane.b32.xlu0 %v274, 12
    %v1025 = vpop.permute.xlu0 %1024
    %1026 = vrot.lane.b32.xlu0 %v275, 12
    %v1027 = vpop.permute.xlu0 %1026
    %1028 = vrot.lane.b32.xlu0 %v276, 12
    %v1029 = vpop.permute.xlu0 %1028
    %1030 = vrot.lane.b32.xlu0 %v277, 12
    %v1031 = vpop.permute.xlu0 %1030
    %1032 = vrot.lane.b32.xlu0 %v278, 12
    %v1033 = vpop.permute.xlu0 %1032
    %v1088 = vrot.slane %v238, 1
    %v1089 = vrot.slane %v287, 1
    %v1090 = vsel %vm414, %v1088, %v1089
    %v1091 = vrot.slane %v246, 1
    %v1092 = vrot.slane %v295, 1
    %v1093 = vsel %vm414, %v1091, %v1092
    %v1094 = vrot.slane %v254, 1
    %v1095 = vrot.slane %v303, 1
    %v1096 = vsel %vm414, %v1094, %v1095
    %v1097 = vrot.slane %v262, 1
    %v1098 = vrot.slane %v311, 1
    %v1099 = vsel %vm414, %v1097, %v1098
    %v1100 = vrot.slane %v270, 1
    %v1101 = vrot.slane %v319, 1
    %v1102 = vsel %vm414, %v1100, %v1101
    %v1103 = vrot.slane %v278, 1
    %v1104 = vrot.slane %v327, 1
    %v1105 = vsel %vm414, %v1103, %v1104
    %1106 = vrot.lane.b32.xlu0 %v420, 16
    %v1107 = vpop.permute.xlu0 %1106
    %1108 = vrot.lane.b32.xlu0 %v423, 16
    %v1109 = vpop.permute.xlu0 %1108
    %1110 = vrot.lane.b32.xlu0 %v426, 16
    %v1111 = vpop.permute.xlu0 %1110
    %1112 = vrot.lane.b32.xlu0 %v429, 16
    %v1113 = vpop.permute.xlu0 %1112
    %1114 = vrot.lane.b32.xlu0 %v432, 16
    %v1115 = vpop.permute.xlu0 %1114
    %1116 = vrot.lane.b32.xlu0 %v435, 16
    %v1117 = vpop.permute.xlu0 %1116
    %1118 = vrot.lane.b32.xlu0 %v438, 16
    %v1119 = vpop.permute.xlu0 %1118
    %1120 = vrot.lane.b32.xlu0 %v1090, 16
    %v1121 = vpop.permute.xlu0 %1120
    %1122 = vrot.lane.b32.xlu0 %v441, 16
    %v1123 = vpop.permute.xlu0 %1122
    %1124 = vrot.lane.b32.xlu0 %v444, 16
    %v1125 = vpop.permute.xlu0 %1124
    %1126 = vrot.lane.b32.xlu0 %v447, 16
    %v1127 = vpop.permute.xlu0 %1126
    %1128 = vrot.lane.b32.xlu0 %v450, 16
    %v1129 = vpop.permute.xlu0 %1128
    %1130 = vrot.lane.b32.xlu0 %v453, 16
    %v1131 = vpop.permute.xlu0 %1130
    %1132 = vrot.lane.b32.xlu0 %v456, 16
    %v1133 = vpop.permute.xlu0 %1132
    %1134 = vrot.lane.b32.xlu0 %v459, 16
    %v1135 = vpop.permute.xlu0 %1134
    %1136 = vrot.lane.b32.xlu0 %v1093, 16
    %v1137 = vpop.permute.xlu0 %1136
    %1138 = vrot.lane.b32.xlu0 %v462, 16
    %v1139 = vpop.permute.xlu0 %1138
    %1140 = vrot.lane.b32.xlu0 %v465, 16
    %v1141 = vpop.permute.xlu0 %1140
    %1142 = vrot.lane.b32.xlu0 %v468, 16
    %v1143 = vpop.permute.xlu0 %1142
    %1144 = vrot.lane.b32.xlu0 %v471, 16
    %v1145 = vpop.permute.xlu0 %1144
    %1146 = vrot.lane.b32.xlu0 %v474, 16
    %v1147 = vpop.permute.xlu0 %1146
    %1148 = vrot.lane.b32.xlu0 %v477, 16
    %v1149 = vpop.permute.xlu0 %1148
    %1150 = vrot.lane.b32.xlu0 %v480, 16
    %v1151 = vpop.permute.xlu0 %1150
    %1152 = vrot.lane.b32.xlu0 %v1096, 16
    %v1153 = vpop.permute.xlu0 %1152
    %1154 = vrot.lane.b32.xlu0 %v483, 16
    %v1155 = vpop.permute.xlu0 %1154
    %1156 = vrot.lane.b32.xlu0 %v486, 16
    %v1157 = vpop.permute.xlu0 %1156
    %1158 = vrot.lane.b32.xlu0 %v489, 16
    %v1159 = vpop.permute.xlu0 %1158
    %1160 = vrot.lane.b32.xlu0 %v492, 16
    %v1161 = vpop.permute.xlu0 %1160
    %1162 = vrot.lane.b32.xlu0 %v495, 16
    %v1163 = vpop.permute.xlu0 %1162
    %1164 = vrot.lane.b32.xlu0 %v498, 16
    %v1165 = vpop.permute.xlu0 %1164
    %1166 = vrot.lane.b32.xlu0 %v501, 16
    %v1167 = vpop.permute.xlu0 %1166
    %1168 = vrot.lane.b32.xlu0 %v1099, 16
    %v1169 = vpop.permute.xlu0 %1168
    %1170 = vrot.lane.b32.xlu0 %v504, 16
    %v1171 = vpop.permute.xlu0 %1170
    %1172 = vrot.lane.b32.xlu0 %v507, 16
    %v1173 = vpop.permute.xlu0 %1172
    %1174 = vrot.lane.b32.xlu0 %v510, 16
    %v1175 = vpop.permute.xlu0 %1174
    %1176 = vrot.lane.b32.xlu0 %v513, 16
    %v1177 = vpop.permute.xlu0 %1176
    %1178 = vrot.lane.b32.xlu0 %v516, 16
    %v1179 = vpop.permute.xlu0 %1178
    %1180 = vrot.lane.b32.xlu0 %v519, 16
    %v1181 = vpop.permute.xlu0 %1180
    %1182 = vrot.lane.b32.xlu0 %v522, 16
    %v1183 = vpop.permute.xlu0 %1182
    %1184 = vrot.lane.b32.xlu0 %v1102, 16
    %v1185 = vpop.permute.xlu0 %1184
    %1186 = vrot.lane.b32.xlu0 %v525, 16
    %v1187 = vpop.permute.xlu0 %1186
    %1188 = vrot.lane.b32.xlu0 %v528, 16
    %v1189 = vpop.permute.xlu0 %1188
    %1190 = vrot.lane.b32.xlu0 %v531, 16
    %v1191 = vpop.permute.xlu0 %1190
    %1192 = vrot.lane.b32.xlu0 %v534, 16
    %v1193 = vpop.permute.xlu0 %1192
    %1194 = vrot.lane.b32.xlu0 %v537, 16
    %v1195 = vpop.permute.xlu0 %1194
    %1196 = vrot.lane.b32.xlu0 %v540, 16
    %v1197 = vpop.permute.xlu0 %1196
    %1198 = vrot.lane.b32.xlu0 %v543, 16
    %v1199 = vpop.permute.xlu0 %1198
    %1200 = vrot.lane.b32.xlu0 %v1105, 16
    %v1201 = vpop.permute.xlu0 %1200
    %v1250 = vrot.slane %v238, 2
    %v1251 = vrot.slane %v287, 2
    %v1252 = vsel %vm673, %v1250, %v1251
    %v1253 = vrot.slane %v246, 2
    %v1254 = vrot.slane %v295, 2
    %v1255 = vsel %vm673, %v1253, %v1254
    %v1256 = vrot.slane %v254, 2
    %v1257 = vrot.slane %v303, 2
    %v1258 = vsel %vm673, %v1256, %v1257
    %v1259 = vrot.slane %v262, 2
    %v1260 = vrot.slane %v311, 2
    %v1261 = vsel %vm673, %v1259, %v1260
    %v1262 = vrot.slane %v270, 2
    %v1263 = vrot.slane %v319, 2
    %v1264 = vsel %vm673, %v1262, %v1263
    %v1265 = vrot.slane %v278, 2
    %v1266 = vrot.slane %v327, 2
    %v1267 = vsel %vm673, %v1265, %v1266
    %1268 = vrot.lane.b32.xlu0 %v679, 20
    %v1269 = vpop.permute.xlu0 %1268
    %1270 = vrot.lane.b32.xlu0 %v682, 20
    %v1271 = vpop.permute.xlu0 %1270
    %1272 = vrot.lane.b32.xlu0 %v685, 20
    %v1273 = vpop.permute.xlu0 %1272
    %1274 = vrot.lane.b32.xlu0 %v688, 20
    %v1275 = vpop.permute.xlu0 %1274
    %1276 = vrot.lane.b32.xlu0 %v691, 20
    %v1277 = vpop.permute.xlu0 %1276
    %1278 = vrot.lane.b32.xlu0 %v694, 20
    %v1279 = vpop.permute.xlu0 %1278
    %1280 = vrot.lane.b32.xlu0 %v697, 20
    %v1281 = vpop.permute.xlu0 %1280
    %1282 = vrot.lane.b32.xlu0 %v1252, 20
    %v1283 = vpop.permute.xlu0 %1282
    %1284 = vrot.lane.b32.xlu0 %v700, 20
    %v1285 = vpop.permute.xlu0 %1284
    %1286 = vrot.lane.b32.xlu0 %v703, 20
    %v1287 = vpop.permute.xlu0 %1286
    %1288 = vrot.lane.b32.xlu0 %v706, 20
    %v1289 = vpop.permute.xlu0 %1288
    %1290 = vrot.lane.b32.xlu0 %v709, 20
    %v1291 = vpop.permute.xlu0 %1290
    %1292 = vrot.lane.b32.xlu0 %v712, 20
    %v1293 = vpop.permute.xlu0 %1292
    %1294 = vrot.lane.b32.xlu0 %v715, 20
    %v1295 = vpop.permute.xlu0 %1294
    %1296 = vrot.lane.b32.xlu0 %v718, 20
    %v1297 = vpop.permute.xlu0 %1296
    %1298 = vrot.lane.b32.xlu0 %v1255, 20
    %v1299 = vpop.permute.xlu0 %1298
    %1300 = vrot.lane.b32.xlu0 %v721, 20
    %v1301 = vpop.permute.xlu0 %1300
    %1302 = vrot.lane.b32.xlu0 %v724, 20
    %v1303 = vpop.permute.xlu0 %1302
    %1304 = vrot.lane.b32.xlu0 %v727, 20
    %v1305 = vpop.permute.xlu0 %1304
    %1306 = vrot.lane.b32.xlu0 %v730, 20
    %v1307 = vpop.permute.xlu0 %1306
    %1308 = vrot.lane.b32.xlu0 %v733, 20
    %v1309 = vpop.permute.xlu0 %1308
    %1310 = vrot.lane.b32.xlu0 %v736, 20
    %v1311 = vpop.permute.xlu0 %1310
    %1312 = vrot.lane.b32.xlu0 %v739, 20
    %v1313 = vpop.permute.xlu0 %1312
    %1314 = vrot.lane.b32.xlu0 %v1258, 20
    %v1315 = vpop.permute.xlu0 %1314
    %1316 = vrot.lane.b32.xlu0 %v742, 20
    %v1317 = vpop.permute.xlu0 %1316
    %1318 = vrot.lane.b32.xlu0 %v745, 20
    %v1319 = vpop.permute.xlu0 %1318
    %1320 = vrot.lane.b32.xlu0 %v748, 20
    %v1321 = vpop.permute.xlu0 %1320
    %1322 = vrot.lane.b32.xlu0 %v751, 20
    %v1323 = vpop.permute.xlu0 %1322
    %1324 = vrot.lane.b32.xlu0 %v754, 20
    %v1325 = vpop.permute.xlu0 %1324
    %1326 = vrot.lane.b32.xlu0 %v757, 20
    %v1327 = vpop.permute.xlu0 %1326
    %1328 = vrot.lane.b32.xlu0 %v760, 20
    %v1329 = vpop.permute.xlu0 %1328
    %1330 = vrot.lane.b32.xlu0 %v1261, 20
    %v1331 = vpop.permute.xlu0 %1330
    %1332 = vrot.lane.b32.xlu0 %v763, 20
    %v1333 = vpop.permute.xlu0 %1332
    %1334 = vrot.lane.b32.xlu0 %v766, 20
    %v1335 = vpop.permute.xlu0 %1334
    %1336 = vrot.lane.b32.xlu0 %v769, 20
    %v1337 = vpop.permute.xlu0 %1336
    %1338 = vrot.lane.b32.xlu0 %v772, 20
    %v1339 = vpop.permute.xlu0 %1338
    %1340 = vrot.lane.b32.xlu0 %v775, 20
    %v1341 = vpop.permute.xlu0 %1340
    %1342 = vrot.lane.b32.xlu0 %v778, 20
    %v1343 = vpop.permute.xlu0 %1342
    %1344 = vrot.lane.b32.xlu0 %v781, 20
    %v1345 = vpop.permute.xlu0 %1344
    %1346 = vrot.lane.b32.xlu0 %v1264, 20
    %v1347 = vpop.permute.xlu0 %1346
    %1348 = vrot.lane.b32.xlu0 %v784, 20
    %v1349 = vpop.permute.xlu0 %1348
    %1350 = vrot.lane.b32.xlu0 %v787, 20
    %v1351 = vpop.permute.xlu0 %1350
    %1352 = vrot.lane.b32.xlu0 %v790, 20
    %v1353 = vpop.permute.xlu0 %1352
    %1354 = vrot.lane.b32.xlu0 %v793, 20
    %v1355 = vpop.permute.xlu0 %1354
    %1356 = vrot.lane.b32.xlu0 %v796, 20
    %v1357 = vpop.permute.xlu0 %1356
    %1358 = vrot.lane.b32.xlu0 %v799, 20
    %v1359 = vpop.permute.xlu0 %1358
    %1360 = vrot.lane.b32.xlu0 %v802, 20
    %v1361 = vpop.permute.xlu0 %1360
    %1362 = vrot.lane.b32.xlu0 %v1267, 20
    %v1363 = vpop.permute.xlu0 %1362
    %1412 = vrot.lane.b32.xlu0 %v232, 24
    %v1413 = vpop.permute.xlu0 %1412
    %1414 = vrot.lane.b32.xlu0 %v233, 24
    %v1415 = vpop.permute.xlu0 %1414
    %1416 = vrot.lane.b32.xlu0 %v234, 24
    %v1417 = vpop.permute.xlu0 %1416
    %1418 = vrot.lane.b32.xlu0 %v235, 24
    %v1419 = vpop.permute.xlu0 %1418
    %1420 = vrot.lane.b32.xlu0 %v236, 24
    %v1421 = vpop.permute.xlu0 %1420
    %1422 = vrot.lane.b32.xlu0 %v237, 24
    %v1423 = vpop.permute.xlu0 %1422
    %1424 = vrot.lane.b32.xlu0 %v238, 24
    %v1425 = vpop.permute.xlu0 %1424
    %1426 = vrot.lane.b32.xlu0 %v230, 24
    %v1427 = vpop.permute.xlu0 %1426
    %1428 = vrot.lane.b32.xlu0 %v240, 24
    %v1429 = vpop.permute.xlu0 %1428
    %1430 = vrot.lane.b32.xlu0 %v241, 24
    %v1431 = vpop.permute.xlu0 %1430
    %1432 = vrot.lane.b32.xlu0 %v242, 24
    %v1433 = vpop.permute.xlu0 %1432
    %1434 = vrot.lane.b32.xlu0 %v243, 24
    %v1435 = vpop.permute.xlu0 %1434
    %1436 = vrot.lane.b32.xlu0 %v244, 24
    %v1437 = vpop.permute.xlu0 %1436
    %1438 = vrot.lane.b32.xlu0 %v245, 24
    %v1439 = vpop.permute.xlu0 %1438
    %1440 = vrot.lane.b32.xlu0 %v246, 24
    %v1441 = vpop.permute.xlu0 %1440
    %1442 = vrot.lane.b32.xlu0 %v248, 24
    %v1443 = vpop.permute.xlu0 %1442
    %1444 = vrot.lane.b32.xlu0 %v249, 24
    %v1445 = vpop.permute.xlu0 %1444
    %1446 = vrot.lane.b32.xlu0 %v250, 24
    %v1447 = vpop.permute.xlu0 %1446
    %1448 = vrot.lane.b32.xlu0 %v251, 24
    %v1449 = vpop.permute.xlu0 %1448
    %1450 = vrot.lane.b32.xlu0 %v252, 24
    %v1451 = vpop.permute.xlu0 %1450
    %1452 = vrot.lane.b32.xlu0 %v253, 24
    %v1453 = vpop.permute.xlu0 %1452
    %1454 = vrot.lane.b32.xlu0 %v254, 24
    %v1455 = vpop.permute.xlu0 %1454
    %1456 = vrot.lane.b32.xlu0 %v256, 24
    %v1457 = vpop.permute.xlu0 %1456
    %1458 = vrot.lane.b32.xlu0 %v257, 24
    %v1459 = vpop.permute.xlu0 %1458
    %1460 = vrot.lane.b32.xlu0 %v258, 24
    %v1461 = vpop.permute.xlu0 %1460
    %1462 = vrot.lane.b32.xlu0 %v259, 24
    %v1463 = vpop.permute.xlu0 %1462
    %1464 = vrot.lane.b32.xlu0 %v260, 24
    %v1465 = vpop.permute.xlu0 %1464
    %1466 = vrot.lane.b32.xlu0 %v261, 24
    %v1467 = vpop.permute.xlu0 %1466
    %1468 = vrot.lane.b32.xlu0 %v262, 24
    %v1469 = vpop.permute.xlu0 %1468
    %1470 = vrot.lane.b32.xlu0 %v264, 24
    %v1471 = vpop.permute.xlu0 %1470
    %1472 = vrot.lane.b32.xlu0 %v265, 24
    %v1473 = vpop.permute.xlu0 %1472
    %1474 = vrot.lane.b32.xlu0 %v266, 24
    %v1475 = vpop.permute.xlu0 %1474
    %1476 = vrot.lane.b32.xlu0 %v267, 24
    %v1477 = vpop.permute.xlu0 %1476
    %1478 = vrot.lane.b32.xlu0 %v268, 24
    %v1479 = vpop.permute.xlu0 %1478
    %1480 = vrot.lane.b32.xlu0 %v269, 24
    %v1481 = vpop.permute.xlu0 %1480
    %1482 = vrot.lane.b32.xlu0 %v270, 24
    %v1483 = vpop.permute.xlu0 %1482
    %1484 = vrot.lane.b32.xlu0 %v272, 24
    %v1485 = vpop.permute.xlu0 %1484
    %1486 = vrot.lane.b32.xlu0 %v273, 24
    %v1487 = vpop.permute.xlu0 %1486
    %1488 = vrot.lane.b32.xlu0 %v274, 24
    %v1489 = vpop.permute.xlu0 %1488
    %1490 = vrot.lane.b32.xlu0 %v275, 24
    %v1491 = vpop.permute.xlu0 %1490
    %1492 = vrot.lane.b32.xlu0 %v276, 24
    %v1493 = vpop.permute.xlu0 %1492
    %1494 = vrot.lane.b32.xlu0 %v277, 24
    %v1495 = vpop.permute.xlu0 %1494
    %1496 = vrot.lane.b32.xlu0 %v278, 24
    %v1497 = vpop.permute.xlu0 %1496
    %1541 = vrot.lane.b32.xlu0 %v423, 28
    %v1542 = vpop.permute.xlu0 %1541
    %1543 = vrot.lane.b32.xlu0 %v426, 28
    %v1544 = vpop.permute.xlu0 %1543
    %1545 = vrot.lane.b32.xlu0 %v429, 28
    %v1546 = vpop.permute.xlu0 %1545
    %1547 = vrot.lane.b32.xlu0 %v432, 28
    %v1548 = vpop.permute.xlu0 %1547
    %1549 = vrot.lane.b32.xlu0 %v435, 28
    %v1550 = vpop.permute.xlu0 %1549
    %1551 = vrot.lane.b32.xlu0 %v438, 28
    %v1552 = vpop.permute.xlu0 %1551
    %1553 = vrot.lane.b32.xlu0 %v1090, 28
    %v1554 = vpop.permute.xlu0 %1553
    %1555 = vrot.lane.b32.xlu0 %v417, 28
    %v1556 = vpop.permute.xlu0 %1555
    %1557 = vrot.lane.b32.xlu0 %v444, 28
    %v1558 = vpop.permute.xlu0 %1557
    %1559 = vrot.lane.b32.xlu0 %v447, 28
    %v1560 = vpop.permute.xlu0 %1559
    %1561 = vrot.lane.b32.xlu0 %v450, 28
    %v1562 = vpop.permute.xlu0 %1561
    %1563 = vrot.lane.b32.xlu0 %v453, 28
    %v1564 = vpop.permute.xlu0 %1563
    %1565 = vrot.lane.b32.xlu0 %v456, 28
    %v1566 = vpop.permute.xlu0 %1565
    %1567 = vrot.lane.b32.xlu0 %v459, 28
    %v1568 = vpop.permute.xlu0 %1567
    %1569 = vrot.lane.b32.xlu0 %v1093, 28
    %v1570 = vpop.permute.xlu0 %1569
    %1571 = vrot.lane.b32.xlu0 %v465, 28
    %v1572 = vpop.permute.xlu0 %1571
    %1573 = vrot.lane.b32.xlu0 %v468, 28
    %v1574 = vpop.permute.xlu0 %1573
    %1575 = vrot.lane.b32.xlu0 %v471, 28
    %v1576 = vpop.permute.xlu0 %1575
    %1577 = vrot.lane.b32.xlu0 %v474, 28
    %v1578 = vpop.permute.xlu0 %1577
    %1579 = vrot.lane.b32.xlu0 %v477, 28
    %v1580 = vpop.permute.xlu0 %1579
    %1581 = vrot.lane.b32.xlu0 %v480, 28
    %v1582 = vpop.permute.xlu0 %1581
    %1583 = vrot.lane.b32.xlu0 %v1096, 28
    %v1584 = vpop.permute.xlu0 %1583
    %1585 = vrot.lane.b32.xlu0 %v486, 28
    %v1586 = vpop.permute.xlu0 %1585
    %1587 = vrot.lane.b32.xlu0 %v489, 28
    %v1588 = vpop.permute.xlu0 %1587
    %1589 = vrot.lane.b32.xlu0 %v492, 28
    %v1590 = vpop.permute.xlu0 %1589
    %1591 = vrot.lane.b32.xlu0 %v495, 28
    %v1592 = vpop.permute.xlu0 %1591
    %1593 = vrot.lane.b32.xlu0 %v498, 28
    %v1594 = vpop.permute.xlu0 %1593
    %1595 = vrot.lane.b32.xlu0 %v501, 28
    %v1596 = vpop.permute.xlu0 %1595
    %1597 = vrot.lane.b32.xlu0 %v1099, 28
    %v1598 = vpop.permute.xlu0 %1597
    %1599 = vrot.lane.b32.xlu0 %v507, 28
    %v1600 = vpop.permute.xlu0 %1599
    %1601 = vrot.lane.b32.xlu0 %v510, 28
    %v1602 = vpop.permute.xlu0 %1601
    %1603 = vrot.lane.b32.xlu0 %v513, 28
    %v1604 = vpop.permute.xlu0 %1603
    %1605 = vrot.lane.b32.xlu0 %v516, 28
    %v1606 = vpop.permute.xlu0 %1605
    %1607 = vrot.lane.b32.xlu0 %v519, 28
    %v1608 = vpop.permute.xlu0 %1607
    %1609 = vrot.lane.b32.xlu0 %v522, 28
    %v1610 = vpop.permute.xlu0 %1609
    %1611 = vrot.lane.b32.xlu0 %v1102, 28
    %v1612 = vpop.permute.xlu0 %1611
    %1613 = vrot.lane.b32.xlu0 %v528, 28
    %v1614 = vpop.permute.xlu0 %1613
    %1615 = vrot.lane.b32.xlu0 %v531, 28
    %v1616 = vpop.permute.xlu0 %1615
    %1617 = vrot.lane.b32.xlu0 %v534, 28
    %v1618 = vpop.permute.xlu0 %1617
    %1619 = vrot.lane.b32.xlu0 %v537, 28
    %v1620 = vpop.permute.xlu0 %1619
    %1621 = vrot.lane.b32.xlu0 %v540, 28
    %v1622 = vpop.permute.xlu0 %1621
    %1623 = vrot.lane.b32.xlu0 %v543, 28
    %v1624 = vpop.permute.xlu0 %1623
    %1625 = vrot.lane.b32.xlu0 %v1105, 28
    %v1626 = vpop.permute.xlu0 %1625
    %1670 = vrot.lane.b32.xlu0 %v682, 32
    %v1671 = vpop.permute.xlu0 %1670
    %1672 = vrot.lane.b32.xlu0 %v685, 32
    %v1673 = vpop.permute.xlu0 %1672
    %1674 = vrot.lane.b32.xlu0 %v688, 32
    %v1675 = vpop.permute.xlu0 %1674
    %1676 = vrot.lane.b32.xlu0 %v691, 32
    %v1677 = vpop.permute.xlu0 %1676
    %1678 = vrot.lane.b32.xlu0 %v694, 32
    %v1679 = vpop.permute.xlu0 %1678
    %1680 = vrot.lane.b32.xlu0 %v697, 32
    %v1681 = vpop.permute.xlu0 %1680
    %1682 = vrot.lane.b32.xlu0 %v1252, 32
    %v1683 = vpop.permute.xlu0 %1682
    %1684 = vrot.lane.b32.xlu0 %v676, 32
    %v1685 = vpop.permute.xlu0 %1684
    %1686 = vrot.lane.b32.xlu0 %v703, 32
    %v1687 = vpop.permute.xlu0 %1686
    %1688 = vrot.lane.b32.xlu0 %v706, 32
    %v1689 = vpop.permute.xlu0 %1688
    %1690 = vrot.lane.b32.xlu0 %v709, 32
    %v1691 = vpop.permute.xlu0 %1690
    %1692 = vrot.lane.b32.xlu0 %v712, 32
    %v1693 = vpop.permute.xlu0 %1692
    %1694 = vrot.lane.b32.xlu0 %v715, 32
    %v1695 = vpop.permute.xlu0 %1694
    %1696 = vrot.lane.b32.xlu0 %v718, 32
    %v1697 = vpop.permute.xlu0 %1696
    %1698 = vrot.lane.b32.xlu0 %v1255, 32
    %v1699 = vpop.permute.xlu0 %1698
    %1700 = vrot.lane.b32.xlu0 %v724, 32
    %v1701 = vpop.permute.xlu0 %1700
    %1702 = vrot.lane.b32.xlu0 %v727, 32
    %v1703 = vpop.permute.xlu0 %1702
    %1704 = vrot.lane.b32.xlu0 %v730, 32
    %v1705 = vpop.permute.xlu0 %1704
    %1706 = vrot.lane.b32.xlu0 %v733, 32
    %v1707 = vpop.permute.xlu0 %1706
    %1708 = vrot.lane.b32.xlu0 %v736, 32
    %v1709 = vpop.permute.xlu0 %1708
    %1710 = vrot.lane.b32.xlu0 %v739, 32
    %v1711 = vpop.permute.xlu0 %1710
    %1712 = vrot.lane.b32.xlu0 %v1258, 32
    %v1713 = vpop.permute.xlu0 %1712
    %1714 = vrot.lane.b32.xlu0 %v745, 32
    %v1715 = vpop.permute.xlu0 %1714
    %1716 = vrot.lane.b32.xlu0 %v748, 32
    %v1717 = vpop.permute.xlu0 %1716
    %1718 = vrot.lane.b32.xlu0 %v751, 32
    %v1719 = vpop.permute.xlu0 %1718
    %1720 = vrot.lane.b32.xlu0 %v754, 32
    %v1721 = vpop.permute.xlu0 %1720
    %1722 = vrot.lane.b32.xlu0 %v757, 32
    %v1723 = vpop.permute.xlu0 %1722
    %1724 = vrot.lane.b32.xlu0 %v760, 32
    %v1725 = vpop.permute.xlu0 %1724
    %1726 = vrot.lane.b32.xlu0 %v1261, 32
    %v1727 = vpop.permute.xlu0 %1726
    %1728 = vrot.lane.b32.xlu0 %v766, 32
    %v1729 = vpop.permute.xlu0 %1728
    %1730 = vrot.lane.b32.xlu0 %v769, 32
    %v1731 = vpop.permute.xlu0 %1730
    %1732 = vrot.lane.b32.xlu0 %v772, 32
    %v1733 = vpop.permute.xlu0 %1732
    %1734 = vrot.lane.b32.xlu0 %v775, 32
    %v1735 = vpop.permute.xlu0 %1734
    %1736 = vrot.lane.b32.xlu0 %v778, 32
    %v1737 = vpop.permute.xlu0 %1736
    %1738 = vrot.lane.b32.xlu0 %v781, 32
    %v1739 = vpop.permute.xlu0 %1738
    %1740 = vrot.lane.b32.xlu0 %v1264, 32
    %v1741 = vpop.permute.xlu0 %1740
    %1742 = vrot.lane.b32.xlu0 %v787, 32
    %v1743 = vpop.permute.xlu0 %1742
    %1744 = vrot.lane.b32.xlu0 %v790, 32
    %v1745 = vpop.permute.xlu0 %1744
    %1746 = vrot.lane.b32.xlu0 %v793, 32
    %v1747 = vpop.permute.xlu0 %1746
    %1748 = vrot.lane.b32.xlu0 %v796, 32
    %v1749 = vpop.permute.xlu0 %1748
    %1750 = vrot.lane.b32.xlu0 %v799, 32
    %v1751 = vpop.permute.xlu0 %1750
    %1752 = vrot.lane.b32.xlu0 %v802, 32
    %v1753 = vpop.permute.xlu0 %1752
    %1754 = vrot.lane.b32.xlu0 %v1267, 32
    %v1755 = vpop.permute.xlu0 %1754
    %vm1799 = vcmask 31744
    %v1800 = vsel %vm1799, %v230, %v545
    %v1801 = vsel %vm1799, %v231, %v547
    %v1802 = vsel %vm1799, %v232, %v549
    %v1803 = vsel %vm1799, %v233, %v551
    %v1804 = vsel %vm1799, %v234, %v553
    %v1805 = vsel %vm1799, %v235, %v555
    %v1806 = vsel %vm1799, %v236, %v557
    %v1807 = vsel %vm1799, %v237, %v559
    %v1808 = vsel %vm1799, %v239, %v561
    %v1809 = vsel %vm1799, %v240, %v563
    %v1810 = vsel %vm1799, %v241, %v565
    %v1811 = vsel %vm1799, %v242, %v567
    %v1812 = vsel %vm1799, %v243, %v569
    %v1813 = vsel %vm1799, %v244, %v571
    %v1814 = vsel %vm1799, %v245, %v573
    %v1815 = vsel %vm1799, %v247, %v575
    %v1816 = vsel %vm1799, %v248, %v577
    %v1817 = vsel %vm1799, %v249, %v579
    %v1818 = vsel %vm1799, %v250, %v581
    %v1819 = vsel %vm1799, %v251, %v583
    %v1820 = vsel %vm1799, %v252, %v585
    %v1821 = vsel %vm1799, %v253, %v587
    %v1822 = vsel %vm1799, %v255, %v589
    %v1823 = vsel %vm1799, %v256, %v591
    %v1824 = vsel %vm1799, %v257, %v593
    %v1825 = vsel %vm1799, %v258, %v595
    %v1826 = vsel %vm1799, %v259, %v597
    %v1827 = vsel %vm1799, %v260, %v599
    %v1828 = vsel %vm1799, %v261, %v601
    %v1829 = vsel %vm1799, %v263, %v603
    %v1830 = vsel %vm1799, %v264, %v605
    %v1831 = vsel %vm1799, %v265, %v607
    %v1832 = vsel %vm1799, %v266, %v609
    %v1833 = vsel %vm1799, %v267, %v611
    %v1834 = vsel %vm1799, %v268, %v613
    %v1835 = vsel %vm1799, %v269, %v615
    %v1836 = vsel %vm1799, %v271, %v617
    %v1837 = vsel %vm1799, %v272, %v619
    %v1838 = vsel %vm1799, %v273, %v621
    %v1839 = vsel %vm1799, %v274, %v623
    %v1840 = vsel %vm1799, %v275, %v625
    %v1841 = vsel %vm1799, %v276, %v627
    %v1842 = vsel %vm1799, %v277, %v629
    %vm1843 = vcmask 64512
    %v1844 = vsel %vm1843, %v1800, %v804
    %v1845 = vsel %vm1843, %v1801, %v806
    %v1846 = vsel %vm1843, %v1802, %v808
    %v1847 = vsel %vm1843, %v1803, %v810
    %v1848 = vsel %vm1843, %v1804, %v812
    %v1849 = vsel %vm1843, %v1805, %v814
    %v1850 = vsel %vm1843, %v1806, %v816
    %v1851 = vsel %vm1843, %v1807, %v818
    %v1852 = vsel %vm1843, %v1808, %v820
    %v1853 = vsel %vm1843, %v1809, %v822
    %v1854 = vsel %vm1843, %v1810, %v824
    %v1855 = vsel %vm1843, %v1811, %v826
    %v1856 = vsel %vm1843, %v1812, %v828
    %v1857 = vsel %vm1843, %v1813, %v830
    %v1858 = vsel %vm1843, %v1814, %v832
    %v1859 = vsel %vm1843, %v1815, %v834
    %v1860 = vsel %vm1843, %v1816, %v836
    %v1861 = vsel %vm1843, %v1817, %v838
    %v1862 = vsel %vm1843, %v1818, %v840
    %v1863 = vsel %vm1843, %v1819, %v842
    %v1864 = vsel %vm1843, %v1820, %v844
    %v1865 = vsel %vm1843, %v1821, %v846
    %v1866 = vsel %vm1843, %v1822, %v848
    %v1867 = vsel %vm1843, %v1823, %v850
    %v1868 = vsel %vm1843, %v1824, %v852
    %v1869 = vsel %vm1843, %v1825, %v854
    %v1870 = vsel %vm1843, %v1826, %v856
    %v1871 = vsel %vm1843, %v1827, %v858
    %v1872 = vsel %vm1843, %v1828, %v860
    %v1873 = vsel %vm1843, %v1829, %v862
    %v1874 = vsel %vm1843, %v1830, %v864
    %v1875 = vsel %vm1843, %v1831, %v866
    %v1876 = vsel %vm1843, %v1832, %v868
    %v1877 = vsel %vm1843, %v1833, %v870
    %v1878 = vsel %vm1843, %v1834, %v872
    %v1879 = vsel %vm1843, %v1835, %v874
    %v1880 = vsel %vm1843, %v1836, %v876
    %v1881 = vsel %vm1843, %v1837, %v878
    %v1882 = vsel %vm1843, %v1838, %v880
    %v1883 = vsel %vm1843, %v1839, %v882
    %v1884 = vsel %vm1843, %v1840, %v884
    %v1885 = vsel %vm1843, %v1841, %v886
    %v1886 = vsel %vm1843, %v1842, %v888
    %vm1887 = vcmask 97280
    %v1888 = vsel %vm1887, %v1844, %v939
    %v1889 = vsel %vm1887, %v1845, %v941
    %v1890 = vsel %vm1887, %v1846, %v943
    %v1891 = vsel %vm1887, %v1847, %v945
    %v1892 = vsel %vm1887, %v1848, %v947
    %v1893 = vsel %vm1887, %v1849, %v949
    %v1894 = vsel %vm1887, %v1850, %v951
    %v1895 = vsel %vm1887, %v1851, %v953
    %v1896 = vsel %vm1887, %v1844, %v955
    %v1897 = vsel %vm1887, %v1852, %v957
    %v1898 = vsel %vm1887, %v1853, %v959
    %v1899 = vsel %vm1887, %v1854, %v961
    %v1900 = vsel %vm1887, %v1855, %v963
    %v1901 = vsel %vm1887, %v1856, %v965
    %v1902 = vsel %vm1887, %v1857, %v967
    %v1903 = vsel %vm1887, %v1858, %v969
    %v1904 = vsel %vm1887, %v1844, %v971
    %v1905 = vsel %vm1887, %v1859, %v973
    %v1906 = vsel %vm1887, %v1860, %v975
    %v1907 = vsel %vm1887, %v1861, %v977
    %v1908 = vsel %vm1887, %v1862, %v979
    %v1909 = vsel %vm1887, %v1863, %v981
    %v1910 = vsel %vm1887, %v1864, %v983
    %v1911 = vsel %vm1887, %v1865, %v985
    %v1912 = vsel %vm1887, %v1844, %v987
    %v1913 = vsel %vm1887, %v1866, %v989
    %v1914 = vsel %vm1887, %v1867, %v991
    %v1915 = vsel %vm1887, %v1868, %v993
    %v1916 = vsel %vm1887, %v1869, %v995
    %v1917 = vsel %vm1887, %v1870, %v997
    %v1918 = vsel %vm1887, %v1871, %v999
    %v1919 = vsel %vm1887, %v1872, %v1001
    %v1920 = vsel %vm1887, %v1844, %v1003
    %v1921 = vsel %vm1887, %v1873, %v1005
    %v1922 = vsel %vm1887, %v1874, %v1007
    %v1923 = vsel %vm1887, %v1875, %v1009
    %v1924 = vsel %vm1887, %v1876, %v1011
    %v1925 = vsel %vm1887, %v1877, %v1013
    %v1926 = vsel %vm1887, %v1878, %v1015
    %v1927 = vsel %vm1887, %v1879, %v1017
    %v1928 = vsel %vm1887, %v1844, %v1019
    %v1929 = vsel %vm1887, %v1880, %v1021
    %v1930 = vsel %vm1887, %v1881, %v1023
    %v1931 = vsel %vm1887, %v1882, %v1025
    %v1932 = vsel %vm1887, %v1883, %v1027
    %v1933 = vsel %vm1887, %v1884, %v1029
    %v1934 = vsel %vm1887, %v1885, %v1031
    %v1935 = vsel %vm1887, %v1886, %v1033
    %vm1936 = vcmask 130048
    %v1937 = vsel %vm1936, %v1888, %v1107
    %v1938 = vsel %vm1936, %v1889, %v1109
    %v1939 = vsel %vm1936, %v1890, %v1111
    %v1940 = vsel %vm1936, %v1891, %v1113
    %v1941 = vsel %vm1936, %v1892, %v1115
    %v1942 = vsel %vm1936, %v1893, %v1117
    %v1943 = vsel %vm1936, %v1894, %v1119
    %v1944 = vsel %vm1936, %v1895, %v1121
    %v1945 = vsel %vm1936, %v1896, %v1123
    %v1946 = vsel %vm1936, %v1897, %v1125
    %v1947 = vsel %vm1936, %v1898, %v1127
    %v1948 = vsel %vm1936, %v1899, %v1129
    %v1949 = vsel %vm1936, %v1900, %v1131
    %v1950 = vsel %vm1936, %v1901, %v1133
    %v1951 = vsel %vm1936, %v1902, %v1135
    %v1952 = vsel %vm1936, %v1903, %v1137
    %v1953 = vsel %vm1936, %v1904, %v1139
    %v1954 = vsel %vm1936, %v1905, %v1141
    %v1955 = vsel %vm1936, %v1906, %v1143
    %v1956 = vsel %vm1936, %v1907, %v1145
    %v1957 = vsel %vm1936, %v1908, %v1147
    %v1958 = vsel %vm1936, %v1909, %v1149
    %v1959 = vsel %vm1936, %v1910, %v1151
    %v1960 = vsel %vm1936, %v1911, %v1153
    %v1961 = vsel %vm1936, %v1912, %v1155
    %v1962 = vsel %vm1936, %v1913, %v1157
    %v1963 = vsel %vm1936, %v1914, %v1159
    %v1964 = vsel %vm1936, %v1915, %v1161
    %v1965 = vsel %vm1936, %v1916, %v1163
    %v1966 = vsel %vm1936, %v1917, %v1165
    %v1967 = vsel %vm1936, %v1918, %v1167
    %v1968 = vsel %vm1936, %v1919, %v1169
    %v1969 = vsel %vm1936, %v1920, %v1171
    %v1970 = vsel %vm1936, %v1921, %v1173
    %v1971 = vsel %vm1936, %v1922, %v1175
    %v1972 = vsel %vm1936, %v1923, %v1177
    %v1973 = vsel %vm1936, %v1924, %v1179
    %v1974 = vsel %vm1936, %v1925, %v1181
    %v1975 = vsel %vm1936, %v1926, %v1183
    %v1976 = vsel %vm1936, %v1927, %v1185
    %v1977 = vsel %vm1936, %v1928, %v1187
    %v1978 = vsel %vm1936, %v1929, %v1189
    %v1979 = vsel %vm1936, %v1930, %v1191
    %v1980 = vsel %vm1936, %v1931, %v1193
    %v1981 = vsel %vm1936, %v1932, %v1195
    %v1982 = vsel %vm1936, %v1933, %v1197
    %v1983 = vsel %vm1936, %v1934, %v1199
    %v1984 = vsel %vm1936, %v1935, %v1201
    %vm1985 = vcmask 162816
    %v1986 = vsel %vm1985, %v1937, %v1269
    %v1987 = vsel %vm1985, %v1938, %v1271
    %v1988 = vsel %vm1985, %v1939, %v1273
    %v1989 = vsel %vm1985, %v1940, %v1275
    %v1990 = vsel %vm1985, %v1941, %v1277
    %v1991 = vsel %vm1985, %v1942, %v1279
    %v1992 = vsel %vm1985, %v1943, %v1281
    %v1993 = vsel %vm1985, %v1944, %v1283
    %v1994 = vsel %vm1985, %v1945, %v1285
    %v1995 = vsel %vm1985, %v1946, %v1287
    %v1996 = vsel %vm1985, %v1947, %v1289
    %v1997 = vsel %vm1985, %v1948, %v1291
    %v1998 = vsel %vm1985, %v1949, %v1293
    %v1999 = vsel %vm1985, %v1950, %v1295
    %v2000 = vsel %vm1985, %v1951, %v1297
    %v2001 = vsel %vm1985, %v1952, %v1299
    %v2002 = vsel %vm1985, %v1953, %v1301
    %v2003 = vsel %vm1985, %v1954, %v1303
    %v2004 = vsel %vm1985, %v1955, %v1305
    %v2005 = vsel %vm1985, %v1956, %v1307
    %v2006 = vsel %vm1985, %v1957, %v1309
    %v2007 = vsel %vm1985, %v1958, %v1311
    %v2008 = vsel %vm1985, %v1959, %v1313
    %v2009 = vsel %vm1985, %v1960, %v1315
    %v2010 = vsel %vm1985, %v1961, %v1317
    %v2011 = vsel %vm1985, %v1962, %v1319
    %v2012 = vsel %vm1985, %v1963, %v1321
    %v2013 = vsel %vm1985, %v1964, %v1323
    %v2014 = vsel %vm1985, %v1965, %v1325
    %v2015 = vsel %vm1985, %v1966, %v1327
    %v2016 = vsel %vm1985, %v1967, %v1329
    %v2017 = vsel %vm1985, %v1968, %v1331
    %v2018 = vsel %vm1985, %v1969, %v1333
    %v2019 = vsel %vm1985, %v1970, %v1335
    %v2020 = vsel %vm1985, %v1971, %v1337
    %v2021 = vsel %vm1985, %v1972, %v1339
    %v2022 = vsel %vm1985, %v1973, %v1341
    %v2023 = vsel %vm1985, %v1974, %v1343
    %v2024 = vsel %vm1985, %v1975, %v1345
    %v2025 = vsel %vm1985, %v1976, %v1347
    %v2026 = vsel %vm1985, %v1977, %v1349
    %v2027 = vsel %vm1985, %v1978, %v1351
    %v2028 = vsel %vm1985, %v1979, %v1353
    %v2029 = vsel %vm1985, %v1980, %v1355
    %v2030 = vsel %vm1985, %v1981, %v1357
    %v2031 = vsel %vm1985, %v1982, %v1359
    %v2032 = vsel %vm1985, %v1983, %v1361
    %v2033 = vsel %vm1985, %v1984, %v1363
    %vm2034 = vcmask 195584
    %v2035 = vsel %vm2034, %v1986, %v1413
    %v2036 = vsel %vm2034, %v1987, %v1415
    %v2037 = vsel %vm2034, %v1988, %v1417
    %v2038 = vsel %vm2034, %v1989, %v1419
    %v2039 = vsel %vm2034, %v1990, %v1421
    %v2040 = vsel %vm2034, %v1991, %v1423
    %v2041 = vsel %vm2034, %v1992, %v1425
    %v2042 = vsel %vm2034, %v1993, %v1427
    %v2043 = vsel %vm2034, %v1994, %v1429
    %v2044 = vsel %vm2034, %v1995, %v1431
    %v2045 = vsel %vm2034, %v1996, %v1433
    %v2046 = vsel %vm2034, %v1997, %v1435
    %v2047 = vsel %vm2034, %v1998, %v1437
    %v2048 = vsel %vm2034, %v1999, %v1439
    %v2049 = vsel %vm2034, %v2000, %v1441
    %v2050 = vsel %vm2034, %v2001, %v1427
    %v2051 = vsel %vm2034, %v2002, %v1443
    %v2052 = vsel %vm2034, %v2003, %v1445
    %v2053 = vsel %vm2034, %v2004, %v1447
    %v2054 = vsel %vm2034, %v2005, %v1449
    %v2055 = vsel %vm2034, %v2006, %v1451
    %v2056 = vsel %vm2034, %v2007, %v1453
    %v2057 = vsel %vm2034, %v2008, %v1455
    %v2058 = vsel %vm2034, %v2009, %v1427
    %v2059 = vsel %vm2034, %v2010, %v1457
    %v2060 = vsel %vm2034, %v2011, %v1459
    %v2061 = vsel %vm2034, %v2012, %v1461
    %v2062 = vsel %vm2034, %v2013, %v1463
    %v2063 = vsel %vm2034, %v2014, %v1465
    %v2064 = vsel %vm2034, %v2015, %v1467
    %v2065 = vsel %vm2034, %v2016, %v1469
    %v2066 = vsel %vm2034, %v2017, %v1427
    %v2067 = vsel %vm2034, %v2018, %v1471
    %v2068 = vsel %vm2034, %v2019, %v1473
    %v2069 = vsel %vm2034, %v2020, %v1475
    %v2070 = vsel %vm2034, %v2021, %v1477
    %v2071 = vsel %vm2034, %v2022, %v1479
    %v2072 = vsel %vm2034, %v2023, %v1481
    %v2073 = vsel %vm2034, %v2024, %v1483
    %v2074 = vsel %vm2034, %v2025, %v1427
    %v2075 = vsel %vm2034, %v2026, %v1485
    %v2076 = vsel %vm2034, %v2027, %v1487
    %v2077 = vsel %vm2034, %v2028, %v1489
    %v2078 = vsel %vm2034, %v2029, %v1491
    %v2079 = vsel %vm2034, %v2030, %v1493
    %v2080 = vsel %vm2034, %v2031, %v1495
    %v2081 = vsel %vm2034, %v2032, %v1497
    %v2082 = vsel %vm2034, %v2033, %v1427
    %vm2083 = vcmask 228352
    %v2084 = vsel %vm2083, %v2035, %v1542
    %v2085 = vsel %vm2083, %v2036, %v1544
    %v2086 = vsel %vm2083, %v2037, %v1546
    %v2087 = vsel %vm2083, %v2038, %v1548
    %v2088 = vsel %vm2083, %v2039, %v1550
    %v2089 = vsel %vm2083, %v2040, %v1552
    %v2090 = vsel %vm2083, %v2041, %v1554
    %v2091 = vsel %vm2083, %v2042, %v1556
    %v2092 = vsel %vm2083, %v2043, %v1558
    %v2093 = vsel %vm2083, %v2044, %v1560
    %v2094 = vsel %vm2083, %v2045, %v1562
    %v2095 = vsel %vm2083, %v2046, %v1564
    %v2096 = vsel %vm2083, %v2047, %v1566
    %v2097 = vsel %vm2083, %v2048, %v1568
    %v2098 = vsel %vm2083, %v2049, %v1570
    %v2099 = vsel %vm2083, %v2050, %v1556
    %v2100 = vsel %vm2083, %v2051, %v1572
    %v2101 = vsel %vm2083, %v2052, %v1574
    %v2102 = vsel %vm2083, %v2053, %v1576
    %v2103 = vsel %vm2083, %v2054, %v1578
    %v2104 = vsel %vm2083, %v2055, %v1580
    %v2105 = vsel %vm2083, %v2056, %v1582
    %v2106 = vsel %vm2083, %v2057, %v1584
    %v2107 = vsel %vm2083, %v2058, %v1556
    %v2108 = vsel %vm2083, %v2059, %v1586
    %v2109 = vsel %vm2083, %v2060, %v1588
    %v2110 = vsel %vm2083, %v2061, %v1590
    %v2111 = vsel %vm2083, %v2062, %v1592
    %v2112 = vsel %vm2083, %v2063, %v1594
    %v2113 = vsel %vm2083, %v2064, %v1596
    %v2114 = vsel %vm2083, %v2065, %v1598
    %v2115 = vsel %vm2083, %v2066, %v1556
    %v2116 = vsel %vm2083, %v2067, %v1600
    %v2117 = vsel %vm2083, %v2068, %v1602
    %v2118 = vsel %vm2083, %v2069, %v1604
    %v2119 = vsel %vm2083, %v2070, %v1606
    %v2120 = vsel %vm2083, %v2071, %v1608
    %v2121 = vsel %vm2083, %v2072, %v1610
    %v2122 = vsel %vm2083, %v2073, %v1612
    %v2123 = vsel %vm2083, %v2074, %v1556
    %v2124 = vsel %vm2083, %v2075, %v1614
    %v2125 = vsel %vm2083, %v2076, %v1616
    %v2126 = vsel %vm2083, %v2077, %v1618
    %v2127 = vsel %vm2083, %v2078, %v1620
    %v2128 = vsel %vm2083, %v2079, %v1622
    %v2129 = vsel %vm2083, %v2080, %v1624
    %v2130 = vsel %vm2083, %v2081, %v1626
    %v2131 = vsel %vm2083, %v2082, %v1556
    %vm2132 = vcmask 261120
    %v2133 = vsel %vm2132, %v2084, %v1671
    %v2134 = vsel %vm2132, %v2085, %v1673
    %v2135 = vsel %vm2132, %v2086, %v1675
    %v2136 = vsel %vm2132, %v2087, %v1677
    %v2137 = vsel %vm2132, %v2088, %v1679
    %v2138 = vsel %vm2132, %v2089, %v1681
    %v2139 = vsel %vm2132, %v2090, %v1683
    %v2140 = vsel %vm2132, %v2091, %v1685
    %v2141 = vsel %vm2132, %v2092, %v1687
    %v2142 = vsel %vm2132, %v2093, %v1689
    %v2143 = vsel %vm2132, %v2094, %v1691
    %v2144 = vsel %vm2132, %v2095, %v1693
    %v2145 = vsel %vm2132, %v2096, %v1695
    %v2146 = vsel %vm2132, %v2097, %v1697
    %v2147 = vsel %vm2132, %v2098, %v1699
    %v2148 = vsel %vm2132, %v2099, %v1685
    %v2149 = vsel %vm2132, %v2100, %v1701
    %v2150 = vsel %vm2132, %v2101, %v1703
    %v2151 = vsel %vm2132, %v2102, %v1705
    %v2152 = vsel %vm2132, %v2103, %v1707
    %v2153 = vsel %vm2132, %v2104, %v1709
    %v2154 = vsel %vm2132, %v2105, %v1711
    %v2155 = vsel %vm2132, %v2106, %v1713
    %v2156 = vsel %vm2132, %v2107, %v1685
    %v2157 = vsel %vm2132, %v2108, %v1715
    %v2158 = vsel %vm2132, %v2109, %v1717
    %v2159 = vsel %vm2132, %v2110, %v1719
    %v2160 = vsel %vm2132, %v2111, %v1721
    %v2161 = vsel %vm2132, %v2112, %v1723
    %v2162 = vsel %vm2132, %v2113, %v1725
    %v2163 = vsel %vm2132, %v2114, %v1727
    %v2164 = vsel %vm2132, %v2115, %v1685
    %v2165 = vsel %vm2132, %v2116, %v1729
    %v2166 = vsel %vm2132, %v2117, %v1731
    %v2167 = vsel %vm2132, %v2118, %v1733
    %v2168 = vsel %vm2132, %v2119, %v1735
    %v2169 = vsel %vm2132, %v2120, %v1737
    %v2170 = vsel %vm2132, %v2121, %v1739
    %v2171 = vsel %vm2132, %v2122, %v1741
    %v2172 = vsel %vm2132, %v2123, %v1685
    %v2173 = vsel %vm2132, %v2124, %v1743
    %v2174 = vsel %vm2132, %v2125, %v1745
    %v2175 = vsel %vm2132, %v2126, %v1747
    %v2176 = vsel %vm2132, %v2127, %v1749
    %v2177 = vsel %vm2132, %v2128, %v1751
    %v2178 = vsel %vm2132, %v2129, %v1753
    %v2179 = vsel %vm2132, %v2130, %v1755
    %v2180 = vsel %vm2132, %v2131, %v1685
    %v2181 = vpack.c.bf16 %v2134, %v2133
    %v2182 = vpack.c.bf16 %v2136, %v2135
    %v2183 = vpack.c.bf16 %v2138, %v2137
    %v2184 = vpack.c.bf16 %v2140, %v2139
    %v2185 = vpack.c.bf16 %v2142, %v2141
    %v2186 = vpack.c.bf16 %v2144, %v2143
    %v2187 = vpack.c.bf16 %v2146, %v2145
    %v2188 = vpack.c.bf16 %v2148, %v2147
    %v2189 = vpack.c.bf16 %v2150, %v2149
    %v2190 = vpack.c.bf16 %v2152, %v2151
    %v2191 = vpack.c.bf16 %v2154, %v2153
    %v2192 = vpack.c.bf16 %v2156, %v2155
    %v2193 = vpack.c.bf16 %v2158, %v2157
    %v2194 = vpack.c.bf16 %v2160, %v2159
    %v2195 = vpack.c.bf16 %v2162, %v2161
    %v2196 = vpack.c.bf16 %v2164, %v2163
    %v2197 = vpack.c.bf16 %v2166, %v2165
    %v2198 = vpack.c.bf16 %v2168, %v2167
    %v2199 = vpack.c.bf16 %v2170, %v2169
    %v2200 = vpack.c.bf16 %v2172, %v2171
    %v2201 = vpack.c.bf16 %v2174, %v2173
    %v2202 = vpack.c.bf16 %v2176, %v2175
    %v2203 = vpack.c.bf16 %v2178, %v2177
    %v2204 = vpack.c.bf16 %v2180, %v2179
    %v2205 = vld [vmem:[%s1] sm:$0xf]
    %v2206 = vld [vmem:[%s1 + $0x4] sm:$0xf]
    %v2207 = vld [vmem:[%s1 + $0x8] sm:$0xf]
    %v2208 = vld [vmem:[%s1 + $0xc] sm:$0xf]
    %v2209 = vld [vmem:[%s1 + $0x10] sm:$0x3]
    %v2210 = vld [vmem:[%s2] sm:$0x1]
    %v2212 = vperm.slane %v2210, 0
    %v2219 = vunpack.c.l.b16 %v2205
    %v2220 = vunpack.c.l.b16 %v2206
    %v2221 = vunpack.c.l.b16 %v2207
    %v2222 = vunpack.c.l.b16 %v2208
    %v2223 = vunpack.c.l.b16 %v2209
    %v2224 = vpack.c.b16 %v2220, %v2219
    %v2225 = vpack.c.b16 %v2222, %v2221
    %v2226 = vpack.c.b16 %v2223, %v2223
    %vm2229 = vcmask 293888
    %v2231 = vsel %vm2229, %v2181, 0
    %v2234 = vsel %vm2229, %v2182, 0
    %v2237 = vsel %vm2229, %v2183, 0
    %v2240 = vsel %vm2229, %v2184, 0
    %v2243 = vsel %vm2229, %v2185, 0
    %v2246 = vsel %vm2229, %v2186, 0
    %v2249 = vsel %vm2229, %v2187, 0
    %v2252 = vsel %vm2229, %v2188, 0
    %v2255 = vsel %vm2229, %v2189, 0
    %v2258 = vsel %vm2229, %v2190, 0
    %v2261 = vsel %vm2229, %v2191, 0
    %v2264 = vsel %vm2229, %v2192, 0
    %v2267 = vsel %vm2229, %v2193, 0
    %v2270 = vsel %vm2229, %v2194, 0
    %v2273 = vsel %vm2229, %v2195, 0
    %v2276 = vsel %vm2229, %v2196, 0
    %v2279 = vsel %vm2229, %v2197, 0
    %v2282 = vsel %vm2229, %v2198, 0
    %v2285 = vsel %vm2229, %v2199, 0
    %v2288 = vsel %vm2229, %v2200, 0
    %v2291 = vsel %vm2229, %v2201, 0
    %v2294 = vsel %vm2229, %v2202, 0
    %v2297 = vsel %vm2229, %v2203, 0
    %v2300 = vsel %vm2229, %v2204, 0
    %vm2302 = vcmask 1041408
    %v2304 = vsel %vm2302, %v2226, 0
    %2306 = vmatpush.bf16.msra.mxu0 0
    %2307 = vmatpush.bf16.msra.mxu0 0
    %2308 = vmatpush.bf16.msra.mxu0 0
    %2309 = vmatpush.bf16.msra.mxu0 0
    %2310 = vmatpush.bf16.msra.mxu0 0
    %2311 = vmatpush.bf16.msra.mxu0 %v2304
    %2312 = vmatpush.bf16.msra.mxu0 %v2225
    %2313 = vmatpush.bf16.msra.mxu0 %v2224
    %2314 = vmatmul.bf16.gmra.mxu0 %v2231
    %v2315 = vpop.f32.mrf.mxu0
    %v2316 = vadd.f32 %v2212, %v2315
    %v2317 = vpop.f32.mrf.mxu0
    %v2318 = vadd.f32 %v2212, %v2317
    %2319 = vmatmul.bf16.gmra.mxu0 %v2234
    %v2320 = vpop.f32.mrf.mxu0
    %v2321 = vadd.f32 %v2212, %v2320
    %v2322 = vpop.f32.mrf.mxu0
    %v2323 = vadd.f32 %v2212, %v2322
    %2324 = vmatmul.bf16.gmra.mxu0 %v2237
    %v2325 = vpop.f32.mrf.mxu0
    %v2326 = vadd.f32 %v2212, %v2325
    %v2327 = vpop.f32.mrf.mxu0
    %v2328 = vadd.f32 %v2212, %v2327
    %2329 = vmatmul.bf16.gmra.mxu0 %v2240
    %v2330 = vpop.f32.mrf.mxu0
    %v2331 = vadd.f32 %v2212, %v2330
    %v2332 = vpop.f32.mrf.mxu0
    %v2333 = vadd.f32 %v2212, %v2332
    %2334 = vmatmul.bf16.gmra.mxu0 %v2243
    %v2335 = vpop.f32.mrf.mxu0
    %v2336 = vadd.f32 %v2212, %v2335
    %v2337 = vpop.f32.mrf.mxu0
    %v2338 = vadd.f32 %v2212, %v2337
    %2339 = vmatmul.bf16.gmra.mxu0 %v2246
    %v2340 = vpop.f32.mrf.mxu0
    %v2341 = vadd.f32 %v2212, %v2340
    %v2342 = vpop.f32.mrf.mxu0
    %v2343 = vadd.f32 %v2212, %v2342
    %2344 = vmatmul.bf16.gmra.mxu0 %v2249
    %v2345 = vpop.f32.mrf.mxu0
    %v2346 = vadd.f32 %v2212, %v2345
    %v2347 = vpop.f32.mrf.mxu0
    %v2348 = vadd.f32 %v2212, %v2347
    %2349 = vmatmul.bf16.gmra.mxu0 %v2252
    %v2350 = vpop.f32.mrf.mxu0
    %v2351 = vadd.f32 %v2212, %v2350
    %v2352 = vpop.f32.mrf.mxu0
    %v2353 = vadd.f32 %v2212, %v2352
    %2354 = vmatmul.bf16.gmra.mxu0 %v2255
    %v2355 = vpop.f32.mrf.mxu0
    %v2356 = vadd.f32 %v2212, %v2355
    %v2357 = vpop.f32.mrf.mxu0
    %v2358 = vadd.f32 %v2212, %v2357
    %2359 = vmatmul.bf16.gmra.mxu0 %v2258
    %v2360 = vpop.f32.mrf.mxu0
    %v2361 = vadd.f32 %v2212, %v2360
    %v2362 = vpop.f32.mrf.mxu0
    %v2363 = vadd.f32 %v2212, %v2362
    %2364 = vmatmul.bf16.gmra.mxu0 %v2261
    %v2365 = vpop.f32.mrf.mxu0
    %v2366 = vadd.f32 %v2212, %v2365
    %v2367 = vpop.f32.mrf.mxu0
    %v2368 = vadd.f32 %v2212, %v2367
    %2369 = vmatmul.bf16.gmra.mxu0 %v2264
    %v2370 = vpop.f32.mrf.mxu0
    %v2371 = vadd.f32 %v2212, %v2370
    %v2372 = vpop.f32.mrf.mxu0
    %v2373 = vadd.f32 %v2212, %v2372
    %2374 = vmatmul.bf16.gmra.mxu0 %v2267
    %v2375 = vpop.f32.mrf.mxu0
    %v2376 = vadd.f32 %v2212, %v2375
    %v2377 = vpop.f32.mrf.mxu0
    %v2378 = vadd.f32 %v2212, %v2377
    %2379 = vmatmul.bf16.gmra.mxu0 %v2270
    %v2380 = vpop.f32.mrf.mxu0
    %v2381 = vadd.f32 %v2212, %v2380
    %v2382 = vpop.f32.mrf.mxu0
    %v2383 = vadd.f32 %v2212, %v2382
    %2384 = vmatmul.bf16.gmra.mxu0 %v2273
    %v2385 = vpop.f32.mrf.mxu0
    %v2386 = vadd.f32 %v2212, %v2385
    %v2387 = vpop.f32.mrf.mxu0
    %v2388 = vadd.f32 %v2212, %v2387
    %2389 = vmatmul.bf16.gmra.mxu0 %v2276
    %v2390 = vpop.f32.mrf.mxu0
    %v2391 = vadd.f32 %v2212, %v2390
    %v2392 = vpop.f32.mrf.mxu0
    %v2393 = vadd.f32 %v2212, %v2392
    %2394 = vmatmul.bf16.gmra.mxu0 %v2279
    %v2395 = vpop.f32.mrf.mxu0
    %v2396 = vadd.f32 %v2212, %v2395
    %v2397 = vpop.f32.mrf.mxu0
    %v2398 = vadd.f32 %v2212, %v2397
    %2399 = vmatmul.bf16.gmra.mxu0 %v2282
    %v2400 = vpop.f32.mrf.mxu0
    %v2401 = vadd.f32 %v2212, %v2400
    %v2402 = vpop.f32.mrf.mxu0
    %v2403 = vadd.f32 %v2212, %v2402
    %2404 = vmatmul.bf16.gmra.mxu0 %v2285
    %v2405 = vpop.f32.mrf.mxu0
    %v2406 = vadd.f32 %v2212, %v2405
    %v2407 = vpop.f32.mrf.mxu0
    %v2408 = vadd.f32 %v2212, %v2407
    %2409 = vmatmul.bf16.gmra.mxu0 %v2288
    %v2410 = vpop.f32.mrf.mxu0
    %v2411 = vadd.f32 %v2212, %v2410
    %v2412 = vpop.f32.mrf.mxu0
    %v2413 = vadd.f32 %v2212, %v2412
    %2414 = vmatmul.bf16.gmra.mxu0 %v2291
    %v2415 = vpop.f32.mrf.mxu0
    %v2416 = vadd.f32 %v2212, %v2415
    %v2417 = vpop.f32.mrf.mxu0
    %v2418 = vadd.f32 %v2212, %v2417
    %2419 = vmatmul.bf16.gmra.mxu0 %v2294
    %v2420 = vpop.f32.mrf.mxu0
    %v2421 = vadd.f32 %v2212, %v2420
    %v2422 = vpop.f32.mrf.mxu0
    %v2423 = vadd.f32 %v2212, %v2422
    %2424 = vmatmul.bf16.gmra.mxu0 %v2297
    %v2425 = vpop.f32.mrf.mxu0
    %v2426 = vadd.f32 %v2212, %v2425
    %v2427 = vpop.f32.mrf.mxu0
    %v2428 = vadd.f32 %v2212, %v2427
    %2429 = vmatmul.bf16.gmra.mxu0 %v2300
    %v2430 = vpop.f32.mrf.mxu0
    %v2431 = vadd.f32 %v2212, %v2430
    %v2432 = vpop.f32.mrf.mxu0
    %v2433 = vadd.f32 %v2212, %v2432
    %2434 = vdwg.mxu0
    %v2483 = vrot.slane %v2316, 2
    %v2484 = vrot.slane %v2316, 4
    %v2485 = vrot.slane %v2316, 6
    %v2486 = vrot.slane %v2318, 2
    %v2487 = vrot.slane %v2318, 4
    %v2488 = vrot.slane %v2318, 6
    %v2489 = vrot.slane %v2321, 2
    %v2490 = vrot.slane %v2321, 4
    %v2491 = vrot.slane %v2321, 6
    %v2492 = vrot.slane %v2323, 2
    %v2493 = vrot.slane %v2323, 4
    %v2494 = vrot.slane %v2323, 6
    %v2495 = vrot.slane %v2326, 2
    %v2496 = vrot.slane %v2326, 4
    %v2497 = vrot.slane %v2326, 6
    %v2498 = vrot.slane %v2328, 2
    %v2499 = vrot.slane %v2328, 4
    %v2500 = vrot.slane %v2328, 6
    %v2501 = vrot.slane %v2331, 2
    %v2502 = vrot.slane %v2331, 4
    %v2503 = vrot.slane %v2331, 6
    %v2504 = vrot.slane %v2333, 2
    %v2505 = vrot.slane %v2333, 4
    %v2506 = vrot.slane %v2333, 6
    %v2507 = vrot.slane %v2336, 2
    %v2508 = vrot.slane %v2336, 4
    %v2509 = vrot.slane %v2336, 6
    %v2510 = vrot.slane %v2338, 2
    %v2511 = vrot.slane %v2338, 4
    %v2512 = vrot.slane %v2338, 6
    %v2513 = vrot.slane %v2341, 2
    %v2514 = vrot.slane %v2341, 4
    %v2515 = vrot.slane %v2341, 6
    %v2516 = vrot.slane %v2343, 2
    %v2517 = vrot.slane %v2343, 4
    %v2518 = vrot.slane %v2343, 6
    %v2519 = vrot.slane %v2346, 2
    %v2520 = vrot.slane %v2346, 4
    %v2521 = vrot.slane %v2346, 6
    %v2522 = vrot.slane %v2348, 2
    %v2523 = vrot.slane %v2348, 4
    %v2524 = vrot.slane %v2348, 6
    %v2525 = vrot.slane %v2351, 2
    %v2526 = vrot.slane %v2351, 4
    %v2527 = vrot.slane %v2351, 6
    %v2528 = vrot.slane %v2353, 2
    %v2529 = vrot.slane %v2353, 4
    %v2530 = vrot.slane %v2353, 6
    %v2531 = vrot.slane %v2356, 2
    %v2532 = vrot.slane %v2356, 4
    %v2533 = vrot.slane %v2356, 6
    %v2534 = vrot.slane %v2358, 2
    %v2535 = vrot.slane %v2358, 4
    %v2536 = vrot.slane %v2358, 6
    %v2537 = vrot.slane %v2361, 2
    %v2538 = vrot.slane %v2361, 4
    %v2539 = vrot.slane %v2361, 6
    %v2540 = vrot.slane %v2363, 2
    %v2541 = vrot.slane %v2363, 4
    %v2542 = vrot.slane %v2363, 6
    %v2543 = vrot.slane %v2366, 2
    %v2544 = vrot.slane %v2366, 4
    %v2545 = vrot.slane %v2366, 6
    %v2546 = vrot.slane %v2368, 2
    %v2547 = vrot.slane %v2368, 4
    %v2548 = vrot.slane %v2368, 6
    %v2549 = vrot.slane %v2371, 2
    %v2550 = vrot.slane %v2371, 4
    %v2551 = vrot.slane %v2371, 6
    %v2552 = vrot.slane %v2373, 2
    %v2553 = vrot.slane %v2373, 4
    %v2554 = vrot.slane %v2373, 6
    %v2555 = vrot.slane %v2376, 2
    %v2556 = vrot.slane %v2376, 4
    %v2557 = vrot.slane %v2376, 6
    %v2558 = vrot.slane %v2378, 2
    %v2559 = vrot.slane %v2378, 4
    %v2560 = vrot.slane %v2378, 6
    %v2561 = vrot.slane %v2381, 2
    %v2562 = vrot.slane %v2381, 4
    %v2563 = vrot.slane %v2381, 6
    %v2564 = vrot.slane %v2383, 2
    %v2565 = vrot.slane %v2383, 4
    %v2566 = vrot.slane %v2383, 6
    %v2567 = vrot.slane %v2386, 2
    %v2568 = vrot.slane %v2386, 4
    %v2569 = vrot.slane %v2386, 6
    %v2570 = vrot.slane %v2388, 2
    %v2571 = vrot.slane %v2388, 4
    %v2572 = vrot.slane %v2388, 6
    %v2573 = vrot.slane %v2391, 2
    %v2574 = vrot.slane %v2391, 4
    %v2575 = vrot.slane %v2391, 6
    %v2576 = vrot.slane %v2393, 2
    %v2577 = vrot.slane %v2393, 4
    %v2578 = vrot.slane %v2393, 6
    %v2579 = vrot.slane %v2396, 2
    %v2580 = vrot.slane %v2396, 4
    %v2581 = vrot.slane %v2396, 6
    %v2582 = vrot.slane %v2398, 2
    %v2583 = vrot.slane %v2398, 4
    %v2584 = vrot.slane %v2398, 6
    %v2585 = vrot.slane %v2401, 2
    %v2586 = vrot.slane %v2401, 4
    %v2587 = vrot.slane %v2401, 6
    %v2588 = vrot.slane %v2403, 2
    %v2589 = vrot.slane %v2403, 4
    %v2590 = vrot.slane %v2403, 6
    %v2591 = vrot.slane %v2406, 2
    %v2592 = vrot.slane %v2406, 4
    %v2593 = vrot.slane %v2406, 6
    %v2594 = vrot.slane %v2408, 2
    %v2595 = vrot.slane %v2408, 4
    %v2596 = vrot.slane %v2408, 6
    %v2597 = vrot.slane %v2411, 2
    %v2598 = vrot.slane %v2411, 4
    %v2599 = vrot.slane %v2411, 6
    %v2600 = vrot.slane %v2413, 2
    %v2601 = vrot.slane %v2413, 4
    %v2602 = vrot.slane %v2413, 6
    %v2603 = vrot.slane %v2416, 2
    %v2604 = vrot.slane %v2416, 4
    %v2605 = vrot.slane %v2416, 6
    %v2606 = vrot.slane %v2418, 2
    %v2607 = vrot.slane %v2418, 4
    %v2608 = vrot.slane %v2418, 6
    %v2609 = vrot.slane %v2421, 2
    %v2610 = vrot.slane %v2421, 4
    %v2611 = vrot.slane %v2421, 6
    %v2612 = vrot.slane %v2423, 2
    %v2613 = vrot.slane %v2423, 4
    %v2614 = vrot.slane %v2423, 6
    %v2615 = vrot.slane %v2426, 2
    %v2616 = vrot.slane %v2426, 4
    %v2617 = vrot.slane %v2426, 6
    %v2618 = vrot.slane %v2428, 2
    %v2619 = vrot.slane %v2428, 4
    %v2620 = vrot.slane %v2428, 6
    %v2621 = vrot.slane %v2431, 2
    %v2622 = vrot.slane %v2431, 4
    %v2623 = vrot.slane %v2431, 6
    %v2624 = vrot.slane %v2433, 2
    %v2625 = vrot.slane %v2433, 4
    %v2626 = vrot.slane %v2433, 6
    %vm2771 = vcmask 254976
    %v2772 = vsel %vm2771, %v2316, -inf
    %v2773 = vrot.slane %v2772, 4
    %v2774 = vmax.f32 %v2772, %v2773
    %v2775 = vrot.slane %v2774, 2
    %v2776 = vmax.f32 %v2774, %v2775
    %v2777 = vrot.slane %v2776, 1
    %v2778 = vmax.f32 %v2776, %v2777
    %v2779 = vsel %vm2771, %v2483, -inf
    %v2780 = vrot.slane %v2779, 4
    %v2781 = vmax.f32 %v2779, %v2780
    %v2782 = vrot.slane %v2781, 2
    %v2783 = vmax.f32 %v2781, %v2782
    %v2784 = vrot.slane %v2783, 1
    %v2785 = vmax.f32 %v2783, %v2784
    %v2786 = vsel %vm2771, %v2484, -inf
    %v2787 = vrot.slane %v2786, 4
    %v2788 = vmax.f32 %v2786, %v2787
    %v2789 = vrot.slane %v2788, 2
    %v2790 = vmax.f32 %v2788, %v2789
    %v2791 = vrot.slane %v2790, 1
    %v2792 = vmax.f32 %v2790, %v2791
    %v2793 = vsel %vm2771, %v2485, -inf
    %v2794 = vrot.slane %v2793, 4
    %v2795 = vmax.f32 %v2793, %v2794
    %v2796 = vrot.slane %v2795, 2
    %v2797 = vmax.f32 %v2795, %v2796
    %v2798 = vrot.slane %v2797, 1
    %v2799 = vmax.f32 %v2797, %v2798
    %v2800 = vsel %vm2771, %v2318, -inf
    %v2801 = vrot.slane %v2800, 4
    %v2802 = vmax.f32 %v2800, %v2801
    %v2803 = vrot.slane %v2802, 2
    %v2804 = vmax.f32 %v2802, %v2803
    %v2805 = vrot.slane %v2804, 1
    %v2806 = vmax.f32 %v2804, %v2805
    %v2807 = vsel %vm2771, %v2486, -inf
    %v2808 = vrot.slane %v2807, 4
    %v2809 = vmax.f32 %v2807, %v2808
    %v2810 = vrot.slane %v2809, 2
    %v2811 = vmax.f32 %v2809, %v2810
    %v2812 = vrot.slane %v2811, 1
    %v2813 = vmax.f32 %v2811, %v2812
    %v2814 = vsel %vm2771, %v2487, -inf
    %v2815 = vrot.slane %v2814, 4
    %v2816 = vmax.f32 %v2814, %v2815
    %v2817 = vrot.slane %v2816, 2
    %v2818 = vmax.f32 %v2816, %v2817
    %v2819 = vrot.slane %v2818, 1
    %v2820 = vmax.f32 %v2818, %v2819
    %v2821 = vsel %vm2771, %v2488, -inf
    %v2822 = vrot.slane %v2821, 4
    %v2823 = vmax.f32 %v2821, %v2822
    %v2824 = vrot.slane %v2823, 2
    %v2825 = vmax.f32 %v2823, %v2824
    %v2826 = vrot.slane %v2825, 1
    %v2827 = vmax.f32 %v2825, %v2826
    %v2828 = vsel %vm2771, %v2321, -inf
    %v2829 = vrot.slane %v2828, 4
    %v2830 = vmax.f32 %v2828, %v2829
    %v2831 = vrot.slane %v2830, 2
    %v2832 = vmax.f32 %v2830, %v2831
    %v2833 = vrot.slane %v2832, 1
    %v2834 = vmax.f32 %v2832, %v2833
    %v2835 = vsel %vm2771, %v2489, -inf
    %v2836 = vrot.slane %v2835, 4
    %v2837 = vmax.f32 %v2835, %v2836
    %v2838 = vrot.slane %v2837, 2
    %v2839 = vmax.f32 %v2837, %v2838
    %v2840 = vrot.slane %v2839, 1
    %v2841 = vmax.f32 %v2839, %v2840
    %v2842 = vsel %vm2771, %v2490, -inf
    %v2843 = vrot.slane %v2842, 4
    %v2844 = vmax.f32 %v2842, %v2843
    %v2845 = vrot.slane %v2844, 2
    %v2846 = vmax.f32 %v2844, %v2845
    %v2847 = vrot.slane %v2846, 1
    %v2848 = vmax.f32 %v2846, %v2847
    %v2849 = vsel %vm2771, %v2491, -inf
    %v2850 = vrot.slane %v2849, 4
    %v2851 = vmax.f32 %v2849, %v2850
    %v2852 = vrot.slane %v2851, 2
    %v2853 = vmax.f32 %v2851, %v2852
    %v2854 = vrot.slane %v2853, 1
    %v2855 = vmax.f32 %v2853, %v2854
    %v2856 = vsel %vm2771, %v2323, -inf
    %v2857 = vrot.slane %v2856, 4
    %v2858 = vmax.f32 %v2856, %v2857
    %v2859 = vrot.slane %v2858, 2
    %v2860 = vmax.f32 %v2858, %v2859
    %v2861 = vrot.slane %v2860, 1
    %v2862 = vmax.f32 %v2860, %v2861
    %v2863 = vsel %vm2771, %v2492, -inf
    %v2864 = vrot.slane %v2863, 4
    %v2865 = vmax.f32 %v2863, %v2864
    %v2866 = vrot.slane %v2865, 2
    %v2867 = vmax.f32 %v2865, %v2866
    %v2868 = vrot.slane %v2867, 1
    %v2869 = vmax.f32 %v2867, %v2868
    %v2870 = vsel %vm2771, %v2493, -inf
    %v2871 = vrot.slane %v2870, 4
    %v2872 = vmax.f32 %v2870, %v2871
    %v2873 = vrot.slane %v2872, 2
    %v2874 = vmax.f32 %v2872, %v2873
    %v2875 = vrot.slane %v2874, 1
    %v2876 = vmax.f32 %v2874, %v2875
    %v2877 = vsel %vm2771, %v2494, -inf
    %v2878 = vrot.slane %v2877, 4
    %v2879 = vmax.f32 %v2877, %v2878
    %v2880 = vrot.slane %v2879, 2
    %v2881 = vmax.f32 %v2879, %v2880
    %v2882 = vrot.slane %v2881, 1
    %v2883 = vmax.f32 %v2881, %v2882
    %v2884 = vsel %vm2771, %v2326, -inf
    %v2885 = vrot.slane %v2884, 4
    %v2886 = vmax.f32 %v2884, %v2885
    %v2887 = vrot.slane %v2886, 2
    %v2888 = vmax.f32 %v2886, %v2887
    %v2889 = vrot.slane %v2888, 1
    %v2890 = vmax.f32 %v2888, %v2889
    %v2891 = vsel %vm2771, %v2495, -inf
    %v2892 = vrot.slane %v2891, 4
    %v2893 = vmax.f32 %v2891, %v2892
    %v2894 = vrot.slane %v2893, 2
    %v2895 = vmax.f32 %v2893, %v2894
    %v2896 = vrot.slane %v2895, 1
    %v2897 = vmax.f32 %v2895, %v2896
    %v2898 = vsel %vm2771, %v2496, -inf
    %v2899 = vrot.slane %v2898, 4
    %v2900 = vmax.f32 %v2898, %v2899
    %v2901 = vrot.slane %v2900, 2
    %v2902 = vmax.f32 %v2900, %v2901
    %v2903 = vrot.slane %v2902, 1
    %v2904 = vmax.f32 %v2902, %v2903
    %v2905 = vsel %vm2771, %v2497, -inf
    %v2906 = vrot.slane %v2905, 4
    %v2907 = vmax.f32 %v2905, %v2906
    %v2908 = vrot.slane %v2907, 2
    %v2909 = vmax.f32 %v2907, %v2908
    %v2910 = vrot.slane %v2909, 1
    %v2911 = vmax.f32 %v2909, %v2910
    %v2912 = vsel %vm2771, %v2328, -inf
    %v2913 = vrot.slane %v2912, 4
    %v2914 = vmax.f32 %v2912, %v2913
    %v2915 = vrot.slane %v2914, 2
    %v2916 = vmax.f32 %v2914, %v2915
    %v2917 = vrot.slane %v2916, 1
    %v2918 = vmax.f32 %v2916, %v2917
    %v2919 = vsel %vm2771, %v2498, -inf
    %v2920 = vrot.slane %v2919, 4
    %v2921 = vmax.f32 %v2919, %v2920
    %v2922 = vrot.slane %v2921, 2
    %v2923 = vmax.f32 %v2921, %v2922
    %v2924 = vrot.slane %v2923, 1
    %v2925 = vmax.f32 %v2923, %v2924
    %v2926 = vsel %vm2771, %v2499, -inf
    %v2927 = vrot.slane %v2926, 4
    %v2928 = vmax.f32 %v2926, %v2927
    %v2929 = vrot.slane %v2928, 2
    %v2930 = vmax.f32 %v2928, %v2929
    %v2931 = vrot.slane %v2930, 1
    %v2932 = vmax.f32 %v2930, %v2931
    %v2933 = vsel %vm2771, %v2500, -inf
    %v2934 = vrot.slane %v2933, 4
    %v2935 = vmax.f32 %v2933, %v2934
    %v2936 = vrot.slane %v2935, 2
    %v2937 = vmax.f32 %v2935, %v2936
    %v2938 = vrot.slane %v2937, 1
    %v2939 = vmax.f32 %v2937, %v2938
    %v2940 = vsel %vm2771, %v2331, -inf
    %v2941 = vrot.slane %v2940, 4
    %v2942 = vmax.f32 %v2940, %v2941
    %v2943 = vrot.slane %v2942, 2
    %v2944 = vmax.f32 %v2942, %v2943
    %v2945 = vrot.slane %v2944, 1
    %v2946 = vmax.f32 %v2944, %v2945
    %v2947 = vsel %vm2771, %v2501, -inf
    %v2948 = vrot.slane %v2947, 4
    %v2949 = vmax.f32 %v2947, %v2948
    %v2950 = vrot.slane %v2949, 2
    %v2951 = vmax.f32 %v2949, %v2950
    %v2952 = vrot.slane %v2951, 1
    %v2953 = vmax.f32 %v2951, %v2952
    %v2954 = vsel %vm2771, %v2502, -inf
    %v2955 = vrot.slane %v2954, 4
    %v2956 = vmax.f32 %v2954, %v2955
    %v2957 = vrot.slane %v2956, 2
    %v2958 = vmax.f32 %v2956, %v2957
    %v2959 = vrot.slane %v2958, 1
    %v2960 = vmax.f32 %v2958, %v2959
    %v2961 = vsel %vm2771, %v2503, -inf
    %v2962 = vrot.slane %v2961, 4
    %v2963 = vmax.f32 %v2961, %v2962
    %v2964 = vrot.slane %v2963, 2
    %v2965 = vmax.f32 %v2963, %v2964
    %v2966 = vrot.slane %v2965, 1
    %v2967 = vmax.f32 %v2965, %v2966
    %v2968 = vsel %vm2771, %v2333, -inf
    %v2969 = vrot.slane %v2968, 4
    %v2970 = vmax.f32 %v2968, %v2969
    %v2971 = vrot.slane %v2970, 2
    %v2972 = vmax.f32 %v2970, %v2971
    %v2973 = vrot.slane %v2972, 1
    %v2974 = vmax.f32 %v2972, %v2973
    %v2975 = vsel %vm2771, %v2504, -inf
    %v2976 = vrot.slane %v2975, 4
    %v2977 = vmax.f32 %v2975, %v2976
    %v2978 = vrot.slane %v2977, 2
    %v2979 = vmax.f32 %v2977, %v2978
    %v2980 = vrot.slane %v2979, 1
    %v2981 = vmax.f32 %v2979, %v2980
    %v2982 = vsel %vm2771, %v2505, -inf
    %v2983 = vrot.slane %v2982, 4
    %v2984 = vmax.f32 %v2982, %v2983
    %v2985 = vrot.slane %v2984, 2
    %v2986 = vmax.f32 %v2984, %v2985
    %v2987 = vrot.slane %v2986, 1
    %v2988 = vmax.f32 %v2986, %v2987
    %v2989 = vsel %vm2771, %v2506, -inf
    %v2990 = vrot.slane %v2989, 4
    %v2991 = vmax.f32 %v2989, %v2990
    %v2992 = vrot.slane %v2991, 2
    %v2993 = vmax.f32 %v2991, %v2992
    %v2994 = vrot.slane %v2993, 1
    %v2995 = vmax.f32 %v2993, %v2994
    %v2996 = vsel %vm2771, %v2336, -inf
    %v2997 = vrot.slane %v2996, 4
    %v2998 = vmax.f32 %v2996, %v2997
    %v2999 = vrot.slane %v2998, 2
    %v3000 = vmax.f32 %v2998, %v2999
    %v3001 = vrot.slane %v3000, 1
    %v3002 = vmax.f32 %v3000, %v3001
    %v3003 = vsel %vm2771, %v2507, -inf
    %v3004 = vrot.slane %v3003, 4
    %v3005 = vmax.f32 %v3003, %v3004
    %v3006 = vrot.slane %v3005, 2
    %v3007 = vmax.f32 %v3005, %v3006
    %v3008 = vrot.slane %v3007, 1
    %v3009 = vmax.f32 %v3007, %v3008
    %v3010 = vsel %vm2771, %v2508, -inf
    %v3011 = vrot.slane %v3010, 4
    %v3012 = vmax.f32 %v3010, %v3011
    %v3013 = vrot.slane %v3012, 2
    %v3014 = vmax.f32 %v3012, %v3013
    %v3015 = vrot.slane %v3014, 1
    %v3016 = vmax.f32 %v3014, %v3015
    %v3017 = vsel %vm2771, %v2509, -inf
    %v3018 = vrot.slane %v3017, 4
    %v3019 = vmax.f32 %v3017, %v3018
    %v3020 = vrot.slane %v3019, 2
    %v3021 = vmax.f32 %v3019, %v3020
    %v3022 = vrot.slane %v3021, 1
    %v3023 = vmax.f32 %v3021, %v3022
    %v3024 = vsel %vm2771, %v2338, -inf
    %v3025 = vrot.slane %v3024, 4
    %v3026 = vmax.f32 %v3024, %v3025
    %v3027 = vrot.slane %v3026, 2
    %v3028 = vmax.f32 %v3026, %v3027
    %v3029 = vrot.slane %v3028, 1
    %v3030 = vmax.f32 %v3028, %v3029
    %v3031 = vsel %vm2771, %v2510, -inf
    %v3032 = vrot.slane %v3031, 4
    %v3033 = vmax.f32 %v3031, %v3032
    %v3034 = vrot.slane %v3033, 2
    %v3035 = vmax.f32 %v3033, %v3034
    %v3036 = vrot.slane %v3035, 1
    %v3037 = vmax.f32 %v3035, %v3036
    %v3038 = vsel %vm2771, %v2511, -inf
    %v3039 = vrot.slane %v3038, 4
    %v3040 = vmax.f32 %v3038, %v3039
    %v3041 = vrot.slane %v3040, 2
    %v3042 = vmax.f32 %v3040, %v3041
    %v3043 = vrot.slane %v3042, 1
    %v3044 = vmax.f32 %v3042, %v3043
    %v3045 = vsel %vm2771, %v2512, -inf
    %v3046 = vrot.slane %v3045, 4
    %v3047 = vmax.f32 %v3045, %v3046
    %v3048 = vrot.slane %v3047, 2
    %v3049 = vmax.f32 %v3047, %v3048
    %v3050 = vrot.slane %v3049, 1
    %v3051 = vmax.f32 %v3049, %v3050
    %v3052 = vsel %vm2771, %v2341, -inf
    %v3053 = vrot.slane %v3052, 4
    %v3054 = vmax.f32 %v3052, %v3053
    %v3055 = vrot.slane %v3054, 2
    %v3056 = vmax.f32 %v3054, %v3055
    %v3057 = vrot.slane %v3056, 1
    %v3058 = vmax.f32 %v3056, %v3057
    %v3059 = vsel %vm2771, %v2513, -inf
    %v3060 = vrot.slane %v3059, 4
    %v3061 = vmax.f32 %v3059, %v3060
    %v3062 = vrot.slane %v3061, 2
    %v3063 = vmax.f32 %v3061, %v3062
    %v3064 = vrot.slane %v3063, 1
    %v3065 = vmax.f32 %v3063, %v3064
    %v3066 = vsel %vm2771, %v2514, -inf
    %v3067 = vrot.slane %v3066, 4
    %v3068 = vmax.f32 %v3066, %v3067
    %v3069 = vrot.slane %v3068, 2
    %v3070 = vmax.f32 %v3068, %v3069
    %v3071 = vrot.slane %v3070, 1
    %v3072 = vmax.f32 %v3070, %v3071
    %v3073 = vsel %vm2771, %v2515, -inf
    %v3074 = vrot.slane %v3073, 4
    %v3075 = vmax.f32 %v3073, %v3074
    %v3076 = vrot.slane %v3075, 2
    %v3077 = vmax.f32 %v3075, %v3076
    %v3078 = vrot.slane %v3077, 1
    %v3079 = vmax.f32 %v3077, %v3078
    %v3080 = vsel %vm2771, %v2343, -inf
    %v3081 = vrot.slane %v3080, 4
    %v3082 = vmax.f32 %v3080, %v3081
    %v3083 = vrot.slane %v3082, 2
    %v3084 = vmax.f32 %v3082, %v3083
    %v3085 = vrot.slane %v3084, 1
    %v3086 = vmax.f32 %v3084, %v3085
    %v3087 = vsel %vm2771, %v2516, -inf
    %v3088 = vrot.slane %v3087, 4
    %v3089 = vmax.f32 %v3087, %v3088
    %v3090 = vrot.slane %v3089, 2
    %v3091 = vmax.f32 %v3089, %v3090
    %v3092 = vrot.slane %v3091, 1
    %v3093 = vmax.f32 %v3091, %v3092
    %v3094 = vsel %vm2771, %v2517, -inf
    %v3095 = vrot.slane %v3094, 4
    %v3096 = vmax.f32 %v3094, %v3095
    %v3097 = vrot.slane %v3096, 2
    %v3098 = vmax.f32 %v3096, %v3097
    %v3099 = vrot.slane %v3098, 1
    %v3100 = vmax.f32 %v3098, %v3099
    %v3101 = vsel %vm2771, %v2518, -inf
    %v3102 = vrot.slane %v3101, 4
    %v3103 = vmax.f32 %v3101, %v3102
    %v3104 = vrot.slane %v3103, 2
    %v3105 = vmax.f32 %v3103, %v3104
    %v3106 = vrot.slane %v3105, 1
    %v3107 = vmax.f32 %v3105, %v3106
    %v3108 = vsel %vm2771, %v2346, -inf
    %v3109 = vrot.slane %v3108, 4
    %v3110 = vmax.f32 %v3108, %v3109
    %v3111 = vrot.slane %v3110, 2
    %v3112 = vmax.f32 %v3110, %v3111
    %v3113 = vrot.slane %v3112, 1
    %v3114 = vmax.f32 %v3112, %v3113
    %v3115 = vsel %vm2771, %v2519, -inf
    %v3116 = vrot.slane %v3115, 4
    %v3117 = vmax.f32 %v3115, %v3116
    %v3118 = vrot.slane %v3117, 2
    %v3119 = vmax.f32 %v3117, %v3118
    %v3120 = vrot.slane %v3119, 1
    %v3121 = vmax.f32 %v3119, %v3120
    %v3122 = vsel %vm2771, %v2520, -inf
    %v3123 = vrot.slane %v3122, 4
    %v3124 = vmax.f32 %v3122, %v3123
    %v3125 = vrot.slane %v3124, 2
    %v3126 = vmax.f32 %v3124, %v3125
    %v3127 = vrot.slane %v3126, 1
    %v3128 = vmax.f32 %v3126, %v3127
    %v3129 = vsel %vm2771, %v2521, -inf
    %v3130 = vrot.slane %v3129, 4
    %v3131 = vmax.f32 %v3129, %v3130
    %v3132 = vrot.slane %v3131, 2
    %v3133 = vmax.f32 %v3131, %v3132
    %v3134 = vrot.slane %v3133, 1
    %v3135 = vmax.f32 %v3133, %v3134
    %v3136 = vsel %vm2771, %v2348, -inf
    %v3137 = vrot.slane %v3136, 4
    %v3138 = vmax.f32 %v3136, %v3137
    %v3139 = vrot.slane %v3138, 2
    %v3140 = vmax.f32 %v3138, %v3139
    %v3141 = vrot.slane %v3140, 1
    %v3142 = vmax.f32 %v3140, %v3141
    %v3143 = vsel %vm2771, %v2522, -inf
    %v3144 = vrot.slane %v3143, 4
    %v3145 = vmax.f32 %v3143, %v3144
    %v3146 = vrot.slane %v3145, 2
    %v3147 = vmax.f32 %v3145, %v3146
    %v3148 = vrot.slane %v3147, 1
    %v3149 = vmax.f32 %v3147, %v3148
    %v3150 = vsel %vm2771, %v2523, -inf
    %v3151 = vrot.slane %v3150, 4
    %v3152 = vmax.f32 %v3150, %v3151
    %v3153 = vrot.slane %v3152, 2
    %v3154 = vmax.f32 %v3152, %v3153
    %v3155 = vrot.slane %v3154, 1
    %v3156 = vmax.f32 %v3154, %v3155
    %v3157 = vsel %vm2771, %v2524, -inf
    %v3158 = vrot.slane %v3157, 4
    %v3159 = vmax.f32 %v3157, %v3158
    %v3160 = vrot.slane %v3159, 2
    %v3161 = vmax.f32 %v3159, %v3160
    %v3162 = vrot.slane %v3161, 1
    %v3163 = vmax.f32 %v3161, %v3162
    %v3164 = vsel %vm2771, %v2351, -inf
    %v3165 = vrot.slane %v3164, 4
    %v3166 = vmax.f32 %v3164, %v3165
    %v3167 = vrot.slane %v3166, 2
    %v3168 = vmax.f32 %v3166, %v3167
    %v3169 = vrot.slane %v3168, 1
    %v3170 = vmax.f32 %v3168, %v3169
    %v3171 = vsel %vm2771, %v2525, -inf
    %v3172 = vrot.slane %v3171, 4
    %v3173 = vmax.f32 %v3171, %v3172
    %v3174 = vrot.slane %v3173, 2
    %v3175 = vmax.f32 %v3173, %v3174
    %v3176 = vrot.slane %v3175, 1
    %v3177 = vmax.f32 %v3175, %v3176
    %v3178 = vsel %vm2771, %v2526, -inf
    %v3179 = vrot.slane %v3178, 4
    %v3180 = vmax.f32 %v3178, %v3179
    %v3181 = vrot.slane %v3180, 2
    %v3182 = vmax.f32 %v3180, %v3181
    %v3183 = vrot.slane %v3182, 1
    %v3184 = vmax.f32 %v3182, %v3183
    %v3185 = vsel %vm2771, %v2527, -inf
    %v3186 = vrot.slane %v3185, 4
    %v3187 = vmax.f32 %v3185, %v3186
    %v3188 = vrot.slane %v3187, 2
    %v3189 = vmax.f32 %v3187, %v3188
    %v3190 = vrot.slane %v3189, 1
    %v3191 = vmax.f32 %v3189, %v3190
    %v3192 = vsel %vm2771, %v2353, -inf
    %v3193 = vrot.slane %v3192, 4
    %v3194 = vmax.f32 %v3192, %v3193
    %v3195 = vrot.slane %v3194, 2
    %v3196 = vmax.f32 %v3194, %v3195
    %v3197 = vrot.slane %v3196, 1
    %v3198 = vmax.f32 %v3196, %v3197
    %v3199 = vsel %vm2771, %v2528, -inf
    %v3200 = vrot.slane %v3199, 4
    %v3201 = vmax.f32 %v3199, %v3200
    %v3202 = vrot.slane %v3201, 2
    %v3203 = vmax.f32 %v3201, %v3202
    %v3204 = vrot.slane %v3203, 1
    %v3205 = vmax.f32 %v3203, %v3204
    %v3206 = vsel %vm2771, %v2529, -inf
    %v3207 = vrot.slane %v3206, 4
    %v3208 = vmax.f32 %v3206, %v3207
    %v3209 = vrot.slane %v3208, 2
    %v3210 = vmax.f32 %v3208, %v3209
    %v3211 = vrot.slane %v3210, 1
    %v3212 = vmax.f32 %v3210, %v3211
    %v3213 = vsel %vm2771, %v2530, -inf
    %v3214 = vrot.slane %v3213, 4
    %v3215 = vmax.f32 %v3213, %v3214
    %v3216 = vrot.slane %v3215, 2
    %v3217 = vmax.f32 %v3215, %v3216
    %v3218 = vrot.slane %v3217, 1
    %v3219 = vmax.f32 %v3217, %v3218
    %v3220 = vsel %vm2771, %v2356, -inf
    %v3221 = vrot.slane %v3220, 4
    %v3222 = vmax.f32 %v3220, %v3221
    %v3223 = vrot.slane %v3222, 2
    %v3224 = vmax.f32 %v3222, %v3223
    %v3225 = vrot.slane %v3224, 1
    %v3226 = vmax.f32 %v3224, %v3225
    %v3227 = vsel %vm2771, %v2531, -inf
    %v3228 = vrot.slane %v3227, 4
    %v3229 = vmax.f32 %v3227, %v3228
    %v3230 = vrot.slane %v3229, 2
    %v3231 = vmax.f32 %v3229, %v3230
    %v3232 = vrot.slane %v3231, 1
    %v3233 = vmax.f32 %v3231, %v3232
    %v3234 = vsel %vm2771, %v2532, -inf
    %v3235 = vrot.slane %v3234, 4
    %v3236 = vmax.f32 %v3234, %v3235
    %v3237 = vrot.slane %v3236, 2
    %v3238 = vmax.f32 %v3236, %v3237
    %v3239 = vrot.slane %v3238, 1
    %v3240 = vmax.f32 %v3238, %v3239
    %v3241 = vsel %vm2771, %v2533, -inf
    %v3242 = vrot.slane %v3241, 4
    %v3243 = vmax.f32 %v3241, %v3242
    %v3244 = vrot.slane %v3243, 2
    %v3245 = vmax.f32 %v3243, %v3244
    %v3246 = vrot.slane %v3245, 1
    %v3247 = vmax.f32 %v3245, %v3246
    %v3248 = vsel %vm2771, %v2358, -inf
    %v3249 = vrot.slane %v3248, 4
    %v3250 = vmax.f32 %v3248, %v3249
    %v3251 = vrot.slane %v3250, 2
    %v3252 = vmax.f32 %v3250, %v3251
    %v3253 = vrot.slane %v3252, 1
    %v3254 = vmax.f32 %v3252, %v3253
    %v3255 = vsel %vm2771, %v2534, -inf
    %v3256 = vrot.slane %v3255, 4
    %v3257 = vmax.f32 %v3255, %v3256
    %v3258 = vrot.slane %v3257, 2
    %v3259 = vmax.f32 %v3257, %v3258
    %v3260 = vrot.slane %v3259, 1
    %v3261 = vmax.f32 %v3259, %v3260
    %v3262 = vsel %vm2771, %v2535, -inf
    %v3263 = vrot.slane %v3262, 4
    %v3264 = vmax.f32 %v3262, %v3263
    %v3265 = vrot.slane %v3264, 2
    %v3266 = vmax.f32 %v3264, %v3265
    %v3267 = vrot.slane %v3266, 1
    %v3268 = vmax.f32 %v3266, %v3267
    %v3269 = vsel %vm2771, %v2536, -inf
    %v3270 = vrot.slane %v3269, 4
    %v3271 = vmax.f32 %v3269, %v3270
    %v3272 = vrot.slane %v3271, 2
    %v3273 = vmax.f32 %v3271, %v3272
    %v3274 = vrot.slane %v3273, 1
    %v3275 = vmax.f32 %v3273, %v3274
    %v3276 = vsel %vm2771, %v2361, -inf
    %v3277 = vrot.slane %v3276, 4
    %v3278 = vmax.f32 %v3276, %v3277
    %v3279 = vrot.slane %v3278, 2
    %v3280 = vmax.f32 %v3278, %v3279
    %v3281 = vrot.slane %v3280, 1
    %v3282 = vmax.f32 %v3280, %v3281
    %v3283 = vsel %vm2771, %v2537, -inf
    %v3284 = vrot.slane %v3283, 4
    %v3285 = vmax.f32 %v3283, %v3284
    %v3286 = vrot.slane %v3285, 2
    %v3287 = vmax.f32 %v3285, %v3286
    %v3288 = vrot.slane %v3287, 1
    %v3289 = vmax.f32 %v3287, %v3288
    %v3290 = vsel %vm2771, %v2538, -inf
    %v3291 = vrot.slane %v3290, 4
    %v3292 = vmax.f32 %v3290, %v3291
    %v3293 = vrot.slane %v3292, 2
    %v3294 = vmax.f32 %v3292, %v3293
    %v3295 = vrot.slane %v3294, 1
    %v3296 = vmax.f32 %v3294, %v3295
    %v3297 = vsel %vm2771, %v2539, -inf
    %v3298 = vrot.slane %v3297, 4
    %v3299 = vmax.f32 %v3297, %v3298
    %v3300 = vrot.slane %v3299, 2
    %v3301 = vmax.f32 %v3299, %v3300
    %v3302 = vrot.slane %v3301, 1
    %v3303 = vmax.f32 %v3301, %v3302
    %v3304 = vsel %vm2771, %v2363, -inf
    %v3305 = vrot.slane %v3304, 4
    %v3306 = vmax.f32 %v3304, %v3305
    %v3307 = vrot.slane %v3306, 2
    %v3308 = vmax.f32 %v3306, %v3307
    %v3309 = vrot.slane %v3308, 1
    %v3310 = vmax.f32 %v3308, %v3309
    %v3311 = vsel %vm2771, %v2540, -inf
    %v3312 = vrot.slane %v3311, 4
    %v3313 = vmax.f32 %v3311, %v3312
    %v3314 = vrot.slane %v3313, 2
    %v3315 = vmax.f32 %v3313, %v3314
    %v3316 = vrot.slane %v3315, 1
    %v3317 = vmax.f32 %v3315, %v3316
    %v3318 = vsel %vm2771, %v2541, -inf
    %v3319 = vrot.slane %v3318, 4
    %v3320 = vmax.f32 %v3318, %v3319
    %v3321 = vrot.slane %v3320, 2
    %v3322 = vmax.f32 %v3320, %v3321
    %v3323 = vrot.slane %v3322, 1
    %v3324 = vmax.f32 %v3322, %v3323
    %v3325 = vsel %vm2771, %v2542, -inf
    %v3326 = vrot.slane %v3325, 4
    %v3327 = vmax.f32 %v3325, %v3326
    %v3328 = vrot.slane %v3327, 2
    %v3329 = vmax.f32 %v3327, %v3328
    %v3330 = vrot.slane %v3329, 1
    %v3331 = vmax.f32 %v3329, %v3330
    %v3332 = vsel %vm2771, %v2366, -inf
    %v3333 = vrot.slane %v3332, 4
    %v3334 = vmax.f32 %v3332, %v3333
    %v3335 = vrot.slane %v3334, 2
    %v3336 = vmax.f32 %v3334, %v3335
    %v3337 = vrot.slane %v3336, 1
    %v3338 = vmax.f32 %v3336, %v3337
    %v3339 = vsel %vm2771, %v2543, -inf
    %v3340 = vrot.slane %v3339, 4
    %v3341 = vmax.f32 %v3339, %v3340
    %v3342 = vrot.slane %v3341, 2
    %v3343 = vmax.f32 %v3341, %v3342
    %v3344 = vrot.slane %v3343, 1
    %v3345 = vmax.f32 %v3343, %v3344
    %v3346 = vsel %vm2771, %v2544, -inf
    %v3347 = vrot.slane %v3346, 4
    %v3348 = vmax.f32 %v3346, %v3347
    %v3349 = vrot.slane %v3348, 2
    %v3350 = vmax.f32 %v3348, %v3349
    %v3351 = vrot.slane %v3350, 1
    %v3352 = vmax.f32 %v3350, %v3351
    %v3353 = vsel %vm2771, %v2545, -inf
    %v3354 = vrot.slane %v3353, 4
    %v3355 = vmax.f32 %v3353, %v3354
    %v3356 = vrot.slane %v3355, 2
    %v3357 = vmax.f32 %v3355, %v3356
    %v3358 = vrot.slane %v3357, 1
    %v3359 = vmax.f32 %v3357, %v3358
    %v3360 = vsel %vm2771, %v2368, -inf
    %v3361 = vrot.slane %v3360, 4
    %v3362 = vmax.f32 %v3360, %v3361
    %v3363 = vrot.slane %v3362, 2
    %v3364 = vmax.f32 %v3362, %v3363
    %v3365 = vrot.slane %v3364, 1
    %v3366 = vmax.f32 %v3364, %v3365
    %v3367 = vsel %vm2771, %v2546, -inf
    %v3368 = vrot.slane %v3367, 4
    %v3369 = vmax.f32 %v3367, %v3368
    %v3370 = vrot.slane %v3369, 2
    %v3371 = vmax.f32 %v3369, %v3370
    %v3372 = vrot.slane %v3371, 1
    %v3373 = vmax.f32 %v3371, %v3372
    %v3374 = vsel %vm2771, %v2547, -inf
    %v3375 = vrot.slane %v3374, 4
    %v3376 = vmax.f32 %v3374, %v3375
    %v3377 = vrot.slane %v3376, 2
    %v3378 = vmax.f32 %v3376, %v3377
    %v3379 = vrot.slane %v3378, 1
    %v3380 = vmax.f32 %v3378, %v3379
    %v3381 = vsel %vm2771, %v2548, -inf
    %v3382 = vrot.slane %v3381, 4
    %v3383 = vmax.f32 %v3381, %v3382
    %v3384 = vrot.slane %v3383, 2
    %v3385 = vmax.f32 %v3383, %v3384
    %v3386 = vrot.slane %v3385, 1
    %v3387 = vmax.f32 %v3385, %v3386
    %v3388 = vsel %vm2771, %v2371, -inf
    %v3389 = vrot.slane %v3388, 4
    %v3390 = vmax.f32 %v3388, %v3389
    %v3391 = vrot.slane %v3390, 2
    %v3392 = vmax.f32 %v3390, %v3391
    %v3393 = vrot.slane %v3392, 1
    %v3394 = vmax.f32 %v3392, %v3393
    %v3395 = vsel %vm2771, %v2549, -inf
    %v3396 = vrot.slane %v3395, 4
    %v3397 = vmax.f32 %v3395, %v3396
    %v3398 = vrot.slane %v3397, 2
    %v3399 = vmax.f32 %v3397, %v3398
    %v3400 = vrot.slane %v3399, 1
    %v3401 = vmax.f32 %v3399, %v3400
    %v3402 = vsel %vm2771, %v2550, -inf
    %v3403 = vrot.slane %v3402, 4
    %v3404 = vmax.f32 %v3402, %v3403
    %v3405 = vrot.slane %v3404, 2
    %v3406 = vmax.f32 %v3404, %v3405
    %v3407 = vrot.slane %v3406, 1
    %v3408 = vmax.f32 %v3406, %v3407
    %v3409 = vsel %vm2771, %v2551, -inf
    %v3410 = vrot.slane %v3409, 4
    %v3411 = vmax.f32 %v3409, %v3410
    %v3412 = vrot.slane %v3411, 2
    %v3413 = vmax.f32 %v3411, %v3412
    %v3414 = vrot.slane %v3413, 1
    %v3415 = vmax.f32 %v3413, %v3414
    %v3416 = vsel %vm2771, %v2373, -inf
    %v3417 = vrot.slane %v3416, 4
    %v3418 = vmax.f32 %v3416, %v3417
    %v3419 = vrot.slane %v3418, 2
    %v3420 = vmax.f32 %v3418, %v3419
    %v3421 = vrot.slane %v3420, 1
    %v3422 = vmax.f32 %v3420, %v3421
    %v3423 = vsel %vm2771, %v2552, -inf
    %v3424 = vrot.slane %v3423, 4
    %v3425 = vmax.f32 %v3423, %v3424
    %v3426 = vrot.slane %v3425, 2
    %v3427 = vmax.f32 %v3425, %v3426
    %v3428 = vrot.slane %v3427, 1
    %v3429 = vmax.f32 %v3427, %v3428
    %v3430 = vsel %vm2771, %v2553, -inf
    %v3431 = vrot.slane %v3430, 4
    %v3432 = vmax.f32 %v3430, %v3431
    %v3433 = vrot.slane %v3432, 2
    %v3434 = vmax.f32 %v3432, %v3433
    %v3435 = vrot.slane %v3434, 1
    %v3436 = vmax.f32 %v3434, %v3435
    %v3437 = vsel %vm2771, %v2554, -inf
    %v3438 = vrot.slane %v3437, 4
    %v3439 = vmax.f32 %v3437, %v3438
    %v3440 = vrot.slane %v3439, 2
    %v3441 = vmax.f32 %v3439, %v3440
    %v3442 = vrot.slane %v3441, 1
    %v3443 = vmax.f32 %v3441, %v3442
    %v3444 = vsel %vm2771, %v2376, -inf
    %v3445 = vrot.slane %v3444, 4
    %v3446 = vmax.f32 %v3444, %v3445
    %v3447 = vrot.slane %v3446, 2
    %v3448 = vmax.f32 %v3446, %v3447
    %v3449 = vrot.slane %v3448, 1
    %v3450 = vmax.f32 %v3448, %v3449
    %v3451 = vsel %vm2771, %v2555, -inf
    %v3452 = vrot.slane %v3451, 4
    %v3453 = vmax.f32 %v3451, %v3452
    %v3454 = vrot.slane %v3453, 2
    %v3455 = vmax.f32 %v3453, %v3454
    %v3456 = vrot.slane %v3455, 1
    %v3457 = vmax.f32 %v3455, %v3456
    %v3458 = vsel %vm2771, %v2556, -inf
    %v3459 = vrot.slane %v3458, 4
    %v3460 = vmax.f32 %v3458, %v3459
    %v3461 = vrot.slane %v3460, 2
    %v3462 = vmax.f32 %v3460, %v3461
    %v3463 = vrot.slane %v3462, 1
    %v3464 = vmax.f32 %v3462, %v3463
    %v3465 = vsel %vm2771, %v2557, -inf
    %v3466 = vrot.slane %v3465, 4
    %v3467 = vmax.f32 %v3465, %v3466
    %v3468 = vrot.slane %v3467, 2
    %v3469 = vmax.f32 %v3467, %v3468
    %v3470 = vrot.slane %v3469, 1
    %v3471 = vmax.f32 %v3469, %v3470
    %v3472 = vsel %vm2771, %v2378, -inf
    %v3473 = vrot.slane %v3472, 4
    %v3474 = vmax.f32 %v3472, %v3473
    %v3475 = vrot.slane %v3474, 2
    %v3476 = vmax.f32 %v3474, %v3475
    %v3477 = vrot.slane %v3476, 1
    %v3478 = vmax.f32 %v3476, %v3477
    %v3479 = vsel %vm2771, %v2558, -inf
    %v3480 = vrot.slane %v3479, 4
    %v3481 = vmax.f32 %v3479, %v3480
    %v3482 = vrot.slane %v3481, 2
    %v3483 = vmax.f32 %v3481, %v3482
    %v3484 = vrot.slane %v3483, 1
    %v3485 = vmax.f32 %v3483, %v3484
    %v3486 = vsel %vm2771, %v2559, -inf
    %v3487 = vrot.slane %v3486, 4
    %v3488 = vmax.f32 %v3486, %v3487
    %v3489 = vrot.slane %v3488, 2
    %v3490 = vmax.f32 %v3488, %v3489
    %v3491 = vrot.slane %v3490, 1
    %v3492 = vmax.f32 %v3490, %v3491
    %v3493 = vsel %vm2771, %v2560, -inf
    %v3494 = vrot.slane %v3493, 4
    %v3495 = vmax.f32 %v3493, %v3494
    %v3496 = vrot.slane %v3495, 2
    %v3497 = vmax.f32 %v3495, %v3496
    %v3498 = vrot.slane %v3497, 1
    %v3499 = vmax.f32 %v3497, %v3498
    %v3500 = vsel %vm2771, %v2381, -inf
    %v3501 = vrot.slane %v3500, 4
    %v3502 = vmax.f32 %v3500, %v3501
    %v3503 = vrot.slane %v3502, 2
    %v3504 = vmax.f32 %v3502, %v3503
    %v3505 = vrot.slane %v3504, 1
    %v3506 = vmax.f32 %v3504, %v3505
    %v3507 = vsel %vm2771, %v2561, -inf
    %v3508 = vrot.slane %v3507, 4
    %v3509 = vmax.f32 %v3507, %v3508
    %v3510 = vrot.slane %v3509, 2
    %v3511 = vmax.f32 %v3509, %v3510
    %v3512 = vrot.slane %v3511, 1
    %v3513 = vmax.f32 %v3511, %v3512
    %v3514 = vsel %vm2771, %v2562, -inf
    %v3515 = vrot.slane %v3514, 4
    %v3516 = vmax.f32 %v3514, %v3515
    %v3517 = vrot.slane %v3516, 2
    %v3518 = vmax.f32 %v3516, %v3517
    %v3519 = vrot.slane %v3518, 1
    %v3520 = vmax.f32 %v3518, %v3519
    %v3521 = vsel %vm2771, %v2563, -inf
    %v3522 = vrot.slane %v3521, 4
    %v3523 = vmax.f32 %v3521, %v3522
    %v3524 = vrot.slane %v3523, 2
    %v3525 = vmax.f32 %v3523, %v3524
    %v3526 = vrot.slane %v3525, 1
    %v3527 = vmax.f32 %v3525, %v3526
    %v3528 = vsel %vm2771, %v2383, -inf
    %v3529 = vrot.slane %v3528, 4
    %v3530 = vmax.f32 %v3528, %v3529
    %v3531 = vrot.slane %v3530, 2
    %v3532 = vmax.f32 %v3530, %v3531
    %v3533 = vrot.slane %v3532, 1
    %v3534 = vmax.f32 %v3532, %v3533
    %v3535 = vsel %vm2771, %v2564, -inf
    %v3536 = vrot.slane %v3535, 4
    %v3537 = vmax.f32 %v3535, %v3536
    %v3538 = vrot.slane %v3537, 2
    %v3539 = vmax.f32 %v3537, %v3538
    %v3540 = vrot.slane %v3539, 1
    %v3541 = vmax.f32 %v3539, %v3540
    %v3542 = vsel %vm2771, %v2565, -inf
    %v3543 = vrot.slane %v3542, 4
    %v3544 = vmax.f32 %v3542, %v3543
    %v3545 = vrot.slane %v3544, 2
    %v3546 = vmax.f32 %v3544, %v3545
    %v3547 = vrot.slane %v3546, 1
    %v3548 = vmax.f32 %v3546, %v3547
    %v3549 = vsel %vm2771, %v2566, -inf
    %v3550 = vrot.slane %v3549, 4
    %v3551 = vmax.f32 %v3549, %v3550
    %v3552 = vrot.slane %v3551, 2
    %v3553 = vmax.f32 %v3551, %v3552
    %v3554 = vrot.slane %v3553, 1
    %v3555 = vmax.f32 %v3553, %v3554
    %v3556 = vsel %vm2771, %v2386, -inf
    %v3557 = vrot.slane %v3556, 4
    %v3558 = vmax.f32 %v3556, %v3557
    %v3559 = vrot.slane %v3558, 2
    %v3560 = vmax.f32 %v3558, %v3559
    %v3561 = vrot.slane %v3560, 1
    %v3562 = vmax.f32 %v3560, %v3561
    %v3563 = vsel %vm2771, %v2567, -inf
    %v3564 = vrot.slane %v3563, 4
    %v3565 = vmax.f32 %v3563, %v3564
    %v3566 = vrot.slane %v3565, 2
    %v3567 = vmax.f32 %v3565, %v3566
    %v3568 = vrot.slane %v3567, 1
    %v3569 = vmax.f32 %v3567, %v3568
    %v3570 = vsel %vm2771, %v2568, -inf
    %v3571 = vrot.slane %v3570, 4
    %v3572 = vmax.f32 %v3570, %v3571
    %v3573 = vrot.slane %v3572, 2
    %v3574 = vmax.f32 %v3572, %v3573
    %v3575 = vrot.slane %v3574, 1
    %v3576 = vmax.f32 %v3574, %v3575
    %v3577 = vsel %vm2771, %v2569, -inf
    %v3578 = vrot.slane %v3577, 4
    %v3579 = vmax.f32 %v3577, %v3578
    %v3580 = vrot.slane %v3579, 2
    %v3581 = vmax.f32 %v3579, %v3580
    %v3582 = vrot.slane %v3581, 1
    %v3583 = vmax.f32 %v3581, %v3582
    %v3584 = vsel %vm2771, %v2388, -inf
    %v3585 = vrot.slane %v3584, 4
    %v3586 = vmax.f32 %v3584, %v3585
    %v3587 = vrot.slane %v3586, 2
    %v3588 = vmax.f32 %v3586, %v3587
    %v3589 = vrot.slane %v3588, 1
    %v3590 = vmax.f32 %v3588, %v3589
    %v3591 = vsel %vm2771, %v2570, -inf
    %v3592 = vrot.slane %v3591, 4
    %v3593 = vmax.f32 %v3591, %v3592
    %v3594 = vrot.slane %v3593, 2
    %v3595 = vmax.f32 %v3593, %v3594
    %v3596 = vrot.slane %v3595, 1
    %v3597 = vmax.f32 %v3595, %v3596
    %v3598 = vsel %vm2771, %v2571, -inf
    %v3599 = vrot.slane %v3598, 4
    %v3600 = vmax.f32 %v3598, %v3599
    %v3601 = vrot.slane %v3600, 2
    %v3602 = vmax.f32 %v3600, %v3601
    %v3603 = vrot.slane %v3602, 1
    %v3604 = vmax.f32 %v3602, %v3603
    %v3605 = vsel %vm2771, %v2572, -inf
    %v3606 = vrot.slane %v3605, 4
    %v3607 = vmax.f32 %v3605, %v3606
    %v3608 = vrot.slane %v3607, 2
    %v3609 = vmax.f32 %v3607, %v3608
    %v3610 = vrot.slane %v3609, 1
    %v3611 = vmax.f32 %v3609, %v3610
    %v3612 = vsel %vm2771, %v2391, -inf
    %v3613 = vrot.slane %v3612, 4
    %v3614 = vmax.f32 %v3612, %v3613
    %v3615 = vrot.slane %v3614, 2
    %v3616 = vmax.f32 %v3614, %v3615
    %v3617 = vrot.slane %v3616, 1
    %v3618 = vmax.f32 %v3616, %v3617
    %v3619 = vsel %vm2771, %v2573, -inf
    %v3620 = vrot.slane %v3619, 4
    %v3621 = vmax.f32 %v3619, %v3620
    %v3622 = vrot.slane %v3621, 2
    %v3623 = vmax.f32 %v3621, %v3622
    %v3624 = vrot.slane %v3623, 1
    %v3625 = vmax.f32 %v3623, %v3624
    %v3626 = vsel %vm2771, %v2574, -inf
    %v3627 = vrot.slane %v3626, 4
    %v3628 = vmax.f32 %v3626, %v3627
    %v3629 = vrot.slane %v3628, 2
    %v3630 = vmax.f32 %v3628, %v3629
    %v3631 = vrot.slane %v3630, 1
    %v3632 = vmax.f32 %v3630, %v3631
    %v3633 = vsel %vm2771, %v2575, -inf
    %v3634 = vrot.slane %v3633, 4
    %v3635 = vmax.f32 %v3633, %v3634
    %v3636 = vrot.slane %v3635, 2
    %v3637 = vmax.f32 %v3635, %v3636
    %v3638 = vrot.slane %v3637, 1
    %v3639 = vmax.f32 %v3637, %v3638
    %v3640 = vsel %vm2771, %v2393, -inf
    %v3641 = vrot.slane %v3640, 4
    %v3642 = vmax.f32 %v3640, %v3641
    %v3643 = vrot.slane %v3642, 2
    %v3644 = vmax.f32 %v3642, %v3643
    %v3645 = vrot.slane %v3644, 1
    %v3646 = vmax.f32 %v3644, %v3645
    %v3647 = vsel %vm2771, %v2576, -inf
    %v3648 = vrot.slane %v3647, 4
    %v3649 = vmax.f32 %v3647, %v3648
    %v3650 = vrot.slane %v3649, 2
    %v3651 = vmax.f32 %v3649, %v3650
    %v3652 = vrot.slane %v3651, 1
    %v3653 = vmax.f32 %v3651, %v3652
    %v3654 = vsel %vm2771, %v2577, -inf
    %v3655 = vrot.slane %v3654, 4
    %v3656 = vmax.f32 %v3654, %v3655
    %v3657 = vrot.slane %v3656, 2
    %v3658 = vmax.f32 %v3656, %v3657
    %v3659 = vrot.slane %v3658, 1
    %v3660 = vmax.f32 %v3658, %v3659
    %v3661 = vsel %vm2771, %v2578, -inf
    %v3662 = vrot.slane %v3661, 4
    %v3663 = vmax.f32 %v3661, %v3662
    %v3664 = vrot.slane %v3663, 2
    %v3665 = vmax.f32 %v3663, %v3664
    %v3666 = vrot.slane %v3665, 1
    %v3667 = vmax.f32 %v3665, %v3666
    %v3668 = vsel %vm2771, %v2396, -inf
    %v3669 = vrot.slane %v3668, 4
    %v3670 = vmax.f32 %v3668, %v3669
    %v3671 = vrot.slane %v3670, 2
    %v3672 = vmax.f32 %v3670, %v3671
    %v3673 = vrot.slane %v3672, 1
    %v3674 = vmax.f32 %v3672, %v3673
    %v3675 = vsel %vm2771, %v2579, -inf
    %v3676 = vrot.slane %v3675, 4
    %v3677 = vmax.f32 %v3675, %v3676
    %v3678 = vrot.slane %v3677, 2
    %v3679 = vmax.f32 %v3677, %v3678
    %v3680 = vrot.slane %v3679, 1
    %v3681 = vmax.f32 %v3679, %v3680
    %v3682 = vsel %vm2771, %v2580, -inf
    %v3683 = vrot.slane %v3682, 4
    %v3684 = vmax.f32 %v3682, %v3683
    %v3685 = vrot.slane %v3684, 2
    %v3686 = vmax.f32 %v3684, %v3685
    %v3687 = vrot.slane %v3686, 1
    %v3688 = vmax.f32 %v3686, %v3687
    %v3689 = vsel %vm2771, %v2581, -inf
    %v3690 = vrot.slane %v3689, 4
    %v3691 = vmax.f32 %v3689, %v3690
    %v3692 = vrot.slane %v3691, 2
    %v3693 = vmax.f32 %v3691, %v3692
    %v3694 = vrot.slane %v3693, 1
    %v3695 = vmax.f32 %v3693, %v3694
    %v3696 = vsel %vm2771, %v2398, -inf
    %v3697 = vrot.slane %v3696, 4
    %v3698 = vmax.f32 %v3696, %v3697
    %v3699 = vrot.slane %v3698, 2
    %v3700 = vmax.f32 %v3698, %v3699
    %v3701 = vrot.slane %v3700, 1
    %v3702 = vmax.f32 %v3700, %v3701
    %v3703 = vsel %vm2771, %v2582, -inf
    %v3704 = vrot.slane %v3703, 4
    %v3705 = vmax.f32 %v3703, %v3704
    %v3706 = vrot.slane %v3705, 2
    %v3707 = vmax.f32 %v3705, %v3706
    %v3708 = vrot.slane %v3707, 1
    %v3709 = vmax.f32 %v3707, %v3708
    %v3710 = vsel %vm2771, %v2583, -inf
    %v3711 = vrot.slane %v3710, 4
    %v3712 = vmax.f32 %v3710, %v3711
    %v3713 = vrot.slane %v3712, 2
    %v3714 = vmax.f32 %v3712, %v3713
    %v3715 = vrot.slane %v3714, 1
    %v3716 = vmax.f32 %v3714, %v3715
    %v3717 = vsel %vm2771, %v2584, -inf
    %v3718 = vrot.slane %v3717, 4
    %v3719 = vmax.f32 %v3717, %v3718
    %v3720 = vrot.slane %v3719, 2
    %v3721 = vmax.f32 %v3719, %v3720
    %v3722 = vrot.slane %v3721, 1
    %v3723 = vmax.f32 %v3721, %v3722
    %v3724 = vsel %vm2771, %v2401, -inf
    %v3725 = vrot.slane %v3724, 4
    %v3726 = vmax.f32 %v3724, %v3725
    %v3727 = vrot.slane %v3726, 2
    %v3728 = vmax.f32 %v3726, %v3727
    %v3729 = vrot.slane %v3728, 1
    %v3730 = vmax.f32 %v3728, %v3729
    %v3731 = vsel %vm2771, %v2585, -inf
    %v3732 = vrot.slane %v3731, 4
    %v3733 = vmax.f32 %v3731, %v3732
    %v3734 = vrot.slane %v3733, 2
    %v3735 = vmax.f32 %v3733, %v3734
    %v3736 = vrot.slane %v3735, 1
    %v3737 = vmax.f32 %v3735, %v3736
    %v3738 = vsel %vm2771, %v2586, -inf
    %v3739 = vrot.slane %v3738, 4
    %v3740 = vmax.f32 %v3738, %v3739
    %v3741 = vrot.slane %v3740, 2
    %v3742 = vmax.f32 %v3740, %v3741
    %v3743 = vrot.slane %v3742, 1
    %v3744 = vmax.f32 %v3742, %v3743
    %v3745 = vsel %vm2771, %v2587, -inf
    %v3746 = vrot.slane %v3745, 4
    %v3747 = vmax.f32 %v3745, %v3746
    %v3748 = vrot.slane %v3747, 2
    %v3749 = vmax.f32 %v3747, %v3748
    %v3750 = vrot.slane %v3749, 1
    %v3751 = vmax.f32 %v3749, %v3750
    %v3752 = vsel %vm2771, %v2403, -inf
    %v3753 = vrot.slane %v3752, 4
    %v3754 = vmax.f32 %v3752, %v3753
    %v3755 = vrot.slane %v3754, 2
    %v3756 = vmax.f32 %v3754, %v3755
    %v3757 = vrot.slane %v3756, 1
    %v3758 = vmax.f32 %v3756, %v3757
    %v3759 = vsel %vm2771, %v2588, -inf
    %v3760 = vrot.slane %v3759, 4
    %v3761 = vmax.f32 %v3759, %v3760
    %v3762 = vrot.slane %v3761, 2
    %v3763 = vmax.f32 %v3761, %v3762
    %v3764 = vrot.slane %v3763, 1
    %v3765 = vmax.f32 %v3763, %v3764
    %v3766 = vsel %vm2771, %v2589, -inf
    %v3767 = vrot.slane %v3766, 4
    %v3768 = vmax.f32 %v3766, %v3767
    %v3769 = vrot.slane %v3768, 2
    %v3770 = vmax.f32 %v3768, %v3769
    %v3771 = vrot.slane %v3770, 1
    %v3772 = vmax.f32 %v3770, %v3771
    %v3773 = vsel %vm2771, %v2590, -inf
    %v3774 = vrot.slane %v3773, 4
    %v3775 = vmax.f32 %v3773, %v3774
    %v3776 = vrot.slane %v3775, 2
    %v3777 = vmax.f32 %v3775, %v3776
    %v3778 = vrot.slane %v3777, 1
    %v3779 = vmax.f32 %v3777, %v3778
    %v3780 = vsel %vm2771, %v2406, -inf
    %v3781 = vrot.slane %v3780, 4
    %v3782 = vmax.f32 %v3780, %v3781
    %v3783 = vrot.slane %v3782, 2
    %v3784 = vmax.f32 %v3782, %v3783
    %v3785 = vrot.slane %v3784, 1
    %v3786 = vmax.f32 %v3784, %v3785
    %v3787 = vsel %vm2771, %v2591, -inf
    %v3788 = vrot.slane %v3787, 4
    %v3789 = vmax.f32 %v3787, %v3788
    %v3790 = vrot.slane %v3789, 2
    %v3791 = vmax.f32 %v3789, %v3790
    %v3792 = vrot.slane %v3791, 1
    %v3793 = vmax.f32 %v3791, %v3792
    %v3794 = vsel %vm2771, %v2592, -inf
    %v3795 = vrot.slane %v3794, 4
    %v3796 = vmax.f32 %v3794, %v3795
    %v3797 = vrot.slane %v3796, 2
    %v3798 = vmax.f32 %v3796, %v3797
    %v3799 = vrot.slane %v3798, 1
    %v3800 = vmax.f32 %v3798, %v3799
    %v3801 = vsel %vm2771, %v2593, -inf
    %v3802 = vrot.slane %v3801, 4
    %v3803 = vmax.f32 %v3801, %v3802
    %v3804 = vrot.slane %v3803, 2
    %v3805 = vmax.f32 %v3803, %v3804
    %v3806 = vrot.slane %v3805, 1
    %v3807 = vmax.f32 %v3805, %v3806
    %v3808 = vsel %vm2771, %v2408, -inf
    %v3809 = vrot.slane %v3808, 4
    %v3810 = vmax.f32 %v3808, %v3809
    %v3811 = vrot.slane %v3810, 2
    %v3812 = vmax.f32 %v3810, %v3811
    %v3813 = vrot.slane %v3812, 1
    %v3814 = vmax.f32 %v3812, %v3813
    %v3815 = vsel %vm2771, %v2594, -inf
    %v3816 = vrot.slane %v3815, 4
    %v3817 = vmax.f32 %v3815, %v3816
    %v3818 = vrot.slane %v3817, 2
    %v3819 = vmax.f32 %v3817, %v3818
    %v3820 = vrot.slane %v3819, 1
    %v3821 = vmax.f32 %v3819, %v3820
    %v3822 = vsel %vm2771, %v2595, -inf
    %v3823 = vrot.slane %v3822, 4
    %v3824 = vmax.f32 %v3822, %v3823
    %v3825 = vrot.slane %v3824, 2
    %v3826 = vmax.f32 %v3824, %v3825
    %v3827 = vrot.slane %v3826, 1
    %v3828 = vmax.f32 %v3826, %v3827
    %v3829 = vsel %vm2771, %v2596, -inf
    %v3830 = vrot.slane %v3829, 4
    %v3831 = vmax.f32 %v3829, %v3830
    %v3832 = vrot.slane %v3831, 2
    %v3833 = vmax.f32 %v3831, %v3832
    %v3834 = vrot.slane %v3833, 1
    %v3835 = vmax.f32 %v3833, %v3834
    %v3836 = vsel %vm2771, %v2411, -inf
    %v3837 = vrot.slane %v3836, 4
    %v3838 = vmax.f32 %v3836, %v3837
    %v3839 = vrot.slane %v3838, 2
    %v3840 = vmax.f32 %v3838, %v3839
    %v3841 = vrot.slane %v3840, 1
    %v3842 = vmax.f32 %v3840, %v3841
    %v3843 = vsel %vm2771, %v2597, -inf
    %v3844 = vrot.slane %v3843, 4
    %v3845 = vmax.f32 %v3843, %v3844
    %v3846 = vrot.slane %v3845, 2
    %v3847 = vmax.f32 %v3845, %v3846
    %v3848 = vrot.slane %v3847, 1
    %v3849 = vmax.f32 %v3847, %v3848
    %v3850 = vsel %vm2771, %v2598, -inf
    %v3851 = vrot.slane %v3850, 4
    %v3852 = vmax.f32 %v3850, %v3851
    %v3853 = vrot.slane %v3852, 2
    %v3854 = vmax.f32 %v3852, %v3853
    %v3855 = vrot.slane %v3854, 1
    %v3856 = vmax.f32 %v3854, %v3855
    %v3857 = vsel %vm2771, %v2599, -inf
    %v3858 = vrot.slane %v3857, 4
    %v3859 = vmax.f32 %v3857, %v3858
    %v3860 = vrot.slane %v3859, 2
    %v3861 = vmax.f32 %v3859, %v3860
    %v3862 = vrot.slane %v3861, 1
    %v3863 = vmax.f32 %v3861, %v3862
    %v3864 = vsel %vm2771, %v2413, -inf
    %v3865 = vrot.slane %v3864, 4
    %v3866 = vmax.f32 %v3864, %v3865
    %v3867 = vrot.slane %v3866, 2
    %v3868 = vmax.f32 %v3866, %v3867
    %v3869 = vrot.slane %v3868, 1
    %v3870 = vmax.f32 %v3868, %v3869
    %v3871 = vsel %vm2771, %v2600, -inf
    %v3872 = vrot.slane %v3871, 4
    %v3873 = vmax.f32 %v3871, %v3872
    %v3874 = vrot.slane %v3873, 2
    %v3875 = vmax.f32 %v3873, %v3874
    %v3876 = vrot.slane %v3875, 1
    %v3877 = vmax.f32 %v3875, %v3876
    %v3878 = vsel %vm2771, %v2601, -inf
    %v3879 = vrot.slane %v3878, 4
    %v3880 = vmax.f32 %v3878, %v3879
    %v3881 = vrot.slane %v3880, 2
    %v3882 = vmax.f32 %v3880, %v3881
    %v3883 = vrot.slane %v3882, 1
    %v3884 = vmax.f32 %v3882, %v3883
    %v3885 = vsel %vm2771, %v2602, -inf
    %v3886 = vrot.slane %v3885, 4
    %v3887 = vmax.f32 %v3885, %v3886
    %v3888 = vrot.slane %v3887, 2
    %v3889 = vmax.f32 %v3887, %v3888
    %v3890 = vrot.slane %v3889, 1
    %v3891 = vmax.f32 %v3889, %v3890
    %v3892 = vsel %vm2771, %v2416, -inf
    %v3893 = vrot.slane %v3892, 4
    %v3894 = vmax.f32 %v3892, %v3893
    %v3895 = vrot.slane %v3894, 2
    %v3896 = vmax.f32 %v3894, %v3895
    %v3897 = vrot.slane %v3896, 1
    %v3898 = vmax.f32 %v3896, %v3897
    %v3899 = vsel %vm2771, %v2603, -inf
    %v3900 = vrot.slane %v3899, 4
    %v3901 = vmax.f32 %v3899, %v3900
    %v3902 = vrot.slane %v3901, 2
    %v3903 = vmax.f32 %v3901, %v3902
    %v3904 = vrot.slane %v3903, 1
    %v3905 = vmax.f32 %v3903, %v3904
    %v3906 = vsel %vm2771, %v2604, -inf
    %v3907 = vrot.slane %v3906, 4
    %v3908 = vmax.f32 %v3906, %v3907
    %v3909 = vrot.slane %v3908, 2
    %v3910 = vmax.f32 %v3908, %v3909
    %v3911 = vrot.slane %v3910, 1
    %v3912 = vmax.f32 %v3910, %v3911
    %v3913 = vsel %vm2771, %v2605, -inf
    %v3914 = vrot.slane %v3913, 4
    %v3915 = vmax.f32 %v3913, %v3914
    %v3916 = vrot.slane %v3915, 2
    %v3917 = vmax.f32 %v3915, %v3916
    %v3918 = vrot.slane %v3917, 1
    %v3919 = vmax.f32 %v3917, %v3918
    %v3920 = vsel %vm2771, %v2418, -inf
    %v3921 = vrot.slane %v3920, 4
    %v3922 = vmax.f32 %v3920, %v3921
    %v3923 = vrot.slane %v3922, 2
    %v3924 = vmax.f32 %v3922, %v3923
    %v3925 = vrot.slane %v3924, 1
    %v3926 = vmax.f32 %v3924, %v3925
    %v3927 = vsel %vm2771, %v2606, -inf
    %v3928 = vrot.slane %v3927, 4
    %v3929 = vmax.f32 %v3927, %v3928
    %v3930 = vrot.slane %v3929, 2
    %v3931 = vmax.f32 %v3929, %v3930
    %v3932 = vrot.slane %v3931, 1
    %v3933 = vmax.f32 %v3931, %v3932
    %v3934 = vsel %vm2771, %v2607, -inf
    %v3935 = vrot.slane %v3934, 4
    %v3936 = vmax.f32 %v3934, %v3935
    %v3937 = vrot.slane %v3936, 2
    %v3938 = vmax.f32 %v3936, %v3937
    %v3939 = vrot.slane %v3938, 1
    %v3940 = vmax.f32 %v3938, %v3939
    %v3941 = vsel %vm2771, %v2608, -inf
    %v3942 = vrot.slane %v3941, 4
    %v3943 = vmax.f32 %v3941, %v3942
    %v3944 = vrot.slane %v3943, 2
    %v3945 = vmax.f32 %v3943, %v3944
    %v3946 = vrot.slane %v3945, 1
    %v3947 = vmax.f32 %v3945, %v3946
    %v3948 = vsel %vm2771, %v2421, -inf
    %v3949 = vrot.slane %v3948, 4
    %v3950 = vmax.f32 %v3948, %v3949
    %v3951 = vrot.slane %v3950, 2
    %v3952 = vmax.f32 %v3950, %v3951
    %v3953 = vrot.slane %v3952, 1
    %v3954 = vmax.f32 %v3952, %v3953
    %v3955 = vsel %vm2771, %v2609, -inf
    %v3956 = vrot.slane %v3955, 4
    %v3957 = vmax.f32 %v3955, %v3956
    %v3958 = vrot.slane %v3957, 2
    %v3959 = vmax.f32 %v3957, %v3958
    %v3960 = vrot.slane %v3959, 1
    %v3961 = vmax.f32 %v3959, %v3960
    %v3962 = vsel %vm2771, %v2610, -inf
    %v3963 = vrot.slane %v3962, 4
    %v3964 = vmax.f32 %v3962, %v3963
    %v3965 = vrot.slane %v3964, 2
    %v3966 = vmax.f32 %v3964, %v3965
    %v3967 = vrot.slane %v3966, 1
    %v3968 = vmax.f32 %v3966, %v3967
    %v3969 = vsel %vm2771, %v2611, -inf
    %v3970 = vrot.slane %v3969, 4
    %v3971 = vmax.f32 %v3969, %v3970
    %v3972 = vrot.slane %v3971, 2
    %v3973 = vmax.f32 %v3971, %v3972
    %v3974 = vrot.slane %v3973, 1
    %v3975 = vmax.f32 %v3973, %v3974
    %v3976 = vsel %vm2771, %v2423, -inf
    %v3977 = vrot.slane %v3976, 4
    %v3978 = vmax.f32 %v3976, %v3977
    %v3979 = vrot.slane %v3978, 2
    %v3980 = vmax.f32 %v3978, %v3979
    %v3981 = vrot.slane %v3980, 1
    %v3982 = vmax.f32 %v3980, %v3981
    %v3983 = vsel %vm2771, %v2612, -inf
    %v3984 = vrot.slane %v3983, 4
    %v3985 = vmax.f32 %v3983, %v3984
    %v3986 = vrot.slane %v3985, 2
    %v3987 = vmax.f32 %v3985, %v3986
    %v3988 = vrot.slane %v3987, 1
    %v3989 = vmax.f32 %v3987, %v3988
    %v3990 = vsel %vm2771, %v2613, -inf
    %v3991 = vrot.slane %v3990, 4
    %v3992 = vmax.f32 %v3990, %v3991
    %v3993 = vrot.slane %v3992, 2
    %v3994 = vmax.f32 %v3992, %v3993
    %v3995 = vrot.slane %v3994, 1
    %v3996 = vmax.f32 %v3994, %v3995
    %v3997 = vsel %vm2771, %v2614, -inf
    %v3998 = vrot.slane %v3997, 4
    %v3999 = vmax.f32 %v3997, %v3998
    %v4000 = vrot.slane %v3999, 2
    %v4001 = vmax.f32 %v3999, %v4000
    %v4002 = vrot.slane %v4001, 1
    %v4003 = vmax.f32 %v4001, %v4002
    %v4004 = vsel %vm2771, %v2426, -inf
    %v4005 = vrot.slane %v4004, 4
    %v4006 = vmax.f32 %v4004, %v4005
    %v4007 = vrot.slane %v4006, 2
    %v4008 = vmax.f32 %v4006, %v4007
    %v4009 = vrot.slane %v4008, 1
    %v4010 = vmax.f32 %v4008, %v4009
    %v4011 = vsel %vm2771, %v2615, -inf
    %v4012 = vrot.slane %v4011, 4
    %v4013 = vmax.f32 %v4011, %v4012
    %v4014 = vrot.slane %v4013, 2
    %v4015 = vmax.f32 %v4013, %v4014
    %v4016 = vrot.slane %v4015, 1
    %v4017 = vmax.f32 %v4015, %v4016
    %v4018 = vsel %vm2771, %v2616, -inf
    %v4019 = vrot.slane %v4018, 4
    %v4020 = vmax.f32 %v4018, %v4019
    %v4021 = vrot.slane %v4020, 2
    %v4022 = vmax.f32 %v4020, %v4021
    %v4023 = vrot.slane %v4022, 1
    %v4024 = vmax.f32 %v4022, %v4023
    %v4025 = vsel %vm2771, %v2617, -inf
    %v4026 = vrot.slane %v4025, 4
    %v4027 = vmax.f32 %v4025, %v4026
    %v4028 = vrot.slane %v4027, 2
    %v4029 = vmax.f32 %v4027, %v4028
    %v4030 = vrot.slane %v4029, 1
    %v4031 = vmax.f32 %v4029, %v4030
    %v4032 = vsel %vm2771, %v2428, -inf
    %v4033 = vrot.slane %v4032, 4
    %v4034 = vmax.f32 %v4032, %v4033
    %v4035 = vrot.slane %v4034, 2
    %v4036 = vmax.f32 %v4034, %v4035
    %v4037 = vrot.slane %v4036, 1
    %v4038 = vmax.f32 %v4036, %v4037
    %v4039 = vsel %vm2771, %v2618, -inf
    %v4040 = vrot.slane %v4039, 4
    %v4041 = vmax.f32 %v4039, %v4040
    %v4042 = vrot.slane %v4041, 2
    %v4043 = vmax.f32 %v4041, %v4042
    %v4044 = vrot.slane %v4043, 1
    %v4045 = vmax.f32 %v4043, %v4044
    %v4046 = vsel %vm2771, %v2619, -inf
    %v4047 = vrot.slane %v4046, 4
    %v4048 = vmax.f32 %v4046, %v4047
    %v4049 = vrot.slane %v4048, 2
    %v4050 = vmax.f32 %v4048, %v4049
    %v4051 = vrot.slane %v4050, 1
    %v4052 = vmax.f32 %v4050, %v4051
    %v4053 = vsel %vm2771, %v2620, -inf
    %v4054 = vrot.slane %v4053, 4
    %v4055 = vmax.f32 %v4053, %v4054
    %v4056 = vrot.slane %v4055, 2
    %v4057 = vmax.f32 %v4055, %v4056
    %v4058 = vrot.slane %v4057, 1
    %v4059 = vmax.f32 %v4057, %v4058
    %v4060 = vsel %vm2771, %v2431, -inf
    %v4061 = vrot.slane %v4060, 4
    %v4062 = vmax.f32 %v4060, %v4061
    %v4063 = vrot.slane %v4062, 2
    %v4064 = vmax.f32 %v4062, %v4063
    %v4065 = vrot.slane %v4064, 1
    %v4066 = vmax.f32 %v4064, %v4065
    %v4067 = vsel %vm2771, %v2621, -inf
    %v4068 = vrot.slane %v4067, 4
    %v4069 = vmax.f32 %v4067, %v4068
    %v4070 = vrot.slane %v4069, 2
    %v4071 = vmax.f32 %v4069, %v4070
    %v4072 = vrot.slane %v4071, 1
    %v4073 = vmax.f32 %v4071, %v4072
    %v4074 = vsel %vm2771, %v2622, -inf
    %v4075 = vrot.slane %v4074, 4
    %v4076 = vmax.f32 %v4074, %v4075
    %v4077 = vrot.slane %v4076, 2
    %v4078 = vmax.f32 %v4076, %v4077
    %v4079 = vrot.slane %v4078, 1
    %v4080 = vmax.f32 %v4078, %v4079
    %v4081 = vsel %vm2771, %v2623, -inf
    %v4082 = vrot.slane %v4081, 4
    %v4083 = vmax.f32 %v4081, %v4082
    %v4084 = vrot.slane %v4083, 2
    %v4085 = vmax.f32 %v4083, %v4084
    %v4086 = vrot.slane %v4085, 1
    %v4087 = vmax.f32 %v4085, %v4086
    %v4088 = vsel %vm2771, %v2433, -inf
    %v4089 = vrot.slane %v4088, 4
    %v4090 = vmax.f32 %v4088, %v4089
    %v4091 = vrot.slane %v4090, 2
    %v4092 = vmax.f32 %v4090, %v4091
    %v4093 = vrot.slane %v4092, 1
    %v4094 = vmax.f32 %v4092, %v4093
    %v4095 = vsel %vm2771, %v2624, -inf
    %v4096 = vrot.slane %v4095, 4
    %v4097 = vmax.f32 %v4095, %v4096
    %v4098 = vrot.slane %v4097, 2
    %v4099 = vmax.f32 %v4097, %v4098
    %v4100 = vrot.slane %v4099, 1
    %v4101 = vmax.f32 %v4099, %v4100
    %v4102 = vsel %vm2771, %v2625, -inf
    %v4103 = vrot.slane %v4102, 4
    %v4104 = vmax.f32 %v4102, %v4103
    %v4105 = vrot.slane %v4104, 2
    %v4106 = vmax.f32 %v4104, %v4105
    %v4107 = vrot.slane %v4106, 1
    %v4108 = vmax.f32 %v4106, %v4107
    %v4109 = vsel %vm2771, %v2626, -inf
    %v4110 = vrot.slane %v4109, 4
    %v4111 = vmax.f32 %v4109, %v4110
    %v4112 = vrot.slane %v4111, 2
    %v4113 = vmax.f32 %v4111, %v4112
    %v4114 = vrot.slane %v4113, 1
    %v4115 = vmax.f32 %v4113, %v4114
    %v4116 = vsel %vm2132, %v2778, -inf
    %v4117 = vsel %vm2132, %v2806, -inf
    %v4118 = vmax.f32 %v4116, %v4117
    %v4119 = vsel %vm2132, %v2785, -inf
    %v4120 = vsel %vm2132, %v2813, -inf
    %v4121 = vmax.f32 %v4119, %v4120
    %v4122 = vsel %vm2132, %v2792, -inf
    %v4123 = vsel %vm2132, %v2820, -inf
    %v4124 = vmax.f32 %v4122, %v4123
    %v4125 = vsel %vm2132, %v2799, -inf
    %v4126 = vsel %vm2132, %v2827, -inf
    %v4127 = vmax.f32 %v4125, %v4126
    %v4128 = vsel %vm2132, %v2834, -inf
    %v4129 = vsel %vm2132, %v2862, -inf
    %v4130 = vmax.f32 %v4128, %v4129
    %v4131 = vsel %vm2132, %v2841, -inf
    %v4132 = vsel %vm2132, %v2869, -inf
    %v4133 = vmax.f32 %v4131, %v4132
    %v4134 = vsel %vm2132, %v2848, -inf
    %v4135 = vsel %vm2132, %v2876, -inf
    %v4136 = vmax.f32 %v4134, %v4135
    %v4137 = vsel %vm2132, %v2855, -inf
    %v4138 = vsel %vm2132, %v2883, -inf
    %v4139 = vmax.f32 %v4137, %v4138
    %v4140 = vsel %vm2132, %v2890, -inf
    %v4141 = vsel %vm2132, %v2918, -inf
    %v4142 = vmax.f32 %v4140, %v4141
    %v4143 = vsel %vm2132, %v2897, -inf
    %v4144 = vsel %vm2132, %v2925, -inf
    %v4145 = vmax.f32 %v4143, %v4144
    %v4146 = vsel %vm2132, %v2904, -inf
    %v4147 = vsel %vm2132, %v2932, -inf
    %v4148 = vmax.f32 %v4146, %v4147
    %v4149 = vsel %vm2132, %v2911, -inf
    %v4150 = vsel %vm2132, %v2939, -inf
    %v4151 = vmax.f32 %v4149, %v4150
    %v4152 = vsel %vm2132, %v2946, -inf
    %v4153 = vsel %vm2132, %v2974, -inf
    %v4154 = vmax.f32 %v4152, %v4153
    %v4155 = vsel %vm2132, %v2953, -inf
    %v4156 = vsel %vm2132, %v2981, -inf
    %v4157 = vmax.f32 %v4155, %v4156
    %v4158 = vsel %vm2132, %v2960, -inf
    %v4159 = vsel %vm2132, %v2988, -inf
    %v4160 = vmax.f32 %v4158, %v4159
    %v4161 = vsel %vm2132, %v2967, -inf
    %v4162 = vsel %vm2132, %v2995, -inf
    %v4163 = vmax.f32 %v4161, %v4162
    %v4164 = vsel %vm2132, %v3002, -inf
    %v4165 = vsel %vm2132, %v3030, -inf
    %v4166 = vmax.f32 %v4164, %v4165
    %v4167 = vsel %vm2132, %v3009, -inf
    %v4168 = vsel %vm2132, %v3037, -inf
    %v4169 = vmax.f32 %v4167, %v4168
    %v4170 = vsel %vm2132, %v3016, -inf
    %v4171 = vsel %vm2132, %v3044, -inf
    %v4172 = vmax.f32 %v4170, %v4171
    %v4173 = vsel %vm2132, %v3023, -inf
    %v4174 = vsel %vm2132, %v3051, -inf
    %v4175 = vmax.f32 %v4173, %v4174
    %v4176 = vsel %vm2132, %v3058, -inf
    %v4177 = vsel %vm2132, %v3086, -inf
    %v4178 = vmax.f32 %v4176, %v4177
    %v4179 = vsel %vm2132, %v3065, -inf
    %v4180 = vsel %vm2132, %v3093, -inf
    %v4181 = vmax.f32 %v4179, %v4180
    %v4182 = vsel %vm2132, %v3072, -inf
    %v4183 = vsel %vm2132, %v3100, -inf
    %v4184 = vmax.f32 %v4182, %v4183
    %v4185 = vsel %vm2132, %v3079, -inf
    %v4186 = vsel %vm2132, %v3107, -inf
    %v4187 = vmax.f32 %v4185, %v4186
    %v4188 = vsel %vm2132, %v3114, -inf
    %v4189 = vsel %vm2132, %v3142, -inf
    %v4190 = vmax.f32 %v4188, %v4189
    %v4191 = vsel %vm2132, %v3121, -inf
    %v4192 = vsel %vm2132, %v3149, -inf
    %v4193 = vmax.f32 %v4191, %v4192
    %v4194 = vsel %vm2132, %v3128, -inf
    %v4195 = vsel %vm2132, %v3156, -inf
    %v4196 = vmax.f32 %v4194, %v4195
    %v4197 = vsel %vm2132, %v3135, -inf
    %v4198 = vsel %vm2132, %v3163, -inf
    %v4199 = vmax.f32 %v4197, %v4198
    %v4200 = vsel %vm2132, %v3170, -inf
    %v4201 = vsel %vm2132, %v3198, -inf
    %v4202 = vmax.f32 %v4200, %v4201
    %v4203 = vsel %vm2132, %v3177, -inf
    %v4204 = vsel %vm2132, %v3205, -inf
    %v4205 = vmax.f32 %v4203, %v4204
    %v4206 = vsel %vm2132, %v3184, -inf
    %v4207 = vsel %vm2132, %v3212, -inf
    %v4208 = vmax.f32 %v4206, %v4207
    %v4209 = vsel %vm2132, %v3191, -inf
    %v4210 = vsel %vm2132, %v3219, -inf
    %v4211 = vmax.f32 %v4209, %v4210
    %v4212 = vsel %vm2132, %v3226, -inf
    %v4213 = vsel %vm2132, %v3254, -inf
    %v4214 = vmax.f32 %v4212, %v4213
    %v4215 = vsel %vm2132, %v3233, -inf
    %v4216 = vsel %vm2132, %v3261, -inf
    %v4217 = vmax.f32 %v4215, %v4216
    %v4218 = vsel %vm2132, %v3240, -inf
    %v4219 = vsel %vm2132, %v3268, -inf
    %v4220 = vmax.f32 %v4218, %v4219
    %v4221 = vsel %vm2132, %v3247, -inf
    %v4222 = vsel %vm2132, %v3275, -inf
    %v4223 = vmax.f32 %v4221, %v4222
    %v4224 = vsel %vm2132, %v3282, -inf
    %v4225 = vsel %vm2132, %v3310, -inf
    %v4226 = vmax.f32 %v4224, %v4225
    %v4227 = vsel %vm2132, %v3289, -inf
    %v4228 = vsel %vm2132, %v3317, -inf
    %v4229 = vmax.f32 %v4227, %v4228
    %v4230 = vsel %vm2132, %v3296, -inf
    %v4231 = vsel %vm2132, %v3324, -inf
    %v4232 = vmax.f32 %v4230, %v4231
    %v4233 = vsel %vm2132, %v3303, -inf
    %v4234 = vsel %vm2132, %v3331, -inf
    %v4235 = vmax.f32 %v4233, %v4234
    %v4236 = vsel %vm2132, %v3338, -inf
    %v4237 = vsel %vm2132, %v3366, -inf
    %v4238 = vmax.f32 %v4236, %v4237
    %v4239 = vsel %vm2132, %v3345, -inf
    %v4240 = vsel %vm2132, %v3373, -inf
    %v4241 = vmax.f32 %v4239, %v4240
    %v4242 = vsel %vm2132, %v3352, -inf
    %v4243 = vsel %vm2132, %v3380, -inf
    %v4244 = vmax.f32 %v4242, %v4243
    %v4245 = vsel %vm2132, %v3359, -inf
    %v4246 = vsel %vm2132, %v3387, -inf
    %v4247 = vmax.f32 %v4245, %v4246
    %v4248 = vsel %vm2132, %v3394, -inf
    %v4249 = vsel %vm2132, %v3422, -inf
    %v4250 = vmax.f32 %v4248, %v4249
    %v4251 = vsel %vm2132, %v3401, -inf
    %v4252 = vsel %vm2132, %v3429, -inf
    %v4253 = vmax.f32 %v4251, %v4252
    %v4254 = vsel %vm2132, %v3408, -inf
    %v4255 = vsel %vm2132, %v3436, -inf
    %v4256 = vmax.f32 %v4254, %v4255
    %v4257 = vsel %vm2132, %v3415, -inf
    %v4258 = vsel %vm2132, %v3443, -inf
    %v4259 = vmax.f32 %v4257, %v4258
    %v4260 = vsel %vm2132, %v3450, -inf
    %v4261 = vsel %vm2132, %v3478, -inf
    %v4262 = vmax.f32 %v4260, %v4261
    %v4263 = vsel %vm2132, %v3457, -inf
    %v4264 = vsel %vm2132, %v3485, -inf
    %v4265 = vmax.f32 %v4263, %v4264
    %v4266 = vsel %vm2132, %v3464, -inf
    %v4267 = vsel %vm2132, %v3492, -inf
    %v4268 = vmax.f32 %v4266, %v4267
    %v4269 = vsel %vm2132, %v3471, -inf
    %v4270 = vsel %vm2132, %v3499, -inf
    %v4271 = vmax.f32 %v4269, %v4270
    %v4272 = vsel %vm2132, %v3506, -inf
    %v4273 = vsel %vm2132, %v3534, -inf
    %v4274 = vmax.f32 %v4272, %v4273
    %v4275 = vsel %vm2132, %v3513, -inf
    %v4276 = vsel %vm2132, %v3541, -inf
    %v4277 = vmax.f32 %v4275, %v4276
    %v4278 = vsel %vm2132, %v3520, -inf
    %v4279 = vsel %vm2132, %v3548, -inf
    %v4280 = vmax.f32 %v4278, %v4279
    %v4281 = vsel %vm2132, %v3527, -inf
    %v4282 = vsel %vm2132, %v3555, -inf
    %v4283 = vmax.f32 %v4281, %v4282
    %v4284 = vsel %vm2132, %v3562, -inf
    %v4285 = vsel %vm2132, %v3590, -inf
    %v4286 = vmax.f32 %v4284, %v4285
    %v4287 = vsel %vm2132, %v3569, -inf
    %v4288 = vsel %vm2132, %v3597, -inf
    %v4289 = vmax.f32 %v4287, %v4288
    %v4290 = vsel %vm2132, %v3576, -inf
    %v4291 = vsel %vm2132, %v3604, -inf
    %v4292 = vmax.f32 %v4290, %v4291
    %v4293 = vsel %vm2132, %v3583, -inf
    %v4294 = vsel %vm2132, %v3611, -inf
    %v4295 = vmax.f32 %v4293, %v4294
    %v4296 = vsel %vm2132, %v3618, -inf
    %v4297 = vsel %vm2132, %v3646, -inf
    %v4298 = vmax.f32 %v4296, %v4297
    %v4299 = vsel %vm2132, %v3625, -inf
    %v4300 = vsel %vm2132, %v3653, -inf
    %v4301 = vmax.f32 %v4299, %v4300
    %v4302 = vsel %vm2132, %v3632, -inf
    %v4303 = vsel %vm2132, %v3660, -inf
    %v4304 = vmax.f32 %v4302, %v4303
    %v4305 = vsel %vm2132, %v3639, -inf
    %v4306 = vsel %vm2132, %v3667, -inf
    %v4307 = vmax.f32 %v4305, %v4306
    %v4308 = vsel %vm2132, %v3674, -inf
    %v4309 = vsel %vm2132, %v3702, -inf
    %v4310 = vmax.f32 %v4308, %v4309
    %v4311 = vsel %vm2132, %v3681, -inf
    %v4312 = vsel %vm2132, %v3709, -inf
    %v4313 = vmax.f32 %v4311, %v4312
    %v4314 = vsel %vm2132, %v3688, -inf
    %v4315 = vsel %vm2132, %v3716, -inf
    %v4316 = vmax.f32 %v4314, %v4315
    %v4317 = vsel %vm2132, %v3695, -inf
    %v4318 = vsel %vm2132, %v3723, -inf
    %v4319 = vmax.f32 %v4317, %v4318
    %v4320 = vsel %vm2132, %v3730, -inf
    %v4321 = vsel %vm2132, %v3758, -inf
    %v4322 = vmax.f32 %v4320, %v4321
    %v4323 = vsel %vm2132, %v3737, -inf
    %v4324 = vsel %vm2132, %v3765, -inf
    %v4325 = vmax.f32 %v4323, %v4324
    %v4326 = vsel %vm2132, %v3744, -inf
    %v4327 = vsel %vm2132, %v3772, -inf
    %v4328 = vmax.f32 %v4326, %v4327
    %v4329 = vsel %vm2132, %v3751, -inf
    %v4330 = vsel %vm2132, %v3779, -inf
    %v4331 = vmax.f32 %v4329, %v4330
    %v4332 = vsel %vm2132, %v3786, -inf
    %v4333 = vsel %vm2132, %v3814, -inf
    %v4334 = vmax.f32 %v4332, %v4333
    %v4335 = vsel %vm2132, %v3793, -inf
    %v4336 = vsel %vm2132, %v3821, -inf
    %v4337 = vmax.f32 %v4335, %v4336
    %v4338 = vsel %vm2132, %v3800, -inf
    %v4339 = vsel %vm2132, %v3828, -inf
    %v4340 = vmax.f32 %v4338, %v4339
    %v4341 = vsel %vm2132, %v3807, -inf
    %v4342 = vsel %vm2132, %v3835, -inf
    %v4343 = vmax.f32 %v4341, %v4342
    %v4344 = vsel %vm2132, %v3842, -inf
    %v4345 = vsel %vm2132, %v3870, -inf
    %v4346 = vmax.f32 %v4344, %v4345
    %v4347 = vsel %vm2132, %v3849, -inf
    %v4348 = vsel %vm2132, %v3877, -inf
    %v4349 = vmax.f32 %v4347, %v4348
    %v4350 = vsel %vm2132, %v3856, -inf
    %v4351 = vsel %vm2132, %v3884, -inf
    %v4352 = vmax.f32 %v4350, %v4351
    %v4353 = vsel %vm2132, %v3863, -inf
    %v4354 = vsel %vm2132, %v3891, -inf
    %v4355 = vmax.f32 %v4353, %v4354
    %v4356 = vsel %vm2132, %v3898, -inf
    %v4357 = vsel %vm2132, %v3926, -inf
    %v4358 = vmax.f32 %v4356, %v4357
    %v4359 = vsel %vm2132, %v3905, -inf
    %v4360 = vsel %vm2132, %v3933, -inf
    %v4361 = vmax.f32 %v4359, %v4360
    %v4362 = vsel %vm2132, %v3912, -inf
    %v4363 = vsel %vm2132, %v3940, -inf
    %v4364 = vmax.f32 %v4362, %v4363
    %v4365 = vsel %vm2132, %v3919, -inf
    %v4366 = vsel %vm2132, %v3947, -inf
    %v4367 = vmax.f32 %v4365, %v4366
    %v4368 = vsel %vm2132, %v3954, -inf
    %v4369 = vsel %vm2132, %v3982, -inf
    %v4370 = vmax.f32 %v4368, %v4369
    %v4371 = vsel %vm2132, %v3961, -inf
    %v4372 = vsel %vm2132, %v3989, -inf
    %v4373 = vmax.f32 %v4371, %v4372
    %v4374 = vsel %vm2132, %v3968, -inf
    %v4375 = vsel %vm2132, %v3996, -inf
    %v4376 = vmax.f32 %v4374, %v4375
    %v4377 = vsel %vm2132, %v3975, -inf
    %v4378 = vsel %vm2132, %v4003, -inf
    %v4379 = vmax.f32 %v4377, %v4378
    %v4380 = vsel %vm2132, %v4010, -inf
    %v4381 = vsel %vm2132, %v4038, -inf
    %v4382 = vmax.f32 %v4380, %v4381
    %v4383 = vsel %vm2132, %v4017, -inf
    %v4384 = vsel %vm2132, %v4045, -inf
    %v4385 = vmax.f32 %v4383, %v4384
    %v4386 = vsel %vm2132, %v4024, -inf
    %v4387 = vsel %vm2132, %v4052, -inf
    %v4388 = vmax.f32 %v4386, %v4387
    %v4389 = vsel %vm2132, %v4031, -inf
    %v4390 = vsel %vm2132, %v4059, -inf
    %v4391 = vmax.f32 %v4389, %v4390
    %v4392 = vsel %vm2132, %v4066, -inf
    %v4393 = vsel %vm2132, %v4094, -inf
    %v4394 = vmax.f32 %v4392, %v4393
    %v4395 = vsel %vm2132, %v4073, -inf
    %v4396 = vsel %vm2132, %v4101, -inf
    %v4397 = vmax.f32 %v4395, %v4396
    %v4398 = vsel %vm2132, %v4080, -inf
    %v4399 = vsel %vm2132, %v4108, -inf
    %v4400 = vmax.f32 %v4398, %v4399
    %v4401 = vsel %vm2132, %v4087, -inf
    %v4402 = vsel %vm2132, %v4115, -inf
    %v4403 = vmax.f32 %v4401, %v4402
    %vm4500 = vcmask 1041409
    %v4501 = vsel %vm4500, %v4121, %v4118
    %vm4502 = vcmask 1042434
    %v4503 = vsel %vm4502, %v4124, %v4501
    %vm4504 = vcmask 1043459
    %v4505 = vsel %vm4504, %v4127, %v4503
    %v4506 = vsel %vm4500, %v4133, %v4130
    %v4507 = vsel %vm4502, %v4136, %v4506
    %v4508 = vsel %vm4504, %v4139, %v4507
    %v4509 = vsel %vm4500, %v4145, %v4142
    %v4510 = vsel %vm4502, %v4148, %v4509
    %v4511 = vsel %vm4504, %v4151, %v4510
    %v4512 = vsel %vm4500, %v4157, %v4154
    %v4513 = vsel %vm4502, %v4160, %v4512
    %v4514 = vsel %vm4504, %v4163, %v4513
    %v4515 = vsel %vm4500, %v4169, %v4166
    %v4516 = vsel %vm4502, %v4172, %v4515
    %v4517 = vsel %vm4504, %v4175, %v4516
    %v4518 = vsel %vm4500, %v4181, %v4178
    %v4519 = vsel %vm4502, %v4184, %v4518
    %v4520 = vsel %vm4504, %v4187, %v4519
    %v4521 = vsel %vm4500, %v4193, %v4190
    %v4522 = vsel %vm4502, %v4196, %v4521
    %v4523 = vsel %vm4504, %v4199, %v4522
    %v4524 = vsel %vm4500, %v4205, %v4202
    %v4525 = vsel %vm4502, %v4208, %v4524
    %v4526 = vsel %vm4504, %v4211, %v4525
    %v4527 = vsel %vm4500, %v4217, %v4214
    %v4528 = vsel %vm4502, %v4220, %v4527
    %v4529 = vsel %vm4504, %v4223, %v4528
    %v4530 = vsel %vm4500, %v4229, %v4226
    %v4531 = vsel %vm4502, %v4232, %v4530
    %v4532 = vsel %vm4504, %v4235, %v4531
    %v4533 = vsel %vm4500, %v4241, %v4238
    %v4534 = vsel %vm4502, %v4244, %v4533
    %v4535 = vsel %vm4504, %v4247, %v4534
    %v4536 = vsel %vm4500, %v4253, %v4250
    %v4537 = vsel %vm4502, %v4256, %v4536
    %v4538 = vsel %vm4504, %v4259, %v4537
    %v4539 = vsel %vm4500, %v4265, %v4262
    %v4540 = vsel %vm4502, %v4268, %v4539
    %v4541 = vsel %vm4504, %v4271, %v4540
    %v4542 = vsel %vm4500, %v4277, %v4274
    %v4543 = vsel %vm4502, %v4280, %v4542
    %v4544 = vsel %vm4504, %v4283, %v4543
    %v4545 = vsel %vm4500, %v4289, %v4286
    %v4546 = vsel %vm4502, %v4292, %v4545
    %v4547 = vsel %vm4504, %v4295, %v4546
    %v4548 = vsel %vm4500, %v4301, %v4298
    %v4549 = vsel %vm4502, %v4304, %v4548
    %v4550 = vsel %vm4504, %v4307, %v4549
    %v4551 = vsel %vm4500, %v4313, %v4310
    %v4552 = vsel %vm4502, %v4316, %v4551
    %v4553 = vsel %vm4504, %v4319, %v4552
    %v4554 = vsel %vm4500, %v4325, %v4322
    %v4555 = vsel %vm4502, %v4328, %v4554
    %v4556 = vsel %vm4504, %v4331, %v4555
    %v4557 = vsel %vm4500, %v4337, %v4334
    %v4558 = vsel %vm4502, %v4340, %v4557
    %v4559 = vsel %vm4504, %v4343, %v4558
    %v4560 = vsel %vm4500, %v4349, %v4346
    %v4561 = vsel %vm4502, %v4352, %v4560
    %v4562 = vsel %vm4504, %v4355, %v4561
    %v4563 = vsel %vm4500, %v4361, %v4358
    %v4564 = vsel %vm4502, %v4364, %v4563
    %v4565 = vsel %vm4504, %v4367, %v4564
    %v4566 = vsel %vm4500, %v4373, %v4370
    %v4567 = vsel %vm4502, %v4376, %v4566
    %v4568 = vsel %vm4504, %v4379, %v4567
    %v4569 = vsel %vm4500, %v4385, %v4382
    %v4570 = vsel %vm4502, %v4388, %v4569
    %v4571 = vsel %vm4504, %v4391, %v4570
    %v4572 = vsel %vm4500, %v4397, %v4394
    %v4573 = vsel %vm4502, %v4400, %v4572
    %v4574 = vsel %vm4504, %v4403, %v4573
    %v4575 = vrot.slane %v4505, 7
    %v4576 = vrot.slane %v4508, 7
    %v4577 = vrot.slane %v4511, 7
    %v4578 = vrot.slane %v4514, 7
    %v4579 = vrot.slane %v4517, 7
    %v4580 = vrot.slane %v4520, 7
    %v4581 = vrot.slane %v4523, 7
    %v4582 = vrot.slane %v4526, 7
    %v4583 = vrot.slane %v4529, 7
    %v4584 = vrot.slane %v4532, 7
    %v4585 = vrot.slane %v4535, 7
    %v4586 = vrot.slane %v4538, 7
    %v4587 = vrot.slane %v4541, 7
    %v4588 = vrot.slane %v4544, 7
    %v4589 = vrot.slane %v4547, 7
    %v4590 = vrot.slane %v4550, 7
    %v4591 = vrot.slane %v4553, 7
    %v4592 = vrot.slane %v4556, 7
    %v4593 = vrot.slane %v4559, 7
    %v4594 = vrot.slane %v4562, 7
    %v4595 = vrot.slane %v4565, 7
    %v4596 = vrot.slane %v4568, 7
    %v4597 = vrot.slane %v4571, 7
    %v4598 = vrot.slane %v4574, 7
    %v4623 = vsel %vm229, 0.0, %v4575
    %v4624 = vsel %vm229, 0.0, %v4576
    %v4625 = vsel %vm229, 0.0, %v4577
    %v4626 = vsel %vm229, 0.0, %v4578
    %v4627 = vsel %vm229, 0.0, %v4579
    %v4628 = vsel %vm229, 0.0, %v4580
    %v4629 = vsel %vm229, 0.0, %v4581
    %v4630 = vsel %vm229, 0.0, %v4582
    %v4631 = vsel %vm229, 0.0, %v4583
    %v4632 = vsel %vm229, 0.0, %v4584
    %v4633 = vsel %vm229, 0.0, %v4585
    %v4634 = vsel %vm229, 0.0, %v4586
    %v4635 = vsel %vm229, 0.0, %v4587
    %v4636 = vsel %vm229, 0.0, %v4588
    %v4637 = vsel %vm229, 0.0, %v4589
    %v4638 = vsel %vm229, 0.0, %v4590
    %v4639 = vsel %vm229, 0.0, %v4591
    %v4640 = vsel %vm229, 0.0, %v4592
    %v4641 = vsel %vm229, 0.0, %v4593
    %v4642 = vsel %vm229, 0.0, %v4594
    %v4643 = vsel %vm229, 0.0, %v4595
    %v4644 = vsel %vm229, 0.0, %v4596
    %v4645 = vsel %vm229, 0.0, %v4597
    %v4646 = vsel %vm229, 0.0, %v4598
    %vm4647 = vcmask 1044480
    %v4648 = vsel %vm4647, %v230, 0.0
    %v4649 = vsel %vm4647, %v4623, 0.0
    %v4650 = vsel %vm4647, %v4624, 0.0
    %v4651 = vsel %vm4647, %v4625, 0.0
    %v4652 = vsel %vm4647, %v4626, 0.0
    %v4653 = vsel %vm4647, %v4627, 0.0
    %v4654 = vsel %vm4647, %v4628, 0.0
    %v4655 = vsel %vm4647, %v4629, 0.0
    %v4656 = vsel %vm4647, %v4630, 0.0
    %v4657 = vsel %vm4647, %v4631, 0.0
    %v4658 = vsel %vm4647, %v4632, 0.0
    %v4659 = vsel %vm4647, %v4633, 0.0
    %v4660 = vsel %vm4647, %v4634, 0.0
    %v4661 = vsel %vm4647, %v4635, 0.0
    %v4662 = vsel %vm4647, %v4636, 0.0
    %v4663 = vsel %vm4647, %v4637, 0.0
    %v4664 = vsel %vm4647, %v4638, 0.0
    %v4665 = vsel %vm4647, %v4639, 0.0
    %v4666 = vsel %vm4647, %v4640, 0.0
    %v4667 = vsel %vm4647, %v4641, 0.0
    %v4668 = vsel %vm4647, %v4642, 0.0
    %v4669 = vsel %vm4647, %v4643, 0.0
    %v4670 = vsel %vm4647, %v4644, 0.0
    %v4671 = vsel %vm4647, %v4645, 0.0
    %v4672 = vsel %vm4647, %v4646, 0.0
    %v4692 = vrot.slane %v4648, 1
    %v4693 = vrot.slane %v4649, 1
    %v4694 = vrot.slane %v4650, 1
    %v4695 = vrot.slane %v4651, 1
    %v4696 = vrot.slane %v4653, 1
    %v4697 = vrot.slane %v4654, 1
    %v4698 = vrot.slane %v4655, 1
    %v4699 = vrot.slane %v4657, 1
    %v4700 = vrot.slane %v4658, 1
    %v4701 = vrot.slane %v4659, 1
    %v4702 = vrot.slane %v4661, 1
    %v4703 = vrot.slane %v4662, 1
    %v4704 = vrot.slane %v4663, 1
    %v4705 = vrot.slane %v4665, 1
    %v4706 = vrot.slane %v4666, 1
    %v4707 = vrot.slane %v4667, 1
    %v4708 = vrot.slane %v4669, 1
    %v4709 = vrot.slane %v4670, 1
    %v4710 = vrot.slane %v4671, 1
    %4711 = vrot.lane.b32.xlu0 %v4692, 32
    %v4712 = vpop.permute.xlu0 %4711
    %4713 = vrot.lane.b32.xlu0 %v4693, 32
    %v4714 = vpop.permute.xlu0 %4713
    %4715 = vrot.lane.b32.xlu0 %v4694, 32
    %v4716 = vpop.permute.xlu0 %4715
    %4717 = vrot.lane.b32.xlu0 %v4695, 32
    %v4718 = vpop.permute.xlu0 %4717
    %4719 = vrot.lane.b32.xlu0 %v4696, 32
    %v4720 = vpop.permute.xlu0 %4719
    %4721 = vrot.lane.b32.xlu0 %v4697, 32
    %v4722 = vpop.permute.xlu0 %4721
    %4723 = vrot.lane.b32.xlu0 %v4698, 32
    %v4724 = vpop.permute.xlu0 %4723
    %4725 = vrot.lane.b32.xlu0 %v4699, 32
    %v4726 = vpop.permute.xlu0 %4725
    %4727 = vrot.lane.b32.xlu0 %v4700, 32
    %v4728 = vpop.permute.xlu0 %4727
    %4729 = vrot.lane.b32.xlu0 %v4701, 32
    %v4730 = vpop.permute.xlu0 %4729
    %4731 = vrot.lane.b32.xlu0 %v4702, 32
    %v4732 = vpop.permute.xlu0 %4731
    %4733 = vrot.lane.b32.xlu0 %v4703, 32
    %v4734 = vpop.permute.xlu0 %4733
    %4735 = vrot.lane.b32.xlu0 %v4704, 32
    %v4736 = vpop.permute.xlu0 %4735
    %4737 = vrot.lane.b32.xlu0 %v4705, 32
    %v4738 = vpop.permute.xlu0 %4737
    %4739 = vrot.lane.b32.xlu0 %v4706, 32
    %v4740 = vpop.permute.xlu0 %4739
    %4741 = vrot.lane.b32.xlu0 %v4707, 32
    %v4742 = vpop.permute.xlu0 %4741
    %4743 = vrot.lane.b32.xlu0 %v4708, 32
    %v4744 = vpop.permute.xlu0 %4743
    %4745 = vrot.lane.b32.xlu0 %v4709, 32
    %v4746 = vpop.permute.xlu0 %4745
    %4747 = vrot.lane.b32.xlu0 %v4710, 32
    %v4748 = vpop.permute.xlu0 %4747
    %v4768 = vrot.slane %v4648, 2
    %v4769 = vrot.slane %v4649, 2
    %v4770 = vrot.slane %v4650, 2
    %v4771 = vrot.slane %v4651, 2
    %v4772 = vrot.slane %v4653, 2
    %v4773 = vrot.slane %v4654, 2
    %v4774 = vrot.slane %v4655, 2
    %v4775 = vrot.slane %v4657, 2
    %v4776 = vrot.slane %v4658, 2
    %v4777 = vrot.slane %v4659, 2
    %v4778 = vrot.slane %v4661, 2
    %v4779 = vrot.slane %v4662, 2
    %v4780 = vrot.slane %v4663, 2
    %v4781 = vrot.slane %v4665, 2
    %v4782 = vrot.slane %v4666, 2
    %v4783 = vrot.slane %v4667, 2
    %v4784 = vrot.slane %v4669, 2
    %v4785 = vrot.slane %v4670, 2
    %v4786 = vrot.slane %v4671, 2
    %4787 = vrot.lane.b32.xlu0 %v4768, 64
    %v4788 = vpop.permute.xlu0 %4787
    %4789 = vrot.lane.b32.xlu0 %v4769, 64
    %v4790 = vpop.permute.xlu0 %4789
    %4791 = vrot.lane.b32.xlu0 %v4770, 64
    %v4792 = vpop.permute.xlu0 %4791
    %4793 = vrot.lane.b32.xlu0 %v4771, 64
    %v4794 = vpop.permute.xlu0 %4793
    %4795 = vrot.lane.b32.xlu0 %v4772, 64
    %v4796 = vpop.permute.xlu0 %4795
    %4797 = vrot.lane.b32.xlu0 %v4773, 64
    %v4798 = vpop.permute.xlu0 %4797
    %4799 = vrot.lane.b32.xlu0 %v4774, 64
    %v4800 = vpop.permute.xlu0 %4799
    %4801 = vrot.lane.b32.xlu0 %v4775, 64
    %v4802 = vpop.permute.xlu0 %4801
    %4803 = vrot.lane.b32.xlu0 %v4776, 64
    %v4804 = vpop.permute.xlu0 %4803
    %4805 = vrot.lane.b32.xlu0 %v4777, 64
    %v4806 = vpop.permute.xlu0 %4805
    %4807 = vrot.lane.b32.xlu0 %v4778, 64
    %v4808 = vpop.permute.xlu0 %4807
    %4809 = vrot.lane.b32.xlu0 %v4779, 64
    %v4810 = vpop.permute.xlu0 %4809
    %4811 = vrot.lane.b32.xlu0 %v4780, 64
    %v4812 = vpop.permute.xlu0 %4811
    %4813 = vrot.lane.b32.xlu0 %v4781, 64
    %v4814 = vpop.permute.xlu0 %4813
    %4815 = vrot.lane.b32.xlu0 %v4782, 64
    %v4816 = vpop.permute.xlu0 %4815
    %4817 = vrot.lane.b32.xlu0 %v4783, 64
    %v4818 = vpop.permute.xlu0 %4817
    %4819 = vrot.lane.b32.xlu0 %v4784, 64
    %v4820 = vpop.permute.xlu0 %4819
    %4821 = vrot.lane.b32.xlu0 %v4785, 64
    %v4822 = vpop.permute.xlu0 %4821
    %4823 = vrot.lane.b32.xlu0 %v4786, 64
    %v4824 = vpop.permute.xlu0 %4823
    %4850 = vrot.lane.b32.xlu0 %v4649, 96
    %v4851 = vpop.permute.xlu0 %4850
    %4852 = vrot.lane.b32.xlu0 %v4650, 96
    %v4853 = vpop.permute.xlu0 %4852
    %4854 = vrot.lane.b32.xlu0 %v4651, 96
    %v4855 = vpop.permute.xlu0 %4854
    %4856 = vrot.lane.b32.xlu0 %v4652, 96
    %v4857 = vpop.permute.xlu0 %4856
    %4858 = vrot.lane.b32.xlu0 %v4653, 96
    %v4859 = vpop.permute.xlu0 %4858
    %4860 = vrot.lane.b32.xlu0 %v4654, 96
    %v4861 = vpop.permute.xlu0 %4860
    %4862 = vrot.lane.b32.xlu0 %v4655, 96
    %v4863 = vpop.permute.xlu0 %4862
    %4864 = vrot.lane.b32.xlu0 %v4656, 96
    %v4865 = vpop.permute.xlu0 %4864
    %4866 = vrot.lane.b32.xlu0 %v4657, 96
    %v4867 = vpop.permute.xlu0 %4866
    %4868 = vrot.lane.b32.xlu0 %v4658, 96
    %v4869 = vpop.permute.xlu0 %4868
    %4870 = vrot.lane.b32.xlu0 %v4659, 96
    %v4871 = vpop.permute.xlu0 %4870
    %4872 = vrot.lane.b32.xlu0 %v4660, 96
    %v4873 = vpop.permute.xlu0 %4872
    %4874 = vrot.lane.b32.xlu0 %v4661, 96
    %v4875 = vpop.permute.xlu0 %4874
    %4876 = vrot.lane.b32.xlu0 %v4662, 96
    %v4877 = vpop.permute.xlu0 %4876
    %4878 = vrot.lane.b32.xlu0 %v4663, 96
    %v4879 = vpop.permute.xlu0 %4878
    %4880 = vrot.lane.b32.xlu0 %v4664, 96
    %v4881 = vpop.permute.xlu0 %4880
    %4882 = vrot.lane.b32.xlu0 %v4665, 96
    %v4883 = vpop.permute.xlu0 %4882
    %4884 = vrot.lane.b32.xlu0 %v4666, 96
    %v4885 = vpop.permute.xlu0 %4884
    %4886 = vrot.lane.b32.xlu0 %v4667, 96
    %v4887 = vpop.permute.xlu0 %4886
    %4888 = vrot.lane.b32.xlu0 %v4668, 96
    %v4889 = vpop.permute.xlu0 %4888
    %4890 = vrot.lane.b32.xlu0 %v4669, 96
    %v4891 = vpop.permute.xlu0 %4890
    %4892 = vrot.lane.b32.xlu0 %v4670, 96
    %v4893 = vpop.permute.xlu0 %4892
    %4894 = vrot.lane.b32.xlu0 %v4671, 96
    %v4895 = vpop.permute.xlu0 %4894
    %4896 = vrot.lane.b32.xlu0 %v4672, 96
    %v4897 = vpop.permute.xlu0 %4896
    %v4922 = vrot.slane %v4652, 1
    %v4923 = vrot.slane %v4656, 1
    %v4924 = vrot.slane %v4660, 1
    %v4925 = vrot.slane %v4664, 1
    %v4926 = vrot.slane %v4668, 1
    %v4927 = vrot.slane %v4672, 1
    %v4952 = vrot.slane %v4652, 2
    %v4953 = vrot.slane %v4656, 2
    %v4954 = vrot.slane %v4660, 2
    %v4955 = vrot.slane %v4664, 2
    %v4956 = vrot.slane %v4668, 2
    %v4957 = vrot.slane %v4672, 2
    %4958 = vrot.lane.b32.xlu0 %v4769, 32
    %v4959 = vpop.permute.xlu0 %4958
    %4960 = vrot.lane.b32.xlu0 %v4770, 32
    %v4961 = vpop.permute.xlu0 %4960
    %4962 = vrot.lane.b32.xlu0 %v4771, 32
    %v4963 = vpop.permute.xlu0 %4962
    %4964 = vrot.lane.b32.xlu0 %v4952, 32
    %v4965 = vpop.permute.xlu0 %4964
    %4966 = vrot.lane.b32.xlu0 %v4772, 32
    %v4967 = vpop.permute.xlu0 %4966
    %4968 = vrot.lane.b32.xlu0 %v4773, 32
    %v4969 = vpop.permute.xlu0 %4968
    %4970 = vrot.lane.b32.xlu0 %v4774, 32
    %v4971 = vpop.permute.xlu0 %4970
    %4972 = vrot.lane.b32.xlu0 %v4953, 32
    %v4973 = vpop.permute.xlu0 %4972
    %4974 = vrot.lane.b32.xlu0 %v4775, 32
    %v4975 = vpop.permute.xlu0 %4974
    %4976 = vrot.lane.b32.xlu0 %v4776, 32
    %v4977 = vpop.permute.xlu0 %4976
    %4978 = vrot.lane.b32.xlu0 %v4777, 32
    %v4979 = vpop.permute.xlu0 %4978
    %4980 = vrot.lane.b32.xlu0 %v4954, 32
    %v4981 = vpop.permute.xlu0 %4980
    %4982 = vrot.lane.b32.xlu0 %v4778, 32
    %v4983 = vpop.permute.xlu0 %4982
    %4984 = vrot.lane.b32.xlu0 %v4779, 32
    %v4985 = vpop.permute.xlu0 %4984
    %4986 = vrot.lane.b32.xlu0 %v4780, 32
    %v4987 = vpop.permute.xlu0 %4986
    %4988 = vrot.lane.b32.xlu0 %v4955, 32
    %v4989 = vpop.permute.xlu0 %4988
    %4990 = vrot.lane.b32.xlu0 %v4781, 32
    %v4991 = vpop.permute.xlu0 %4990
    %4992 = vrot.lane.b32.xlu0 %v4782, 32
    %v4993 = vpop.permute.xlu0 %4992
    %4994 = vrot.lane.b32.xlu0 %v4783, 32
    %v4995 = vpop.permute.xlu0 %4994
    %4996 = vrot.lane.b32.xlu0 %v4956, 32
    %v4997 = vpop.permute.xlu0 %4996
    %4998 = vrot.lane.b32.xlu0 %v4784, 32
    %v4999 = vpop.permute.xlu0 %4998
    %5000 = vrot.lane.b32.xlu0 %v4785, 32
    %v5001 = vpop.permute.xlu0 %5000
    %5002 = vrot.lane.b32.xlu0 %v4786, 32
    %v5003 = vpop.permute.xlu0 %5002
    %5004 = vrot.lane.b32.xlu0 %v4957, 32
    %v5005 = vpop.permute.xlu0 %5004
    %5030 = vrot.lane.b32.xlu0 %v4650, 64
    %v5031 = vpop.permute.xlu0 %5030
    %5032 = vrot.lane.b32.xlu0 %v4651, 64
    %v5033 = vpop.permute.xlu0 %5032
    %5034 = vrot.lane.b32.xlu0 %v4652, 64
    %v5035 = vpop.permute.xlu0 %5034
    %5036 = vrot.lane.b32.xlu0 %v4648, 64
    %v5037 = vpop.permute.xlu0 %5036
    %5038 = vrot.lane.b32.xlu0 %v4654, 64
    %v5039 = vpop.permute.xlu0 %5038
    %5040 = vrot.lane.b32.xlu0 %v4655, 64
    %v5041 = vpop.permute.xlu0 %5040
    %5042 = vrot.lane.b32.xlu0 %v4656, 64
    %v5043 = vpop.permute.xlu0 %5042
    %5044 = vrot.lane.b32.xlu0 %v4658, 64
    %v5045 = vpop.permute.xlu0 %5044
    %5046 = vrot.lane.b32.xlu0 %v4659, 64
    %v5047 = vpop.permute.xlu0 %5046
    %5048 = vrot.lane.b32.xlu0 %v4660, 64
    %v5049 = vpop.permute.xlu0 %5048
    %5050 = vrot.lane.b32.xlu0 %v4662, 64
    %v5051 = vpop.permute.xlu0 %5050
    %5052 = vrot.lane.b32.xlu0 %v4663, 64
    %v5053 = vpop.permute.xlu0 %5052
    %5054 = vrot.lane.b32.xlu0 %v4664, 64
    %v5055 = vpop.permute.xlu0 %5054
    %5056 = vrot.lane.b32.xlu0 %v4666, 64
    %v5057 = vpop.permute.xlu0 %5056
    %5058 = vrot.lane.b32.xlu0 %v4667, 64
    %v5059 = vpop.permute.xlu0 %5058
    %5060 = vrot.lane.b32.xlu0 %v4668, 64
    %v5061 = vpop.permute.xlu0 %5060
    %5062 = vrot.lane.b32.xlu0 %v4670, 64
    %v5063 = vpop.permute.xlu0 %5062
    %5064 = vrot.lane.b32.xlu0 %v4671, 64
    %v5065 = vpop.permute.xlu0 %5064
    %5066 = vrot.lane.b32.xlu0 %v4672, 64
    %v5067 = vpop.permute.xlu0 %5066
    %5087 = vrot.lane.b32.xlu0 %v4694, 96
    %v5088 = vpop.permute.xlu0 %5087
    %5089 = vrot.lane.b32.xlu0 %v4695, 96
    %v5090 = vpop.permute.xlu0 %5089
    %5091 = vrot.lane.b32.xlu0 %v4922, 96
    %v5092 = vpop.permute.xlu0 %5091
    %5093 = vrot.lane.b32.xlu0 %v4692, 96
    %v5094 = vpop.permute.xlu0 %5093
    %5095 = vrot.lane.b32.xlu0 %v4697, 96
    %v5096 = vpop.permute.xlu0 %5095
    %5097 = vrot.lane.b32.xlu0 %v4698, 96
    %v5098 = vpop.permute.xlu0 %5097
    %5099 = vrot.lane.b32.xlu0 %v4923, 96
    %v5100 = vpop.permute.xlu0 %5099
    %5101 = vrot.lane.b32.xlu0 %v4700, 96
    %v5102 = vpop.permute.xlu0 %5101
    %5103 = vrot.lane.b32.xlu0 %v4701, 96
    %v5104 = vpop.permute.xlu0 %5103
    %5105 = vrot.lane.b32.xlu0 %v4924, 96
    %v5106 = vpop.permute.xlu0 %5105
    %5107 = vrot.lane.b32.xlu0 %v4703, 96
    %v5108 = vpop.permute.xlu0 %5107
    %5109 = vrot.lane.b32.xlu0 %v4704, 96
    %v5110 = vpop.permute.xlu0 %5109
    %5111 = vrot.lane.b32.xlu0 %v4925, 96
    %v5112 = vpop.permute.xlu0 %5111
    %5113 = vrot.lane.b32.xlu0 %v4706, 96
    %v5114 = vpop.permute.xlu0 %5113
    %5115 = vrot.lane.b32.xlu0 %v4707, 96
    %v5116 = vpop.permute.xlu0 %5115
    %5117 = vrot.lane.b32.xlu0 %v4926, 96
    %v5118 = vpop.permute.xlu0 %5117
    %5119 = vrot.lane.b32.xlu0 %v4709, 96
    %v5120 = vpop.permute.xlu0 %5119
    %5121 = vrot.lane.b32.xlu0 %v4710, 96
    %v5122 = vpop.permute.xlu0 %5121
    %5123 = vrot.lane.b32.xlu0 %v4927, 96
    %v5124 = vpop.permute.xlu0 %5123
    %v5144 = vsel %vm2132, %v4648, %v4712
    %v5145 = vsel %vm2132, %v4649, %v4714
    %v5146 = vsel %vm2132, %v4650, %v4716
    %v5147 = vsel %vm2132, %v4651, %v4718
    %v5148 = vsel %vm2132, %v4653, %v4720
    %v5149 = vsel %vm2132, %v4654, %v4722
    %v5150 = vsel %vm2132, %v4655, %v4724
    %v5151 = vsel %vm2132, %v4657, %v4726
    %v5152 = vsel %vm2132, %v4658, %v4728
    %v5153 = vsel %vm2132, %v4659, %v4730
    %v5154 = vsel %vm2132, %v4661, %v4732
    %v5155 = vsel %vm2132, %v4662, %v4734
    %v5156 = vsel %vm2132, %v4663, %v4736
    %v5157 = vsel %vm2132, %v4665, %v4738
    %v5158 = vsel %vm2132, %v4666, %v4740
    %v5159 = vsel %vm2132, %v4667, %v4742
    %v5160 = vsel %vm2132, %v4669, %v4744
    %v5161 = vsel %vm2132, %v4670, %v4746
    %v5162 = vsel %vm2132, %v4671, %v4748
    %vm5163 = vcmask 523264
    %v5164 = vsel %vm5163, %v5144, %v4788
    %v5165 = vsel %vm5163, %v5145, %v4790
    %v5166 = vsel %vm5163, %v5146, %v4792
    %v5167 = vsel %vm5163, %v5147, %v4794
    %v5168 = vsel %vm5163, %v5148, %v4796
    %v5169 = vsel %vm5163, %v5149, %v4798
    %v5170 = vsel %vm5163, %v5150, %v4800
    %v5171 = vsel %vm5163, %v5151, %v4802
    %v5172 = vsel %vm5163, %v5152, %v4804
    %v5173 = vsel %vm5163, %v5153, %v4806
    %v5174 = vsel %vm5163, %v5154, %v4808
    %v5175 = vsel %vm5163, %v5155, %v4810
    %v5176 = vsel %vm5163, %v5156, %v4812
    %v5177 = vsel %vm5163, %v5157, %v4814
    %v5178 = vsel %vm5163, %v5158, %v4816
    %v5179 = vsel %vm5163, %v5159, %v4818
    %v5180 = vsel %vm5163, %v5160, %v4820
    %v5181 = vsel %vm5163, %v5161, %v4822
    %v5182 = vsel %vm5163, %v5162, %v4824
    %vm5183 = vcmask 785408
    %v5184 = vsel %vm5183, %v5164, %v4851
    %v5185 = vsel %vm5183, %v5165, %v4853
    %v5186 = vsel %vm5183, %v5166, %v4855
    %v5187 = vsel %vm5183, %v5167, %v4857
    %v5188 = vsel %vm5183, %v5164, %v4859
    %v5189 = vsel %vm5183, %v5168, %v4861
    %v5190 = vsel %vm5183, %v5169, %v4863
    %v5191 = vsel %vm5183, %v5170, %v4865
    %v5192 = vsel %vm5183, %v5164, %v4867
    %v5193 = vsel %vm5183, %v5171, %v4869
    %v5194 = vsel %vm5183, %v5172, %v4871
    %v5195 = vsel %vm5183, %v5173, %v4873
    %v5196 = vsel %vm5183, %v5164, %v4875
    %v5197 = vsel %vm5183, %v5174, %v4877
    %v5198 = vsel %vm5183, %v5175, %v4879
    %v5199 = vsel %vm5183, %v5176, %v4881
    %v5200 = vsel %vm5183, %v5164, %v4883
    %v5201 = vsel %vm5183, %v5177, %v4885
    %v5202 = vsel %vm5183, %v5178, %v4887
    %v5203 = vsel %vm5183, %v5179, %v4889
    %v5204 = vsel %vm5183, %v5164, %v4891
    %v5205 = vsel %vm5183, %v5180, %v4893
    %v5206 = vsel %vm5183, %v5181, %v4895
    %v5207 = vsel %vm5183, %v5182, %v4897
    %v5208 = vsel %vm2132, %v4693, %v4959
    %v5209 = vsel %vm2132, %v4694, %v4961
    %v5210 = vsel %vm2132, %v4695, %v4963
    %v5211 = vsel %vm2132, %v4922, %v4965
    %v5212 = vsel %vm2132, %v4696, %v4967
    %v5213 = vsel %vm2132, %v4697, %v4969
    %v5214 = vsel %vm2132, %v4698, %v4971
    %v5215 = vsel %vm2132, %v4923, %v4973
    %v5216 = vsel %vm2132, %v4699, %v4975
    %v5217 = vsel %vm2132, %v4700, %v4977
    %v5218 = vsel %vm2132, %v4701, %v4979
    %v5219 = vsel %vm2132, %v4924, %v4981
    %v5220 = vsel %vm2132, %v4702, %v4983
    %v5221 = vsel %vm2132, %v4703, %v4985
    %v5222 = vsel %vm2132, %v4704, %v4987
    %v5223 = vsel %vm2132, %v4925, %v4989
    %v5224 = vsel %vm2132, %v4705, %v4991
    %v5225 = vsel %vm2132, %v4706, %v4993
    %v5226 = vsel %vm2132, %v4707, %v4995
    %v5227 = vsel %vm2132, %v4926, %v4997
    %v5228 = vsel %vm2132, %v4708, %v4999
    %v5229 = vsel %vm2132, %v4709, %v5001
    %v5230 = vsel %vm2132, %v4710, %v5003
    %v5231 = vsel %vm2132, %v4927, %v5005
    %v5232 = vsel %vm5163, %v5208, %v5031
    %v5233 = vsel %vm5163, %v5209, %v5033
    %v5234 = vsel %vm5163, %v5210, %v5035
    %v5235 = vsel %vm5163, %v5211, %v5037
    %v5236 = vsel %vm5163, %v5212, %v5039
    %v5237 = vsel %vm5163, %v5213, %v5041
    %v5238 = vsel %vm5163, %v5214, %v5043
    %v5239 = vsel %vm5163, %v5215, %v5037
    %v5240 = vsel %vm5163, %v5216, %v5045
    %v5241 = vsel %vm5163, %v5217, %v5047
    %v5242 = vsel %vm5163, %v5218, %v5049
    %v5243 = vsel %vm5163, %v5219, %v5037
    %v5244 = vsel %vm5163, %v5220, %v5051
    %v5245 = vsel %vm5163, %v5221, %v5053
    %v5246 = vsel %vm5163, %v5222, %v5055
    %v5247 = vsel %vm5163, %v5223, %v5037
    %v5248 = vsel %vm5163, %v5224, %v5057
    %v5249 = vsel %vm5163, %v5225, %v5059
    %v5250 = vsel %vm5163, %v5226, %v5061
    %v5251 = vsel %vm5163, %v5227, %v5037
    %v5252 = vsel %vm5163, %v5228, %v5063
    %v5253 = vsel %vm5163, %v5229, %v5065
    %v5254 = vsel %vm5163, %v5230, %v5067
    %v5255 = vsel %vm5163, %v5231, %v5037
    %v5256 = vsel %vm5183, %v5232, %v5088
    %v5257 = vsel %vm5183, %v5233, %v5090
    %v5258 = vsel %vm5183, %v5234, %v5092
    %v5259 = vsel %vm5183, %v5235, %v5094
    %v5260 = vsel %vm5183, %v5236, %v5096
    %v5261 = vsel %vm5183, %v5237, %v5098
    %v5262 = vsel %vm5183, %v5238, %v5100
    %v5263 = vsel %vm5183, %v5239, %v5094
    %v5264 = vsel %vm5183, %v5240, %v5102
    %v5265 = vsel %vm5183, %v5241, %v5104
    %v5266 = vsel %vm5183, %v5242, %v5106
    %v5267 = vsel %vm5183, %v5243, %v5094
    %v5268 = vsel %vm5183, %v5244, %v5108
    %v5269 = vsel %vm5183, %v5245, %v5110
    %v5270 = vsel %vm5183, %v5246, %v5112
    %v5271 = vsel %vm5183, %v5247, %v5094
    %v5272 = vsel %vm5183, %v5248, %v5114
    %v5273 = vsel %vm5183, %v5249, %v5116
    %v5274 = vsel %vm5183, %v5250, %v5118
    %v5275 = vsel %vm5183, %v5251, %v5094
    %v5276 = vsel %vm5183, %v5252, %v5120
    %v5277 = vsel %vm5183, %v5253, %v5122
    %v5278 = vsel %vm5183, %v5254, %v5124
    %v5279 = vsel %vm5183, %v5255, %v5094
    %v5328 = vrot.slane %v5256, 4
    %v5329 = vrot.slane %v5257, 4
    %v5330 = vrot.slane %v5258, 4
    %v5331 = vrot.slane %v5259, 4
    %v5332 = vrot.slane %v5260, 4
    %v5333 = vrot.slane %v5261, 4
    %v5334 = vrot.slane %v5262, 4
    %v5335 = vrot.slane %v5263, 4
    %v5336 = vrot.slane %v5264, 4
    %v5337 = vrot.slane %v5265, 4
    %v5338 = vrot.slane %v5266, 4
    %v5339 = vrot.slane %v5267, 4
    %v5340 = vrot.slane %v5268, 4
    %v5341 = vrot.slane %v5269, 4
    %v5342 = vrot.slane %v5270, 4
    %v5343 = vrot.slane %v5271, 4
    %v5344 = vrot.slane %v5272, 4
    %v5345 = vrot.slane %v5273, 4
    %v5346 = vrot.slane %v5274, 4
    %v5347 = vrot.slane %v5275, 4
    %v5348 = vrot.slane %v5276, 4
    %v5349 = vrot.slane %v5277, 4
    %v5350 = vrot.slane %v5278, 4
    %v5351 = vrot.slane %v5279, 4
    %vm5352 = vcmask 1043456
    %v5353 = vsel %vm5352, %v5184, %v5328
    %v5354 = vsel %vm5352, %v5185, %v5329
    %v5355 = vsel %vm5352, %v5186, %v5330
    %v5356 = vsel %vm5352, %v5187, %v5331
    %v5357 = vsel %vm5352, %v5188, %v5332
    %v5358 = vsel %vm5352, %v5189, %v5333
    %v5359 = vsel %vm5352, %v5190, %v5334
    %v5360 = vsel %vm5352, %v5191, %v5335
    %v5361 = vsel %vm5352, %v5192, %v5336
    %v5362 = vsel %vm5352, %v5193, %v5337
    %v5363 = vsel %vm5352, %v5194, %v5338
    %v5364 = vsel %vm5352, %v5195, %v5339
    %v5365 = vsel %vm5352, %v5196, %v5340
    %v5366 = vsel %vm5352, %v5197, %v5341
    %v5367 = vsel %vm5352, %v5198, %v5342
    %v5368 = vsel %vm5352, %v5199, %v5343
    %v5369 = vsel %vm5352, %v5200, %v5344
    %v5370 = vsel %vm5352, %v5201, %v5345
    %v5371 = vsel %vm5352, %v5202, %v5346
    %v5372 = vsel %vm5352, %v5203, %v5347
    %v5373 = vsel %vm5352, %v5204, %v5348
    %v5374 = vsel %vm5352, %v5205, %v5349
    %v5375 = vsel %vm5352, %v5206, %v5350
    %v5376 = vsel %vm5352, %v5207, %v5351
    %5377 = vst [vmem:[#allocation1] ss:$2 sm:$0xff] %v5353
    %s5378 = scalar_lea.vmem [#allocation1], 1
    %5379 = vst [vmem:[%s5378] ss:$2 sm:$0xff] %v5354
    %s5380 = scalar_lea.vmem [#allocation1], 16
    %5381 = vst [vmem:[%s5380] ss:$2 sm:$0xff] %v4770
    %s5382 = scalar_lea.vmem [#allocation1], 17
    %5383 = vst [vmem:[%s5382] ss:$2 sm:$0xff] %v4771
    %s5384 = scalar_lea.vmem [#allocation1], 32
    %5385 = vst [vmem:[%s5384] ss:$2 sm:$0xff] %v5355
    %s5386 = scalar_lea.vmem [#allocation1], 33
    %5387 = vst [vmem:[%s5386] ss:$2 sm:$0xff] %v5356
    %s5388 = scalar_lea.vmem [#allocation1], 48
    %5389 = vst [vmem:[%s5388] ss:$2 sm:$0xff] %v4952
    %s5390 = scalar_lea.vmem [#allocation1], 49
    %5391 = vst [vmem:[%s5390] ss:$2 sm:$0xff] %v4768
    %v5392 = vld.sshfl [vmem:[#allocation1] sm:$0xff pattern:$0x75316420]
    %v5393 = vld.sshfl [vmem:[#allocation1 + $0x8] sm:$0xff pattern:$0x75316420]
    %v5394 = vld.sshfl [vmem:[#allocation1 + $0x10] sm:$0xff pattern:$0x75316420]
    %v5395 = vld.sshfl [vmem:[#allocation1 + $0x20] sm:$0xff pattern:$0x75316420]
    %v5396 = vld.sshfl [vmem:[#allocation1 + $0x28] sm:$0xff pattern:$0x75316420]
    %v5397 = vld.sshfl [vmem:[#allocation1 + $0x30] sm:$0xff pattern:$0x75316420]
    %5398 = vst [vmem:[#allocation1] ss:$2 sm:$0xff] %v5357
    %5399 = vst [vmem:[%s5378] ss:$2 sm:$0xff] %v5358
    %5400 = vst [vmem:[%s5380] ss:$2 sm:$0xff] %v4773
    %5401 = vst [vmem:[%s5382] ss:$2 sm:$0xff] %v4774
    %5402 = vst [vmem:[%s5384] ss:$2 sm:$0xff] %v5359
    %5403 = vst [vmem:[%s5386] ss:$2 sm:$0xff] %v5360
    %5404 = vst [vmem:[%s5388] ss:$2 sm:$0xff] %v4953
    %5405 = vst [vmem:[%s5390] ss:$2 sm:$0xff] %v4768
    %v5406 = vld.sshfl [vmem:[#allocation1] sm:$0xff pattern:$0x75316420]
    %v5407 = vld.sshfl [vmem:[#allocation1 + $0x8] sm:$0xff pattern:$0x75316420]
    %v5408 = vld.sshfl [vmem:[#allocation1 + $0x10] sm:$0xff pattern:$0x75316420]
    %v5409 = vld.sshfl [vmem:[#allocation1 + $0x20] sm:$0xff pattern:$0x75316420]
    %v5410 = vld.sshfl [vmem:[#allocation1 + $0x28] sm:$0xff pattern:$0x75316420]
    %v5411 = vld.sshfl [vmem:[#allocation1 + $0x30] sm:$0xff pattern:$0x75316420]
    %5412 = vst [vmem:[#allocation1] ss:$2 sm:$0xff] %v5361
    %5413 = vst [vmem:[%s5378] ss:$2 sm:$0xff] %v5362
    %5414 = vst [vmem:[%s5380] ss:$2 sm:$0xff] %v4776
    %5415 = vst [vmem:[%s5382] ss:$2 sm:$0xff] %v4777
    %5416 = vst [vmem:[%s5384] ss:$2 sm:$0xff] %v5363
    %5417 = vst [vmem:[%s5386] ss:$2 sm:$0xff] %v5364
    %5418 = vst [vmem:[%s5388] ss:$2 sm:$0xff] %v4954
    %5419 = vst [vmem:[%s5390] ss:$2 sm:$0xff] %v4768
    %v5420 = vld.sshfl [vmem:[#allocation1] sm:$0xff pattern:$0x75316420]
    %v5421 = vld.sshfl [vmem:[#allocation1 + $0x8] sm:$0xff pattern:$0x75316420]
    %v5422 = vld.sshfl [vmem:[#allocation1 + $0x10] sm:$0xff pattern:$0x75316420]
    %v5423 = vld.sshfl [vmem:[#allocation1 + $0x20] sm:$0xff pattern:$0x75316420]
    %v5424 = vld.sshfl [vmem:[#allocation1 + $0x28] sm:$0xff pattern:$0x75316420]
    %v5425 = vld.sshfl [vmem:[#allocation1 + $0x30] sm:$0xff pattern:$0x75316420]
    %5426 = vst [vmem:[#allocation1] ss:$2 sm:$0xff] %v5365
    %5427 = vst [vmem:[%s5378] ss:$2 sm:$0xff] %v5366
    %5428 = vst [vmem:[%s5380] ss:$2 sm:$0xff] %v4779
    %5429 = vst [vmem:[%s5382] ss:$2 sm:$0xff] %v4780
    %5430 = vst [vmem:[%s5384] ss:$2 sm:$0xff] %v5367
    %5431 = vst [vmem:[%s5386] ss:$2 sm:$0xff] %v5368
    %5432 = vst [vmem:[%s5388] ss:$2 sm:$0xff] %v4955
    %5433 = vst [vmem:[%s5390] ss:$2 sm:$0xff] %v4768
    %v5434 = vld.sshfl [vmem:[#allocation1] sm:$0xff pattern:$0x75316420]
    %v5435 = vld.sshfl [vmem:[#allocation1 + $0x8] sm:$0xff pattern:$0x75316420]
    %v5436 = vld.sshfl [vmem:[#allocation1 + $0x10] sm:$0xff pattern:$0x75316420]
    %v5437 = vld.sshfl [vmem:[#allocation1 + $0x20] sm:$0xff pattern:$0x75316420]
    %v5438 = vld.sshfl [vmem:[#allocation1 + $0x28] sm:$0xff pattern:$0x75316420]
    %v5439 = vld.sshfl [vmem:[#allocation1 + $0x30] sm:$0xff pattern:$0x75316420]
    %5440 = vst [vmem:[#allocation1] ss:$2 sm:$0xff] %v5369
    %5441 = vst [vmem:[%s5378] ss:$2 sm:$0xff] %v5370
    %5442 = vst [vmem:[%s5380] ss:$2 sm:$0xff] %v4782
    %5443 = vst [vmem:[%s5382] ss:$2 sm:$0xff] %v4783
    %5444 = vst [vmem:[%s5384] ss:$2 sm:$0xff] %v5371
    %5445 = vst [vmem:[%s5386] ss:$2 sm:$0xff] %v5372
    %5446 = vst [vmem:[%s5388] ss:$2 sm:$0xff] %v4956
    %5447 = vst [vmem:[%s5390] ss:$2 sm:$0xff] %v4768
    %v5448 = vld.sshfl [vmem:[#allocation1] sm:$0xff pattern:$0x75316420]
    %v5449 = vld.sshfl [vmem:[#allocation1 + $0x8] sm:$0xff pattern:$0x75316420]
    %v5450 = vld.sshfl [vmem:[#allocation1 + $0x10] sm:$0xff pattern:$0x75316420]
    %v5451 = vld.sshfl [vmem:[#allocation1 + $0x20] sm:$0xff pattern:$0x75316420]
    %v5452 = vld.sshfl [vmem:[#allocation1 + $0x28] sm:$0xff pattern:$0x75316420]
    %v5453 = vld.sshfl [vmem:[#allocation1 + $0x30] sm:$0xff pattern:$0x75316420]
    %5454 = vst [vmem:[#allocation1] ss:$2 sm:$0xff] %v5373
    %5455 = vst [vmem:[%s5378] ss:$2 sm:$0xff] %v5374
    %5456 = vst [vmem:[%s5380] ss:$2 sm:$0xff] %v4785
    %5457 = vst [vmem:[%s5382] ss:$2 sm:$0xff] %v4786
    %5458 = vst [vmem:[%s5384] ss:$2 sm:$0xff] %v5375
    %5459 = vst [vmem:[%s5386] ss:$2 sm:$0xff] %v5376
    %5460 = vst [vmem:[%s5388] ss:$2 sm:$0xff] %v4957
    %5461 = vst [vmem:[%s5390] ss:$2 sm:$0xff] %v4768
    %v5462 = vld.sshfl [vmem:[#allocation1] sm:$0xff pattern:$0x75316420]
    %v5463 = vld.sshfl [vmem:[#allocation1 + $0x8] sm:$0xff pattern:$0x75316420]
    %v5464 = vld.sshfl [vmem:[#allocation1 + $0x10] sm:$0xff pattern:$0x75316420]
    %v5465 = vld.sshfl [vmem:[#allocation1 + $0x20] sm:$0xff pattern:$0x75316420]
    %v5466 = vld.sshfl [vmem:[#allocation1 + $0x28] sm:$0xff pattern:$0x75316420]
    %v5467 = vld.sshfl [vmem:[#allocation1 + $0x30] sm:$0xff pattern:$0x75316420]
    %v5504 = vpack.c.bf16 %v5395, %v5392
    %v5505 = vpack.c.bf16 %v5396, %v5393
    %v5506 = vpack.c.bf16 %v5397, %v5394
    %v5507 = vpack.c.bf16 %v5409, %v5406
    %v5508 = vpack.c.bf16 %v5410, %v5407
    %v5509 = vpack.c.bf16 %v5411, %v5408
    %v5510 = vpack.c.bf16 %v5423, %v5420
    %v5511 = vpack.c.bf16 %v5424, %v5421
    %v5512 = vpack.c.bf16 %v5425, %v5422
    %v5513 = vpack.c.bf16 %v5437, %v5434
    %v5514 = vpack.c.bf16 %v5438, %v5435
    %v5515 = vpack.c.bf16 %v5439, %v5436
    %v5516 = vpack.c.bf16 %v5451, %v5448
    %v5517 = vpack.c.bf16 %v5452, %v5449
    %v5518 = vpack.c.bf16 %v5453, %v5450
    %v5519 = vpack.c.bf16 %v5465, %v5462
    %v5520 = vpack.c.bf16 %v5466, %v5463
    %v5521 = vpack.c.bf16 %v5467, %v5464
    %v5522 = vld [vmem:[%s3] sm:$0xf]
    %v5523 = vld [vmem:[%s3 + $0x4] sm:$0xf]
    %v5524 = vld [vmem:[%s3 + $0x8] sm:$0xf]
    %v5525 = vld [vmem:[%s3 + $0xc] sm:$0xf]
    %v5526 = vld [vmem:[%s3 + $0x10] sm:$0xf]
    %v5527 = vld [vmem:[%s3 + $0x14] sm:$0xf]
    %v5528 = vld [vmem:[%s3 + $0x18] sm:$0xf]
    %v5529 = vld [vmem:[%s3 + $0x1c] sm:$0xf]
    %v5530 = vld [vmem:[%s3 + $0x20] sm:$0xf]
    %v5531 = vld [vmem:[%s3 + $0x24] sm:$0xf]
    %v5532 = vld [vmem:[%s3 + $0x28] sm:$0xf]
    %v5533 = vld [vmem:[%s3 + $0x2c] sm:$0xf]
    %v5534 = vld [vmem:[%s3 + $0x30] sm:$0xf]
    %v5535 = vld [vmem:[%s3 + $0x34] sm:$0xf]
    %v5536 = vld [vmem:[%s3 + $0x38] sm:$0xf]
    %v5537 = vld [vmem:[%s3 + $0x3c] sm:$0xf]
    %v5538 = vld [vmem:[%s3 + $0x40] sm:$0xf]
    %v5539 = vld [vmem:[%s3 + $0x44] sm:$0xf]
    %v5540 = vld [vmem:[%s3 + $0x48] sm:$0xf]
    %v5541 = vld [vmem:[%s3 + $0x4c] sm:$0xf]
    %v5542 = vld [vmem:[%s3 + $0x50] sm:$0xf]
    %v5543 = vld [vmem:[%s3 + $0x54] sm:$0xf]
    %v5544 = vld [vmem:[%s3 + $0x58] sm:$0xf]
    %v5545 = vld [vmem:[%s3 + $0x5c] sm:$0xf]
    %v5546 = vld [vmem:[%s3 + $0x60] sm:$0xf]
    %v5547 = vld [vmem:[%s3 + $0x64] sm:$0xf]
    %v5548 = vld [vmem:[%s3 + $0x68] sm:$0xf]
    %v5549 = vld [vmem:[%s3 + $0x6c] sm:$0xf]
    %v5550 = vld [vmem:[%s3 + $0x70] sm:$0xf]
    %v5551 = vld [vmem:[%s3 + $0x74] sm:$0xf]
    %v5552 = vld [vmem:[%s3 + $0x78] sm:$0xf]
    %v5553 = vld [vmem:[%s3 + $0x7c] sm:$0xf]
    %v5554 = vld [vmem:[%s3 + $0x80] sm:$0xf]
    %v5555 = vld [vmem:[%s3 + $0x84] sm:$0xf]
    %v5556 = vld [vmem:[%s3 + $0x88] sm:$0xf]
    %v5557 = vld [vmem:[%s3 + $0x8c] sm:$0xf]
    %v5558 = vld [vmem:[%s4] sm:$0x1]
    %v5560 = vperm.slane %v5558, 0
    %v5598 = vunpack.c.l.b16 %v5522
    %v5599 = vunpack.c.l.b16 %v5523
    %v5600 = vunpack.c.l.b16 %v5524
    %v5601 = vunpack.c.l.b16 %v5525
    %v5602 = vunpack.c.l.b16 %v5526
    %v5603 = vunpack.c.l.b16 %v5527
    %v5604 = vunpack.c.l.b16 %v5528
    %v5605 = vunpack.c.l.b16 %v5529
    %v5606 = vunpack.c.l.b16 %v5530
    %v5607 = vunpack.c.l.b16 %v5531
    %v5608 = vunpack.c.l.b16 %v5532
    %v5609 = vunpack.c.l.b16 %v5533
    %v5610 = vunpack.c.l.b16 %v5534
    %v5611 = vunpack.c.l.b16 %v5535
    %v5612 = vunpack.c.l.b16 %v5536
    %v5613 = vunpack.c.l.b16 %v5537
    %v5614 = vunpack.c.l.b16 %v5538
    %v5615 = vunpack.c.l.b16 %v5539
    %v5616 = vunpack.c.l.b16 %v5540
    %v5617 = vunpack.c.l.b16 %v5541
    %v5618 = vunpack.c.l.b16 %v5542
    %v5619 = vunpack.c.l.b16 %v5543
    %v5620 = vunpack.c.l.b16 %v5544
    %v5621 = vunpack.c.l.b16 %v5545
    %v5622 = vunpack.c.l.b16 %v5546
    %v5623 = vunpack.c.l.b16 %v5547
    %v5624 = vunpack.c.l.b16 %v5548
    %v5625 = vunpack.c.l.b16 %v5549
    %v5626 = vunpack.c.l.b16 %v5550
    %v5627 = vunpack.c.l.b16 %v5551
    %v5628 = vunpack.c.l.b16 %v5552
    %v5629 = vunpack.c.l.b16 %v5553
    %v5630 = vunpack.c.l.b16 %v5554
    %v5631 = vunpack.c.l.b16 %v5555
    %v5632 = vunpack.c.l.b16 %v5556
    %v5633 = vunpack.c.l.b16 %v5557
    %v5634 = vpack.c.b16 %v5599, %v5598
    %v5635 = vpack.c.b16 %v5601, %v5600
    %v5636 = vpack.c.b16 %v5603, %v5602
    %v5637 = vpack.c.b16 %v5605, %v5604
    %v5638 = vpack.c.b16 %v5607, %v5606
    %v5639 = vpack.c.b16 %v5609, %v5608
    %v5640 = vpack.c.b16 %v5611, %v5610
    %v5641 = vpack.c.b16 %v5613, %v5612
    %v5642 = vpack.c.b16 %v5615, %v5614
    %v5643 = vpack.c.b16 %v5617, %v5616
    %v5644 = vpack.c.b16 %v5619, %v5618
    %v5645 = vpack.c.b16 %v5621, %v5620
    %v5646 = vpack.c.b16 %v5623, %v5622
    %v5647 = vpack.c.b16 %v5625, %v5624
    %v5648 = vpack.c.b16 %v5627, %v5626
    %v5649 = vpack.c.b16 %v5629, %v5628
    %v5650 = vpack.c.b16 %v5631, %v5630
    %v5651 = vpack.c.b16 %v5633, %v5632
    %v5671 = vsel %vm2132, %v5506, 0
    %v5674 = vsel %vm2132, %v5509, 0
    %v5677 = vsel %vm2132, %v5512, 0
    %v5680 = vsel %vm2132, %v5515, 0
    %v5683 = vsel %vm2132, %v5518, 0
    %v5686 = vsel %vm2132, %v5521, 0
    %5688 = vmatpush.bf16.msra.mxu0 %v5641
    %5689 = vmatpush.bf16.msra.mxu0 %v5640
    %5690 = vmatpush.bf16.msra.mxu0 %v5639
    %5691 = vmatpush.bf16.msra.mxu0 %v5638
    %5692 = vmatpush.bf16.msra.mxu0 %v5637
    %5693 = vmatpush.bf16.msra.mxu0 %v5636
    %5694 = vmatpush.bf16.msra.mxu0 %v5635
    %5695 = vmatpush.bf16.msra.mxu0 %v5634
    %5696 = vmatmul.bf16.gmra.mxu0 %v5504
    %v5697 = vpop.f32.mrf.mxu0
    %v5698 = vadd.f32 %v5560, %v5697
    %v5699 = vpop.f32.mrf.mxu0
    %v5700 = vadd.f32 %v5560, %v5699
    %5701 = vmatmul.bf16.gmra.mxu0 %v5507
    %v5702 = vpop.f32.mrf.mxu0
    %v5703 = vadd.f32 %v5560, %v5702
    %v5704 = vpop.f32.mrf.mxu0
    %v5705 = vadd.f32 %v5560, %v5704
    %5706 = vmatmul.bf16.gmra.mxu0 %v5510
    %v5707 = vpop.f32.mrf.mxu0
    %v5708 = vadd.f32 %v5560, %v5707
    %v5709 = vpop.f32.mrf.mxu0
    %v5710 = vadd.f32 %v5560, %v5709
    %5711 = vmatmul.bf16.gmra.mxu0 %v5513
    %v5712 = vpop.f32.mrf.mxu0
    %v5713 = vadd.f32 %v5560, %v5712
    %v5714 = vpop.f32.mrf.mxu0
    %v5715 = vadd.f32 %v5560, %v5714
    %5716 = vmatmul.bf16.gmra.mxu0 %v5516
    %v5717 = vpop.f32.mrf.mxu0
    %v5718 = vadd.f32 %v5560, %v5717
    %v5719 = vpop.f32.mrf.mxu0
    %v5720 = vadd.f32 %v5560, %v5719
    %5721 = vmatmul.bf16.gmra.mxu0 %v5519
    %v5722 = vpop.f32.mrf.mxu0
    %v5723 = vadd.f32 %v5560, %v5722
    %v5724 = vpop.f32.mrf.mxu0
    %v5725 = vadd.f32 %v5560, %v5724
    %5726 = vdwg.mxu0
    %5727 = vmatpush.bf16.msra.mxu0 %v5649
    %5728 = vmatpush.bf16.msra.mxu0 %v5648
    %5729 = vmatpush.bf16.msra.mxu0 %v5647
    %5730 = vmatpush.bf16.msra.mxu0 %v5646
    %5731 = vmatpush.bf16.msra.mxu0 %v5645
    %5732 = vmatpush.bf16.msra.mxu0 %v5644
    %5733 = vmatpush.bf16.msra.mxu0 %v5643
    %5734 = vmatpush.bf16.msra.mxu0 %v5642
    %5735 = vmatmul.bf16.gmra.mxu0 %v5505
    %v5736 = vpop.f32.mrf.mxu0
    %v5737 = vadd.f32 %v5698, %v5736
    %v5738 = vpop.f32.mrf.mxu0
    %v5739 = vadd.f32 %v5700, %v5738
    %5740 = vmatmul.bf16.gmra.mxu0 %v5508
    %v5741 = vpop.f32.mrf.mxu0
    %v5742 = vadd.f32 %v5703, %v5741
    %v5743 = vpop.f32.mrf.mxu0
    %v5744 = vadd.f32 %v5705, %v5743
    %5745 = vmatmul.bf16.gmra.mxu0 %v5511
    %v5746 = vpop.f32.mrf.mxu0
    %v5747 = vadd.f32 %v5708, %v5746
    %v5748 = vpop.f32.mrf.mxu0
    %v5749 = vadd.f32 %v5710, %v5748
    %5750 = vmatmul.bf16.gmra.mxu0 %v5514
    %v5751 = vpop.f32.mrf.mxu0
    %v5752 = vadd.f32 %v5713, %v5751
    %v5753 = vpop.f32.mrf.mxu0
    %v5754 = vadd.f32 %v5715, %v5753
    %5755 = vmatmul.bf16.gmra.mxu0 %v5517
    %v5756 = vpop.f32.mrf.mxu0
    %v5757 = vadd.f32 %v5718, %v5756
    %v5758 = vpop.f32.mrf.mxu0
    %v5759 = vadd.f32 %v5720, %v5758
    %5760 = vmatmul.bf16.gmra.mxu0 %v5520
    %v5761 = vpop.f32.mrf.mxu0
    %v5762 = vadd.f32 %v5723, %v5761
    %v5763 = vpop.f32.mrf.mxu0
    %v5764 = vadd.f32 %v5725, %v5763
    %5765 = vdwg.mxu0
    %5766 = vmatpush.bf16.msra.mxu0 0
    %5767 = vmatpush.bf16.msra.mxu0 0
    %5768 = vmatpush.bf16.msra.mxu0 0
    %5769 = vmatpush.bf16.msra.mxu0 0
    %5770 = vmatpush.bf16.msra.mxu0 0
    %5771 = vmatpush.bf16.msra.mxu0 0
    %5772 = vmatpush.bf16.msra.mxu0 %v5651
    %5773 = vmatpush.bf16.msra.mxu0 %v5650
    %5774 = vmatmul.bf16.gmra.mxu0 %v5671
    %v5775 = vpop.f32.mrf.mxu0
    %v5776 = vadd.f32 %v5737, %v5775
    %v5777 = vpop.f32.mrf.mxu0
    %v5778 = vadd.f32 %v5739, %v5777
    %5779 = vmatmul.bf16.gmra.mxu0 %v5674
    %v5780 = vpop.f32.mrf.mxu0
    %v5781 = vadd.f32 %v5742, %v5780
    %v5782 = vpop.f32.mrf.mxu0
    %v5783 = vadd.f32 %v5744, %v5782
    %5784 = vmatmul.bf16.gmra.mxu0 %v5677
    %v5785 = vpop.f32.mrf.mxu0
    %v5786 = vadd.f32 %v5747, %v5785
    %v5787 = vpop.f32.mrf.mxu0
    %v5788 = vadd.f32 %v5749, %v5787
    %5789 = vmatmul.bf16.gmra.mxu0 %v5680
    %v5790 = vpop.f32.mrf.mxu0
    %v5791 = vadd.f32 %v5752, %v5790
    %v5792 = vpop.f32.mrf.mxu0
    %v5793 = vadd.f32 %v5754, %v5792
    %5794 = vmatmul.bf16.gmra.mxu0 %v5683
    %v5795 = vpop.f32.mrf.mxu0
    %v5796 = vadd.f32 %v5757, %v5795
    %v5797 = vpop.f32.mrf.mxu0
    %v5798 = vadd.f32 %v5759, %v5797
    %5799 = vmatmul.bf16.gmra.mxu0 %v5686
    %v5800 = vpop.f32.mrf.mxu0
    %v5801 = vadd.f32 %v5762, %v5800
    %v5802 = vpop.f32.mrf.mxu0
    %v5803 = vadd.f32 %v5764, %v5802
    %5804 = vdwg.mxu0
    %v5817 = vrot.slane %v5776, 2
    %v5818 = vrot.slane %v5776, 4
    %v5819 = vrot.slane %v5776, 6
    %v5820 = vrot.slane %v5778, 2
    %v5821 = vrot.slane %v5778, 4
    %v5822 = vrot.slane %v5778, 6
    %v5823 = vrot.slane %v5781, 2
    %v5824 = vrot.slane %v5781, 4
    %v5825 = vrot.slane %v5781, 6
    %v5826 = vrot.slane %v5783, 2
    %v5827 = vrot.slane %v5783, 4
    %v5828 = vrot.slane %v5783, 6
    %v5829 = vrot.slane %v5786, 2
    %v5830 = vrot.slane %v5786, 4
    %v5831 = vrot.slane %v5786, 6
    %v5832 = vrot.slane %v5788, 2
    %v5833 = vrot.slane %v5788, 4
    %v5834 = vrot.slane %v5788, 6
    %v5835 = vrot.slane %v5791, 2
    %v5836 = vrot.slane %v5791, 4
    %v5837 = vrot.slane %v5791, 6
    %v5838 = vrot.slane %v5793, 2
    %v5839 = vrot.slane %v5793, 4
    %v5840 = vrot.slane %v5793, 6
    %v5841 = vrot.slane %v5796, 2
    %v5842 = vrot.slane %v5796, 4
    %v5843 = vrot.slane %v5796, 6
    %v5844 = vrot.slane %v5798, 2
    %v5845 = vrot.slane %v5798, 4
    %v5846 = vrot.slane %v5798, 6
    %v5847 = vrot.slane %v5801, 2
    %v5848 = vrot.slane %v5801, 4
    %v5849 = vrot.slane %v5801, 6
    %v5850 = vrot.slane %v5803, 2
    %v5851 = vrot.slane %v5803, 4
    %v5852 = vrot.slane %v5803, 6
    %vm5889 = vcmask 517120
    %v5890 = vsel %vm5889, %v5776, -inf
    %v5891 = vrot.slane %v5890, 4
    %v5892 = vmax.f32 %v5890, %v5891
    %v5893 = vrot.slane %v5892, 2
    %v5894 = vmax.f32 %v5892, %v5893
    %v5895 = vrot.slane %v5894, 1
    %v5896 = vmax.f32 %v5894, %v5895
    %v5897 = vsel %vm5889, %v5817, -inf
    %v5898 = vrot.slane %v5897, 4
    %v5899 = vmax.f32 %v5897, %v5898
    %v5900 = vrot.slane %v5899, 2
    %v5901 = vmax.f32 %v5899, %v5900
    %v5902 = vrot.slane %v5901, 1
    %v5903 = vmax.f32 %v5901, %v5902
    %v5904 = vsel %vm5889, %v5818, -inf
    %v5905 = vrot.slane %v5904, 4
    %v5906 = vmax.f32 %v5904, %v5905
    %v5907 = vrot.slane %v5906, 2
    %v5908 = vmax.f32 %v5906, %v5907
    %v5909 = vrot.slane %v5908, 1
    %v5910 = vmax.f32 %v5908, %v5909
    %v5911 = vsel %vm5889, %v5819, -inf
    %v5912 = vrot.slane %v5911, 4
    %v5913 = vmax.f32 %v5911, %v5912
    %v5914 = vrot.slane %v5913, 2
    %v5915 = vmax.f32 %v5913, %v5914
    %v5916 = vrot.slane %v5915, 1
    %v5917 = vmax.f32 %v5915, %v5916
    %v5918 = vsel %vm5889, %v5778, -inf
    %v5919 = vrot.slane %v5918, 4
    %v5920 = vmax.f32 %v5918, %v5919
    %v5921 = vrot.slane %v5920, 2
    %v5922 = vmax.f32 %v5920, %v5921
    %v5923 = vrot.slane %v5922, 1
    %v5924 = vmax.f32 %v5922, %v5923
    %v5925 = vsel %vm5889, %v5820, -inf
    %v5926 = vrot.slane %v5925, 4
    %v5927 = vmax.f32 %v5925, %v5926
    %v5928 = vrot.slane %v5927, 2
    %v5929 = vmax.f32 %v5927, %v5928
    %v5930 = vrot.slane %v5929, 1
    %v5931 = vmax.f32 %v5929, %v5930
    %v5932 = vsel %vm5889, %v5821, -inf
    %v5933 = vrot.slane %v5932, 4
    %v5934 = vmax.f32 %v5932, %v5933
    %v5935 = vrot.slane %v5934, 2
    %v5936 = vmax.f32 %v5934, %v5935
    %v5937 = vrot.slane %v5936, 1
    %v5938 = vmax.f32 %v5936, %v5937
    %v5939 = vsel %vm5889, %v5822, -inf
    %v5940 = vrot.slane %v5939, 4
    %v5941 = vmax.f32 %v5939, %v5940
    %v5942 = vrot.slane %v5941, 2
    %v5943 = vmax.f32 %v5941, %v5942
    %v5944 = vrot.slane %v5943, 1
    %v5945 = vmax.f32 %v5943, %v5944
    %v5946 = vsel %vm5889, %v5781, -inf
    %v5947 = vrot.slane %v5946, 4
    %v5948 = vmax.f32 %v5946, %v5947
    %v5949 = vrot.slane %v5948, 2
    %v5950 = vmax.f32 %v5948, %v5949
    %v5951 = vrot.slane %v5950, 1
    %v5952 = vmax.f32 %v5950, %v5951
    %v5953 = vsel %vm5889, %v5823, -inf
    %v5954 = vrot.slane %v5953, 4
    %v5955 = vmax.f32 %v5953, %v5954
    %v5956 = vrot.slane %v5955, 2
    %v5957 = vmax.f32 %v5955, %v5956
    %v5958 = vrot.slane %v5957, 1
    %v5959 = vmax.f32 %v5957, %v5958
    %v5960 = vsel %vm5889, %v5824, -inf
    %v5961 = vrot.slane %v5960, 4
    %v5962 = vmax.f32 %v5960, %v5961
    %v5963 = vrot.slane %v5962, 2
    %v5964 = vmax.f32 %v5962, %v5963
    %v5965 = vrot.slane %v5964, 1
    %v5966 = vmax.f32 %v5964, %v5965
    %v5967 = vsel %vm5889, %v5825, -inf
    %v5968 = vrot.slane %v5967, 4
    %v5969 = vmax.f32 %v5967, %v5968
    %v5970 = vrot.slane %v5969, 2
    %v5971 = vmax.f32 %v5969, %v5970
    %v5972 = vrot.slane %v5971, 1
    %v5973 = vmax.f32 %v5971, %v5972
    %v5974 = vsel %vm5889, %v5783, -inf
    %v5975 = vrot.slane %v5974, 4
    %v5976 = vmax.f32 %v5974, %v5975
    %v5977 = vrot.slane %v5976, 2
    %v5978 = vmax.f32 %v5976, %v5977
    %v5979 = vrot.slane %v5978, 1
    %v5980 = vmax.f32 %v5978, %v5979
    %v5981 = vsel %vm5889, %v5826, -inf
    %v5982 = vrot.slane %v5981, 4
    %v5983 = vmax.f32 %v5981, %v5982
    %v5984 = vrot.slane %v5983, 2
    %v5985 = vmax.f32 %v5983, %v5984
    %v5986 = vrot.slane %v5985, 1
    %v5987 = vmax.f32 %v5985, %v5986
    %v5988 = vsel %vm5889, %v5827, -inf
    %v5989 = vrot.slane %v5988, 4
    %v5990 = vmax.f32 %v5988, %v5989
    %v5991 = vrot.slane %v5990, 2
    %v5992 = vmax.f32 %v5990, %v5991
    %v5993 = vrot.slane %v5992, 1
    %v5994 = vmax.f32 %v5992, %v5993
    %v5995 = vsel %vm5889, %v5828, -inf
    %v5996 = vrot.slane %v5995, 4
    %v5997 = vmax.f32 %v5995, %v5996
    %v5998 = vrot.slane %v5997, 2
    %v5999 = vmax.f32 %v5997, %v5998
    %v6000 = vrot.slane %v5999, 1
    %v6001 = vmax.f32 %v5999, %v6000
    %v6002 = vsel %vm5889, %v5786, -inf
    %v6003 = vrot.slane %v6002, 4
    %v6004 = vmax.f32 %v6002, %v6003
    %v6005 = vrot.slane %v6004, 2
    %v6006 = vmax.f32 %v6004, %v6005
    %v6007 = vrot.slane %v6006, 1
    %v6008 = vmax.f32 %v6006, %v6007
    %v6009 = vsel %vm5889, %v5829, -inf
    %v6010 = vrot.slane %v6009, 4
    %v6011 = vmax.f32 %v6009, %v6010
    %v6012 = vrot.slane %v6011, 2
    %v6013 = vmax.f32 %v6011, %v6012
    %v6014 = vrot.slane %v6013, 1
    %v6015 = vmax.f32 %v6013, %v6014
    %v6016 = vsel %vm5889, %v5830, -inf
    %v6017 = vrot.slane %v6016, 4
    %v6018 = vmax.f32 %v6016, %v6017
    %v6019 = vrot.slane %v6018, 2
    %v6020 = vmax.f32 %v6018, %v6019
    %v6021 = vrot.slane %v6020, 1
    %v6022 = vmax.f32 %v6020, %v6021
    %v6023 = vsel %vm5889, %v5831, -inf
    %v6024 = vrot.slane %v6023, 4
    %v6025 = vmax.f32 %v6023, %v6024
    %v6026 = vrot.slane %v6025, 2
    %v6027 = vmax.f32 %v6025, %v6026
    %v6028 = vrot.slane %v6027, 1
    %v6029 = vmax.f32 %v6027, %v6028
    %v6030 = vsel %vm5889, %v5788, -inf
    %v6031 = vrot.slane %v6030, 4
    %v6032 = vmax.f32 %v6030, %v6031
    %v6033 = vrot.slane %v6032, 2
    %v6034 = vmax.f32 %v6032, %v6033
    %v6035 = vrot.slane %v6034, 1
    %v6036 = vmax.f32 %v6034, %v6035
    %v6037 = vsel %vm5889, %v5832, -inf
    %v6038 = vrot.slane %v6037, 4
    %v6039 = vmax.f32 %v6037, %v6038
    %v6040 = vrot.slane %v6039, 2
    %v6041 = vmax.f32 %v6039, %v6040
    %v6042 = vrot.slane %v6041, 1
    %v6043 = vmax.f32 %v6041, %v6042
    %v6044 = vsel %vm5889, %v5833, -inf
    %v6045 = vrot.slane %v6044, 4
    %v6046 = vmax.f32 %v6044, %v6045
    %v6047 = vrot.slane %v6046, 2
    %v6048 = vmax.f32 %v6046, %v6047
    %v6049 = vrot.slane %v6048, 1
    %v6050 = vmax.f32 %v6048, %v6049
    %v6051 = vsel %vm5889, %v5834, -inf
    %v6052 = vrot.slane %v6051, 4
    %v6053 = vmax.f32 %v6051, %v6052
    %v6054 = vrot.slane %v6053, 2
    %v6055 = vmax.f32 %v6053, %v6054
    %v6056 = vrot.slane %v6055, 1
    %v6057 = vmax.f32 %v6055, %v6056
    %v6058 = vsel %vm5889, %v5791, -inf
    %v6059 = vrot.slane %v6058, 4
    %v6060 = vmax.f32 %v6058, %v6059
    %v6061 = vrot.slane %v6060, 2
    %v6062 = vmax.f32 %v6060, %v6061
    %v6063 = vrot.slane %v6062, 1
    %v6064 = vmax.f32 %v6062, %v6063
    %v6065 = vsel %vm5889, %v5835, -inf
    %v6066 = vrot.slane %v6065, 4
    %v6067 = vmax.f32 %v6065, %v6066
    %v6068 = vrot.slane %v6067, 2
    %v6069 = vmax.f32 %v6067, %v6068
    %v6070 = vrot.slane %v6069, 1
    %v6071 = vmax.f32 %v6069, %v6070
    %v6072 = vsel %vm5889, %v5836, -inf
    %v6073 = vrot.slane %v6072, 4
    %v6074 = vmax.f32 %v6072, %v6073
    %v6075 = vrot.slane %v6074, 2
    %v6076 = vmax.f32 %v6074, %v6075
    %v6077 = vrot.slane %v6076, 1
    %v6078 = vmax.f32 %v6076, %v6077
    %v6079 = vsel %vm5889, %v5837, -inf
    %v6080 = vrot.slane %v6079, 4
    %v6081 = vmax.f32 %v6079, %v6080
    %v6082 = vrot.slane %v6081, 2
    %v6083 = vmax.f32 %v6081, %v6082
    %v6084 = vrot.slane %v6083, 1
    %v6085 = vmax.f32 %v6083, %v6084
    %v6086 = vsel %vm5889, %v5793, -inf
    %v6087 = vrot.slane %v6086, 4
    %v6088 = vmax.f32 %v6086, %v6087
    %v6089 = vrot.slane %v6088, 2
    %v6090 = vmax.f32 %v6088, %v6089
    %v6091 = vrot.slane %v6090, 1
    %v6092 = vmax.f32 %v6090, %v6091
    %v6093 = vsel %vm5889, %v5838, -inf
    %v6094 = vrot.slane %v6093, 4
    %v6095 = vmax.f32 %v6093, %v6094
    %v6096 = vrot.slane %v6095, 2
    %v6097 = vmax.f32 %v6095, %v6096
    %v6098 = vrot.slane %v6097, 1
    %v6099 = vmax.f32 %v6097, %v6098
    %v6100 = vsel %vm5889, %v5839, -inf
    %v6101 = vrot.slane %v6100, 4
    %v6102 = vmax.f32 %v6100, %v6101
    %v6103 = vrot.slane %v6102, 2
    %v6104 = vmax.f32 %v6102, %v6103
    %v6105 = vrot.slane %v6104, 1
    %v6106 = vmax.f32 %v6104, %v6105
    %v6107 = vsel %vm5889, %v5840, -inf
    %v6108 = vrot.slane %v6107, 4
    %v6109 = vmax.f32 %v6107, %v6108
    %v6110 = vrot.slane %v6109, 2
    %v6111 = vmax.f32 %v6109, %v6110
    %v6112 = vrot.slane %v6111, 1
    %v6113 = vmax.f32 %v6111, %v6112
    %v6114 = vsel %vm5889, %v5796, -inf
    %v6115 = vrot.slane %v6114, 4
    %v6116 = vmax.f32 %v6114, %v6115
    %v6117 = vrot.slane %v6116, 2
    %v6118 = vmax.f32 %v6116, %v6117
    %v6119 = vrot.slane %v6118, 1
    %v6120 = vmax.f32 %v6118, %v6119
    %v6121 = vsel %vm5889, %v5841, -inf
    %v6122 = vrot.slane %v6121, 4
    %v6123 = vmax.f32 %v6121, %v6122
    %v6124 = vrot.slane %v6123, 2
    %v6125 = vmax.f32 %v6123, %v6124
    %v6126 = vrot.slane %v6125, 1
    %v6127 = vmax.f32 %v6125, %v6126
    %v6128 = vsel %vm5889, %v5842, -inf
    %v6129 = vrot.slane %v6128, 4
    %v6130 = vmax.f32 %v6128, %v6129
    %v6131 = vrot.slane %v6130, 2
    %v6132 = vmax.f32 %v6130, %v6131
    %v6133 = vrot.slane %v6132, 1
    %v6134 = vmax.f32 %v6132, %v6133
    %v6135 = vsel %vm5889, %v5843, -inf
    %v6136 = vrot.slane %v6135, 4
    %v6137 = vmax.f32 %v6135, %v6136
    %v6138 = vrot.slane %v6137, 2
    %v6139 = vmax.f32 %v6137, %v6138
    %v6140 = vrot.slane %v6139, 1
    %v6141 = vmax.f32 %v6139, %v6140
    %v6142 = vsel %vm5889, %v5798, -inf
    %v6143 = vrot.slane %v6142, 4
    %v6144 = vmax.f32 %v6142, %v6143
    %v6145 = vrot.slane %v6144, 2
    %v6146 = vmax.f32 %v6144, %v6145
    %v6147 = vrot.slane %v6146, 1
    %v6148 = vmax.f32 %v6146, %v6147
    %v6149 = vsel %vm5889, %v5844, -inf
    %v6150 = vrot.slane %v6149, 4
    %v6151 = vmax.f32 %v6149, %v6150
    %v6152 = vrot.slane %v6151, 2
    %v6153 = vmax.f32 %v6151, %v6152
    %v6154 = vrot.slane %v6153, 1
    %v6155 = vmax.f32 %v6153, %v6154
    %v6156 = vsel %vm5889, %v5845, -inf
    %v6157 = vrot.slane %v6156, 4
    %v6158 = vmax.f32 %v6156, %v6157
    %v6159 = vrot.slane %v6158, 2
    %v6160 = vmax.f32 %v6158, %v6159
    %v6161 = vrot.slane %v6160, 1
    %v6162 = vmax.f32 %v6160, %v6161
    %v6163 = vsel %vm5889, %v5846, -inf
    %v6164 = vrot.slane %v6163, 4
    %v6165 = vmax.f32 %v6163, %v6164
    %v6166 = vrot.slane %v6165, 2
    %v6167 = vmax.f32 %v6165, %v6166
    %v6168 = vrot.slane %v6167, 1
    %v6169 = vmax.f32 %v6167, %v6168
    %v6170 = vsel %vm5889, %v5801, -inf
    %v6171 = vrot.slane %v6170, 4
    %v6172 = vmax.f32 %v6170, %v6171
    %v6173 = vrot.slane %v6172, 2
    %v6174 = vmax.f32 %v6172, %v6173
    %v6175 = vrot.slane %v6174, 1
    %v6176 = vmax.f32 %v6174, %v6175
    %v6177 = vsel %vm5889, %v5847, -inf
    %v6178 = vrot.slane %v6177, 4
    %v6179 = vmax.f32 %v6177, %v6178
    %v6180 = vrot.slane %v6179, 2
    %v6181 = vmax.f32 %v6179, %v6180
    %v6182 = vrot.slane %v6181, 1
    %v6183 = vmax.f32 %v6181, %v6182
    %v6184 = vsel %vm5889, %v5848, -inf
    %v6185 = vrot.slane %v6184, 4
    %v6186 = vmax.f32 %v6184, %v6185
    %v6187 = vrot.slane %v6186, 2
    %v6188 = vmax.f32 %v6186, %v6187
    %v6189 = vrot.slane %v6188, 1
    %v6190 = vmax.f32 %v6188, %v6189
    %v6191 = vsel %vm5889, %v5849, -inf
    %v6192 = vrot.slane %v6191, 4
    %v6193 = vmax.f32 %v6191, %v6192
    %v6194 = vrot.slane %v6193, 2
    %v6195 = vmax.f32 %v6193, %v6194
    %v6196 = vrot.slane %v6195, 1
    %v6197 = vmax.f32 %v6195, %v6196
    %v6198 = vsel %vm5889, %v5803, -inf
    %v6199 = vrot.slane %v6198, 4
    %v6200 = vmax.f32 %v6198, %v6199
    %v6201 = vrot.slane %v6200, 2
    %v6202 = vmax.f32 %v6200, %v6201
    %v6203 = vrot.slane %v6202, 1
    %v6204 = vmax.f32 %v6202, %v6203
    %v6205 = vsel %vm5889, %v5850, -inf
    %v6206 = vrot.slane %v6205, 4
    %v6207 = vmax.f32 %v6205, %v6206
    %v6208 = vrot.slane %v6207, 2
    %v6209 = vmax.f32 %v6207, %v6208
    %v6210 = vrot.slane %v6209, 1
    %v6211 = vmax.f32 %v6209, %v6210
    %v6212 = vsel %vm5889, %v5851, -inf
    %v6213 = vrot.slane %v6212, 4
    %v6214 = vmax.f32 %v6212, %v6213
    %v6215 = vrot.slane %v6214, 2
    %v6216 = vmax.f32 %v6214, %v6215
    %v6217 = vrot.slane %v6216, 1
    %v6218 = vmax.f32 %v6216, %v6217
    %v6219 = vsel %vm5889, %v5852, -inf
    %v6220 = vrot.slane %v6219, 4
    %v6221 = vmax.f32 %v6219, %v6220
    %v6222 = vrot.slane %v6221, 2
    %v6223 = vmax.f32 %v6221, %v6222
    %v6224 = vrot.slane %v6223, 1
    %v6225 = vmax.f32 %v6223, %v6224
    %v6226 = vsel %vm5163, %v5896, -inf
    %v6227 = vsel %vm5163, %v5910, -inf
    %v6228 = vmax.f32 %v6226, %v6227
    %v6229 = vsel %vm5163, %v5903, -inf
    %v6230 = vsel %vm5163, %v5917, -inf
    %v6231 = vmax.f32 %v6229, %v6230
    %v6232 = vsel %vm5163, %v5924, -inf
    %v6233 = vsel %vm5163, %v5938, -inf
    %v6234 = vmax.f32 %v6232, %v6233
    %v6235 = vsel %vm5163, %v5931, -inf
    %v6236 = vsel %vm5163, %v5945, -inf
    %v6237 = vmax.f32 %v6235, %v6236
    %v6238 = vsel %vm5163, %v5952, -inf
    %v6239 = vsel %vm5163, %v5966, -inf
    %v6240 = vmax.f32 %v6238, %v6239
    %v6241 = vsel %vm5163, %v5959, -inf
    %v6242 = vsel %vm5163, %v5973, -inf
    %v6243 = vmax.f32 %v6241, %v6242
    %v6244 = vsel %vm5163, %v5980, -inf
    %v6245 = vsel %vm5163, %v5994, -inf
    %v6246 = vmax.f32 %v6244, %v6245
    %v6247 = vsel %vm5163, %v5987, -inf
    %v6248 = vsel %vm5163, %v6001, -inf
    %v6249 = vmax.f32 %v6247, %v6248
    %v6250 = vsel %vm5163, %v6008, -inf
    %v6251 = vsel %vm5163, %v6022, -inf
    %v6252 = vmax.f32 %v6250, %v6251
    %v6253 = vsel %vm5163, %v6015, -inf
    %v6254 = vsel %vm5163, %v6029, -inf
    %v6255 = vmax.f32 %v6253, %v6254
    %v6256 = vsel %vm5163, %v6036, -inf
    %v6257 = vsel %vm5163, %v6050, -inf
    %v6258 = vmax.f32 %v6256, %v6257
    %v6259 = vsel %vm5163, %v6043, -inf
    %v6260 = vsel %vm5163, %v6057, -inf
    %v6261 = vmax.f32 %v6259, %v6260
    %v6262 = vsel %vm5163, %v6064, -inf
    %v6263 = vsel %vm5163, %v6078, -inf
    %v6264 = vmax.f32 %v6262, %v6263
    %v6265 = vsel %vm5163, %v6071, -inf
    %v6266 = vsel %vm5163, %v6085, -inf
    %v6267 = vmax.f32 %v6265, %v6266
    %v6268 = vsel %vm5163, %v6092, -inf
    %v6269 = vsel %vm5163, %v6106, -inf
    %v6270 = vmax.f32 %v6268, %v6269
    %v6271 = vsel %vm5163, %v6099, -inf
    %v6272 = vsel %vm5163, %v6113, -inf
    %v6273 = vmax.f32 %v6271, %v6272
    %v6274 = vsel %vm5163, %v6120, -inf
    %v6275 = vsel %vm5163, %v6134, -inf
    %v6276 = vmax.f32 %v6274, %v6275
    %v6277 = vsel %vm5163, %v6127, -inf
    %v6278 = vsel %vm5163, %v6141, -inf
    %v6279 = vmax.f32 %v6277, %v6278
    %v6280 = vsel %vm5163, %v6148, -inf
    %v6281 = vsel %vm5163, %v6162, -inf
    %v6282 = vmax.f32 %v6280, %v6281
    %v6283 = vsel %vm5163, %v6155, -inf
    %v6284 = vsel %vm5163, %v6169, -inf
    %v6285 = vmax.f32 %v6283, %v6284
    %v6286 = vsel %vm5163, %v6176, -inf
    %v6287 = vsel %vm5163, %v6190, -inf
    %v6288 = vmax.f32 %v6286, %v6287
    %v6289 = vsel %vm5163, %v6183, -inf
    %v6290 = vsel %vm5163, %v6197, -inf
    %v6291 = vmax.f32 %v6289, %v6290
    %v6292 = vsel %vm5163, %v6204, -inf
    %v6293 = vsel %vm5163, %v6218, -inf
    %v6294 = vmax.f32 %v6292, %v6293
    %v6295 = vsel %vm5163, %v6211, -inf
    %v6296 = vsel %vm5163, %v6225, -inf
    %v6297 = vmax.f32 %v6295, %v6296
    %v6304 = vsel %vm4500, %v6240, %v6228
    %v6305 = vsel %vm4502, %v6252, %v6304
    %v6306 = vsel %vm4504, %v6264, %v6305
    %vm6307 = vcmask 1044484
    %v6308 = vsel %vm6307, %v6276, %v6306
    %vm6309 = vcmask 1045509
    %v6310 = vsel %vm6309, %v6288, %v6308
    %v6318 = vsel %vm4500, %v6243, %v6231
    %v6319 = vsel %vm4502, %v6255, %v6318
    %v6320 = vsel %vm4504, %v6267, %v6319
    %v6321 = vsel %vm6307, %v6279, %v6320
    %v6322 = vsel %vm6309, %v6291, %v6321
    %6323 = vrot.lane.b32.xlu0 %v6322, 64
    %v6324 = vpop.permute.xlu0 %6323
    %v6332 = vsel %vm4500, %v6246, %v6234
    %v6333 = vsel %vm4502, %v6258, %v6332
    %v6334 = vsel %vm4504, %v6270, %v6333
    %v6335 = vsel %vm6307, %v6282, %v6334
    %v6336 = vsel %vm6309, %v6294, %v6335
    %v6344 = vsel %vm4500, %v6249, %v6237
    %v6345 = vsel %vm4502, %v6261, %v6344
    %v6346 = vsel %vm4504, %v6273, %v6345
    %v6347 = vsel %vm6307, %v6285, %v6346
    %v6348 = vsel %vm6309, %v6297, %v6347
    %6349 = vrot.lane.b32.xlu0 %v6348, 64
    %v6350 = vpop.permute.xlu0 %6349
    %v6352 = vsel %vm5163, %v6310, %v6324
    %v6353 = vsel %vm5163, %v6336, %v6350
    %v6354 = vpack.c.bf16 %v6352, %v6352
    %v6355 = vpack.c.bf16 %v6353, %v6353
    %v6356 = vld [vmem:[%s5] sm:$0xf]
    %v6357 = vld [vmem:[%s5 + $0x4] sm:$0xf]
    %v6358 = vld [vmem:[%s5 + $0x8] sm:$0xf]
    %v6359 = vld [vmem:[%s5 + $0xc] sm:$0xf]
    %v6360 = vld [vmem:[%s5 + $0x10] sm:$0xf]
    %v6361 = vld [vmem:[%s5 + $0x14] sm:$0xf]
    %v6362 = vld [vmem:[%s5 + $0x18] sm:$0xf]
    %v6363 = vld [vmem:[%s5 + $0x1c] sm:$0xf]
    %v6364 = vld [vmem:[%s5 + $0x20] sm:$0xf]
    %v6365 = vld [vmem:[%s5 + $0x24] sm:$0xf]
    %v6366 = vld [vmem:[%s5 + $0x28] sm:$0xf]
    %v6367 = vld [vmem:[%s5 + $0x2c] sm:$0xf]
    %v6368 = vld [vmem:[%s5 + $0x30] sm:$0xf]
    %v6369 = vld [vmem:[%s5 + $0x34] sm:$0xf]
    %v6370 = vld [vmem:[%s5 + $0x38] sm:$0xf]
    %v6371 = vld [vmem:[%s5 + $0x3c] sm:$0xf]
    %v6372 = vld [vmem:[%s5 + $0x40] sm:$0xf]
    %v6373 = vld [vmem:[%s5 + $0x44] sm:$0xf]
    %v6374 = vld [vmem:[%s5 + $0x48] sm:$0xf]
    %v6375 = vld [vmem:[%s5 + $0x4c] sm:$0xf]
    %v6376 = vld [vmem:[%s5 + $0x50] sm:$0xf]
    %v6377 = vld [vmem:[%s5 + $0x54] sm:$0xf]
    %v6378 = vld [vmem:[%s5 + $0x58] sm:$0xf]
    %v6379 = vld [vmem:[%s5 + $0x5c] sm:$0xf]
    %v6380 = vld [vmem:[%s5 + $0x60] sm:$0xf]
    %v6381 = vld [vmem:[%s5 + $0x64] sm:$0xf]
    %v6382 = vld [vmem:[%s5 + $0x68] sm:$0xf]
    %v6383 = vld [vmem:[%s5 + $0x6c] sm:$0xf]
    %v6384 = vld [vmem:[%s5 + $0x70] sm:$0xf]
    %v6385 = vld [vmem:[%s5 + $0x74] sm:$0xf]
    %v6386 = vld [vmem:[%s5 + $0x78] sm:$0xf]
    %v6387 = vld [vmem:[%s5 + $0x7c] sm:$0xf]
    %v6388 = vld [vmem:[%s6] sm:$0x1]
    %v6390 = vperm.slane %v6388, 0
    %v6424 = vunpack.c.l.b16 %v6356
    %v6425 = vunpack.c.l.b16 %v6357
    %v6426 = vunpack.c.l.b16 %v6358
    %v6427 = vunpack.c.l.b16 %v6359
    %v6428 = vunpack.c.l.b16 %v6360
    %v6429 = vunpack.c.l.b16 %v6361
    %v6430 = vunpack.c.l.b16 %v6362
    %v6431 = vunpack.c.l.b16 %v6363
    %v6432 = vunpack.c.l.b16 %v6364
    %v6433 = vunpack.c.l.b16 %v6365
    %v6434 = vunpack.c.l.b16 %v6366
    %v6435 = vunpack.c.l.b16 %v6367
    %v6436 = vunpack.c.l.b16 %v6368
    %v6437 = vunpack.c.l.b16 %v6369
    %v6438 = vunpack.c.l.b16 %v6370
    %v6439 = vunpack.c.l.b16 %v6371
    %v6440 = vunpack.c.l.b16 %v6372
    %v6441 = vunpack.c.l.b16 %v6373
    %v6442 = vunpack.c.l.b16 %v6374
    %v6443 = vunpack.c.l.b16 %v6375
    %v6444 = vunpack.c.l.b16 %v6376
    %v6445 = vunpack.c.l.b16 %v6377
    %v6446 = vunpack.c.l.b16 %v6378
    %v6447 = vunpack.c.l.b16 %v6379
    %v6448 = vunpack.c.l.b16 %v6380
    %v6449 = vunpack.c.l.b16 %v6381
    %v6450 = vunpack.c.l.b16 %v6382
    %v6451 = vunpack.c.l.b16 %v6383
    %v6452 = vunpack.c.l.b16 %v6384
    %v6453 = vunpack.c.l.b16 %v6385
    %v6454 = vunpack.c.l.b16 %v6386
    %v6455 = vunpack.c.l.b16 %v6387
    %v6456 = vpack.c.b16 %v6425, %v6424
    %v6457 = vpack.c.b16 %v6427, %v6426
    %v6458 = vpack.c.b16 %v6429, %v6428
    %v6459 = vpack.c.b16 %v6431, %v6430
    %v6460 = vpack.c.b16 %v6433, %v6432
    %v6461 = vpack.c.b16 %v6435, %v6434
    %v6462 = vpack.c.b16 %v6437, %v6436
    %v6463 = vpack.c.b16 %v6439, %v6438
    %v6464 = vpack.c.b16 %v6441, %v6440
    %v6465 = vpack.c.b16 %v6443, %v6442
    %v6466 = vpack.c.b16 %v6445, %v6444
    %v6467 = vpack.c.b16 %v6447, %v6446
    %v6468 = vpack.c.b16 %v6449, %v6448
    %v6469 = vpack.c.b16 %v6451, %v6450
    %v6470 = vpack.c.b16 %v6453, %v6452
    %v6471 = vpack.c.b16 %v6455, %v6454
    %6488 = vmatpush.bf16.msra.mxu0 %v6463
    %6489 = vmatpush.bf16.msra.mxu0 %v6462
    %6490 = vmatpush.bf16.msra.mxu0 %v6461
    %6491 = vmatpush.bf16.msra.mxu0 %v6460
    %6492 = vmatpush.bf16.msra.mxu0 %v6459
    %6493 = vmatpush.bf16.msra.mxu0 %v6458
    %6494 = vmatpush.bf16.msra.mxu0 %v6457
    %6495 = vmatpush.bf16.msra.mxu0 %v6456
    %6496 = vmatmul.bf16.gmra.mxu0 %v6354
    %v6497 = vpop.f32.mrf.mxu0
    %v6498 = vadd.f32 %v6390, %v6497
    %v6499 = vpop.f32.mrf.mxu0
    %6500 = vdwg.mxu0
    %6501 = vmatpush.bf16.msra.mxu0 %v6471
    %6502 = vmatpush.bf16.msra.mxu0 %v6470
    %6503 = vmatpush.bf16.msra.mxu0 %v6469
    %6504 = vmatpush.bf16.msra.mxu0 %v6468
    %6505 = vmatpush.bf16.msra.mxu0 %v6467
    %6506 = vmatpush.bf16.msra.mxu0 %v6466
    %6507 = vmatpush.bf16.msra.mxu0 %v6465
    %6508 = vmatpush.bf16.msra.mxu0 %v6464
    %6509 = vmatmul.bf16.gmra.mxu0 %v6355
    %v6510 = vpop.f32.mrf.mxu0
    %v6511 = vadd.f32 %v6498, %v6510
    %v6512 = vpop.f32.mrf.mxu0
    %6513 = vdwg.mxu0
    %v6514 = vmax.f32 %v6511, 0.0
    %v6515 = vpack.c.bf16 %v6514, %v6514
    %v6516 = vld [vmem:[%s7] sm:$0xf]
    %v6517 = vld [vmem:[%s7 + $0x4] sm:$0xf]
    %v6518 = vld [vmem:[%s7 + $0x8] sm:$0xf]
    %v6519 = vld [vmem:[%s7 + $0xc] sm:$0xf]
    %v6520 = vld [vmem:[%s8] sm:$0x1]
    %v6522 = vperm.slane %v6520, 0
    %v6528 = vunpack.c.l.b16 %v6516
    %v6529 = vunpack.c.l.b16 %v6517
    %v6530 = vunpack.c.l.b16 %v6518
    %v6531 = vunpack.c.l.b16 %v6519
    %v6532 = vpack.c.b16 %v6529, %v6528
    %v6533 = vpack.c.b16 %v6531, %v6530
    %v6537 = vsel %vm2132, %v6515, 0
    %6539 = vmatpush.bf16.msra.mxu0 0
    %6540 = vmatpush.bf16.msra.mxu0 0
    %6541 = vmatpush.bf16.msra.mxu0 0
    %6542 = vmatpush.bf16.msra.mxu0 0
    %6543 = vmatpush.bf16.msra.mxu0 0
    %6544 = vmatpush.bf16.msra.mxu0 0
    %6545 = vmatpush.bf16.msra.mxu0 %v6533
    %6546 = vmatpush.bf16.msra.mxu0 %v6532
    %6547 = vmatmul.bf16.gmra.mxu0 %v6537
    %v6548 = vpop.f32.mrf.mxu0
    %v6549 = vadd.f32 %v6522, %v6548
    %v6550 = vpop.f32.mrf.mxu0
    %6551 = vdwg.mxu0
    %vm6552 = vcmask 37888
    %6553 = vst.msk [vmem:[#allocation2] sm:$0x3f] %vm6552, %v6549
    // Predicated region
    $region38: #{tpu_custom_call.1} parent=1 // pred_check
      _
    $region39: #{tpu_custom_call.1} parent=1 // pred_check_branch
      %6555 = sbr.rel (0) target = $region41
    $region40: #{tpu_custom_call.1} parent=1 // pred_region
      %6557 = vsyncadd [#allocation3], 0
      %s6559 = sshll.u32 [#allocation2], 4
      %s6560 = int_to_ptr.vmem [resolvable:$true] %s6559
      %s6561 = sshll.u32 %s9, 4
      %s6562 = int_to_ptr.hbm [resolvable:$true] %s6561
      %6564 = dma.vmem_to_hbm [thread:$0]  %s6560, 128, %s6562, [#allocation3]
    $region41: #{tpu_custom_call.1} parent=1 // pred_fallthru
      _
    // Predicated region
    $region42: #{tpu_custom_call.1} parent=1 // pred_check
      _
    $region43: #{tpu_custom_call.1} parent=1 // pred_check_branch
      %6566 = sbr.rel (0) target = $region45
    $region44: #{tpu_custom_call.1} parent=1 // pred_region
      %6568 = dma.done [#allocation3], 128
    $region45: #{tpu_custom_call.1} parent=1 // pred_fallthru
      _
    %6569 = vsyncpa [#allocation3], 1

</llo_original>
